<compile_context>
chip_gen: v5e
topology: v5e:2x2
jax: 0.10.0
libtpu: 0.0.40
codegen_flags: <defaults>
</compile_context>

<pallas_src>
import jax
import jax.numpy as jnp
from jax.experimental import pallas as pl
from jax.experimental.pallas import tpu as pltpu

HIDDEN = 128          # hidden_size
INPUT = 128           # LSTM input size (fixed by the module)
NUM_LAYERS = 2


def _gate_math(gates, c):
    """Apply LSTM nonlinearities with (i, f, o, g) gate packing.

    gates: (B, 4H) pre-activation, c: (B, H) previous cell state.
    """
    H = HIDDEN
    sig = jax.nn.sigmoid(gates[:, :3 * H])   # i | f | o in one contiguous slab
    g = jnp.tanh(gates[:, 3 * H:])
    i = sig[:, 0 * H:1 * H]
    f = sig[:, 1 * H:2 * H]
    o = sig[:, 2 * H:3 * H]
    c_new = f * c + i * g
    h_new = o * jnp.tanh(c_new)
    return h_new, c_new


def lstm_kernel(x_ref, wih1_ref, whh1_ref, b1_ref, w2_ref, b2_ref,
                out_ref, gx1_ref):
    T, B, D = x_ref.shape
    H = HIDDEN

    # Hoisted layer-1 input projection: one big (T*B, D) @ (D, 4H) MXU matmul
    # with the layer-1 bias folded in. Removes one serial matmul per timestep.
    x_all = x_ref[...].reshape(T * B, D)
    gx1 = jnp.dot(x_all, wih1_ref[...],
                  preferred_element_type=jnp.float32) + b1_ref[...]
    gx1_ref[...] = gx1.reshape(T, B, 4 * H)

    whh1 = whh1_ref[...]
    w2 = w2_ref[...]
    b2 = b2_ref[...]

    def step(t, carry):
        h1, c1, h2, c2 = carry
        # Layer 1: only the recurrent matmul sits on the serial path.
        gates1 = gx1_ref[t] + jnp.dot(h1, whh1,
                                      preferred_element_type=jnp.float32)
        h1, c1 = _gate_math(gates1, c1)
        # Layer 2: fused [x_t | h] @ [W_ih; W_hh] — single K=256 contraction.
        xh = jnp.concatenate([h1, h2], axis=1)              # (B, 2H)
        gates2 = jnp.dot(xh, w2, preferred_element_type=jnp.float32) + b2
        h2, c2 = _gate_math(gates2, c2)
        return (h1, c1, h2, c2)

    zeros = jnp.zeros((B, H), jnp.float32)
    _, _, h2, _ = jax.lax.fori_loop(0, T, step, (zeros, zeros, zeros, zeros),
                                    unroll=True)
    out_ref[...] = h2.astype(out_ref.dtype)


def my_decode_lstm(x, params):
    """x: (B, T, 128) float32 (batch_first, like PyTorch). Returns (B, 128)."""
    B, T, D = x.shape
    assert D == INPUT
    wih1, whh1, b1, w2, b2 = params

    # Time-major + zero-pad batch up to a sublane multiple (8).
    B_pad = max(8, ((B + 7) // 8) * 8)
    x_tm = jnp.transpose(x, (1, 0, 2))                       # (T, B, D)
    if B_pad != B:
        x_tm = jnp.pad(x_tm, ((0, 0), (0, B_pad - B), (0, 0)))

    out = pl.pallas_call(
        lstm_kernel,
        out_shape=jax.ShapeDtypeStruct((B_pad, HIDDEN), jnp.float32),
        grid_spec=pltpu.PrefetchScalarGridSpec(
            num_scalar_prefetch=0,
            grid=(1,),                                       # whole recurrence in-kernel
            in_specs=[
                pl.BlockSpec((T, B_pad, INPUT), lambda i: (0, 0, 0)),   # full sequence
                pl.BlockSpec((INPUT, 4 * HIDDEN), lambda i: (0, 0)),    # W_ih layer 1
                pl.BlockSpec((HIDDEN, 4 * HIDDEN), lambda i: (0, 0)),   # W_hh layer 1
                pl.BlockSpec((1, 4 * HIDDEN), lambda i: (0, 0)),        # bias layer 1
                pl.BlockSpec((2 * HIDDEN, 4 * HIDDEN), lambda i: (0, 0)),  # [W_ih2;W_hh2]
                pl.BlockSpec((1, 4 * HIDDEN), lambda i: (0, 0)),        # bias layer 2
            ],
            out_specs=pl.BlockSpec((B_pad, HIDDEN), lambda i: (0, 0)),
            scratch_shapes=[pltpu.VMEM((T, B_pad, 4 * HIDDEN), jnp.float32)],
        ),
        compiler_params=pltpu.CompilerParams(
            dimension_semantics=("arbitrary",)),
    )(x_tm, wih1, whh1, b1, w2, b2)
    return out[:B]


def init_params(key):
    """Raw PyTorch-style params: U(-1/sqrt(H), 1/sqrt(H)), gate order (i,f,g,o)."""
    k = 1.0 / jnp.sqrt(jnp.float32(HIDDEN))
    keys = jax.random.split(key, 8)
    u = lambda kk, shape: jax.random.uniform(kk, shape, jnp.float32, -k, k)
    w_ih1 = u(keys[0], (4 * HIDDEN, INPUT))
    w_hh1 = u(keys[1], (4 * HIDDEN, HIDDEN))
    b_ih1 = u(keys[2], (4 * HIDDEN,))
    b_hh1 = u(keys[3], (4 * HIDDEN,))
    w_ih2 = u(keys[4], (4 * HIDDEN, HIDDEN))
    w_hh2 = u(keys[5], (4 * HIDDEN, HIDDEN))
    b_ih2 = u(keys[6], (4 * HIDDEN,))
    b_hh2 = u(keys[7], (4 * HIDDEN,))
    return (w_ih1, w_hh1, b_ih1, b_hh1, w_ih2, w_hh2, b_ih2, b_hh2)


def _reorder_ifog(w):
    """Reorder PyTorch gate chunks (i,f,g,o) -> kernel packing (i,f,o,g)."""
    H = HIDDEN
    i, f, g, o = w[:H], w[H:2 * H], w[2 * H:3 * H], w[3 * H:]
    return jnp.concatenate([i, f, o, g], axis=0)


def pack_params(raw):
    """Transpose to (in_dim, 4H), merge biases, fuse layer-2 [W_ih; W_hh]."""
    w_ih1, w_hh1, b_ih1, b_hh1, w_ih2, w_hh2, b_ih2, b_hh2 = raw
    wih1 = _reorder_ifog(w_ih1).T                              # (INPUT, 4H)
    whh1 = _reorder_ifog(w_hh1).T                              # (H, 4H)
    b1 = _reorder_ifog(b_ih1 + b_hh1)[None, :]                 # (1, 4H)
    w2 = jnp.concatenate([_reorder_ifog(w_ih2).T,
                          _reorder_ifog(w_hh2).T], axis=0)     # (2H, 4H)
    b2 = _reorder_ifog(b_ih2 + b_hh2)[None, :]                 # (1, 4H)
    return (wih1, whh1, b1, w2, b2)


def reference_lstm(x, raw_params):
    """Pure-JAX reference in standard PyTorch form (i,f,g,o, unfused matmuls)."""
    w_ih1, w_hh1, b_ih1, b_hh1, w_ih2, w_hh2, b_ih2, b_hh2 = raw_params
    H = HIDDEN

    def cell(x_t, h, c, w_ih, w_hh, b_ih, b_hh):
        gates = x_t @ w_ih.T + h @ w_hh.T + b_ih + b_hh
        i = jax.nn.sigmoid(gates[:, 0 * H:1 * H])
        f = jax.nn.sigmoid(gates[:, 1 * H:2 * H])
        g = jnp.tanh(gates[:, 2 * H:3 * H])
        o = jax.nn.sigmoid(gates[:, 3 * H:4 * H])
        c_new = f * c + i * g
        h_new = o * jnp.tanh(c_new)
        return h_new, c_new

    B, T, _ = x.shape
    h1 = c1 = h2 = c2 = jnp.zeros((B, H), jnp.float32)
    for t in range(T):
        h1, c1 = cell(x[:, t, :], h1, c1, w_ih1, w_hh1, b_ih1, b_hh1)
        h2, c2 = cell(h1, h2, c2, w_ih2, w_hh2, b_ih2, b_hh2)
    return h2


if __name__ == "__main__":
    key = jax.random.PRNGKey(0)
    kx, kp = jax.random.split(key)

    B, T = 2, 8
    x = jax.random.normal(kx, (B, T, INPUT), jnp.float32)
    raw = init_params(kp)
    params = pack_params(raw)

    out = my_decode_lstm(x, params)
    out = jax.block_until_ready(out)

    ref = reference_lstm(x, raw)
    assert out.shape == (B, HIDDEN)
    # Tolerance leaves headroom for MXU default-precision differences between the
    # fused in-kernel contraction order and the per-step XLA reference.
    assert jnp.allclose(out, ref, atol=2e-3, rtol=2e-3), \
        float(jnp.max(jnp.abs(out - ref)))

    print("KERNEL_OK")
</pallas_src>

<mosaic_0001>
module attributes {stable_mosaic.version = 11 : i64} {
  func.func @lstm_kernel(%arg0: i32, %arg1: memref<8x8x128xf32, #tpu.memory_space<vmem>>, %arg2: memref<128x512xf32, #tpu.memory_space<vmem>>, %arg3: memref<128x512xf32, #tpu.memory_space<vmem>>, %arg4: memref<1x512xf32, #tpu.memory_space<vmem>>, %arg5: memref<256x512xf32, #tpu.memory_space<vmem>>, %arg6: memref<1x512xf32, #tpu.memory_space<vmem>>, %arg7: memref<8x128xf32, #tpu.memory_space<vmem>>, %arg8: memref<8x8x512xf32, #tpu.memory_space<vmem>>) attributes {dimension_semantics = [#tpu.dimension_semantics<arbitrary>], iteration_bounds = array<i64: 1>, scalar_prefetch = 0 : i64, scratch_operands = 1 : i64, tpu.core_type = #tpu.core_type<tc>, window_params = [{pipeline_mode = #tpu.pipeline_mode<synchronous>, transform_indices = @transform_0, window_bounds = array<i64: 8, 8, 128>}, {pipeline_mode = #tpu.pipeline_mode<synchronous>, transform_indices = @transform_1, window_bounds = array<i64: 128, 512>}, {pipeline_mode = #tpu.pipeline_mode<synchronous>, transform_indices = @transform_2, window_bounds = array<i64: 128, 512>}, {pipeline_mode = #tpu.pipeline_mode<synchronous>, transform_indices = @transform_3, window_bounds = array<i64: 1, 512>}, {pipeline_mode = #tpu.pipeline_mode<synchronous>, transform_indices = @transform_4, window_bounds = array<i64: 256, 512>}, {pipeline_mode = #tpu.pipeline_mode<synchronous>, transform_indices = @transform_5, window_bounds = array<i64: 1, 512>}, {pipeline_mode = #tpu.pipeline_mode<synchronous>, transform_indices = @transform_6, window_bounds = array<i64: 8, 128>}]} {
    %c0 = arith.constant 0 : index
    %c0_0 = arith.constant 0 : index
    %c0_1 = arith.constant 0 : index
    %0 = vector.load %arg1[%c0, %c0_0, %c0_1] : memref<8x8x128xf32, #tpu.memory_space<vmem>>, vector<8x8x128xf32>
    %1 = vector.shape_cast %0 : vector<8x8x128xf32> to vector<64x128xf32>
    %c0_2 = arith.constant 0 : index
    %c0_3 = arith.constant 0 : index
    %2 = vector.load %arg2[%c0_2, %c0_3] : memref<128x512xf32, #tpu.memory_space<vmem>>, vector<128x512xf32>
    %cst = arith.constant dense<0.000000e+00> : vector<64x512xf32>
    %3 = tpu.matmul %1, %2, %cst {dimension_numbers = #tpu.dot_dimension_numbers<[1], [0], [0], [1], [0, 0, 1, 1], [], []>} : vector<64x128xf32>, vector<128x512xf32>, vector<64x512xf32> -> vector<64x512xf32>
    %c0_4 = arith.constant 0 : index
    %c0_5 = arith.constant 0 : index
    %4 = vector.load %arg4[%c0_4, %c0_5] : memref<1x512xf32, #tpu.memory_space<vmem>>, vector<1x512xf32>
    %5 = vector.broadcast %4 : vector<1x512xf32> to vector<64x512xf32>
    %6 = arith.addf %3, %5 : vector<64x512xf32>
    %7 = vector.shape_cast %6 : vector<64x512xf32> to vector<8x8x512xf32>
    %c0_6 = arith.constant 0 : index
    %c0_7 = arith.constant 0 : index
    %c0_8 = arith.constant 0 : index
    %8 = vector.load %arg8[%c0_6, %c0_7, %c0_8] : memref<8x8x512xf32, #tpu.memory_space<vmem>>, vector<8x8x512xf32>
    tpu.vector_store %arg8[%c0_6, %c0_7, %c0_8], %7 {strides = array<i32>} : memref<8x8x512xf32, #tpu.memory_space<vmem>>, vector<8x8x512xf32>,
    %c0_9 = arith.constant 0 : index
    %c0_10 = arith.constant 0 : index
    %9 = vector.load %arg3[%c0_9, %c0_10] : memref<128x512xf32, #tpu.memory_space<vmem>>, vector<128x512xf32>
    %c0_11 = arith.constant 0 : index
    %c0_12 = arith.constant 0 : index
    %10 = vector.load %arg5[%c0_11, %c0_12] : memref<256x512xf32, #tpu.memory_space<vmem>>, vector<256x512xf32>
    %c0_13 = arith.constant 0 : index
    %c0_14 = arith.constant 0 : index
    %11 = vector.load %arg6[%c0_13, %c0_14] : memref<1x512xf32, #tpu.memory_space<vmem>>, vector<1x512xf32>
    %cst_15 = arith.constant 0.000000e+00 : f32
    %12 = vector.broadcast %cst_15 : f32 to vector<8x128xf32>
    %c0_i32 = arith.constant 0 : i32
    %13 = arith.index_cast %c0_i32 : i32 to index
    %c0_16 = arith.constant 0 : index
    %c0_17 = arith.constant 0 : index
    %14 = vector.load %arg8[%13, %c0_16, %c0_17] : memref<8x8x512xf32, #tpu.memory_space<vmem>>, vector<1x8x512xf32>
    %15 = vector.shape_cast %14 : vector<1x8x512xf32> to vector<8x512xf32>
    %cst_18 = arith.constant dense<0.000000e+00> : vector<8x512xf32>
    %16 = tpu.matmul %12, %9, %cst_18 {dimension_numbers = #tpu.dot_dimension_numbers<[1], [0], [0], [1], [0, 0, 1, 1], [], []>} : vector<8x128xf32>, vector<128x512xf32>, vector<8x512xf32> -> vector<8x512xf32>
    %17 = arith.addf %15, %16 : vector<8x512xf32>
    %18 = vector.extract_strided_slice %17 {offsets = [0, 0], sizes = [8, 384], strides = [1, 1]} : vector<8x512xf32> to vector<8x384xf32>
    %19 = arith.negf %18 : vector<8x384xf32>
    %20 = math.exp %19 : vector<8x384xf32>
    %cst_19 = arith.constant 1.000000e+00 : f32
    %21 = vector.broadcast %cst_19 : f32 to vector<8x384xf32>
    %22 = arith.addf %21, %20 : vector<8x384xf32>
    %23 = arith.divf %21, %22 : vector<8x384xf32>
    %24 = vector.extract_strided_slice %17 {offsets = [0, 384], sizes = [8, 128], strides = [1, 1]} : vector<8x512xf32> to vector<8x128xf32>
    %25 = math.tanh %24 : vector<8x128xf32>
    %26 = vector.extract_strided_slice %23 {offsets = [0, 0], sizes = [8, 128], strides = [1, 1]} : vector<8x384xf32> to vector<8x128xf32>
    %27 = vector.extract_strided_slice %23 {offsets = [0, 128], sizes = [8, 128], strides = [1, 1]} : vector<8x384xf32> to vector<8x128xf32>
    %28 = vector.extract_strided_slice %23 {offsets = [0, 256], sizes = [8, 128], strides = [1, 1]} : vector<8x384xf32> to vector<8x128xf32>
    %29 = arith.mulf %27, %12 : vector<8x128xf32>
    %30 = arith.mulf %26, %25 : vector<8x128xf32>
    %31 = arith.addf %29, %30 : vector<8x128xf32>
    %32 = math.tanh %31 : vector<8x128xf32>
    %33 = arith.mulf %28, %32 : vector<8x128xf32>
    %34 = tpu.concatenate %33, %12 in 1 : vector<8x128xf32>, vector<8x128xf32> -> vector<8x256xf32>
    %cst_20 = arith.constant dense<0.000000e+00> : vector<8x512xf32>
    %35 = tpu.matmul %34, %10, %cst_20 {dimension_numbers = #tpu.dot_dimension_numbers<[1], [0], [0], [1], [0, 0, 1, 1], [], []>} : vector<8x256xf32>, vector<256x512xf32>, vector<8x512xf32> -> vector<8x512xf32>
    %36 = vector.broadcast %11 : vector<1x512xf32> to vector<8x512xf32>
    %37 = arith.addf %35, %36 : vector<8x512xf32>
    %38 = vector.extract_strided_slice %37 {offsets = [0, 0], sizes = [8, 384], strides = [1, 1]} : vector<8x512xf32> to vector<8x384xf32>
    %39 = arith.negf %38 : vector<8x384xf32>
    %40 = math.exp %39 : vector<8x384xf32>
    %cst_21 = arith.constant 1.000000e+00 : f32
    %41 = vector.broadcast %cst_21 : f32 to vector<8x384xf32>
    %42 = arith.addf %41, %40 : vector<8x384xf32>
    %43 = arith.divf %41, %42 : vector<8x384xf32>
    %44 = vector.extract_strided_slice %37 {offsets = [0, 384], sizes = [8, 128], strides = [1, 1]} : vector<8x512xf32> to vector<8x128xf32>
    %45 = math.tanh %44 : vector<8x128xf32>
    %46 = vector.extract_strided_slice %43 {offsets = [0, 0], sizes = [8, 128], strides = [1, 1]} : vector<8x384xf32> to vector<8x128xf32>
    %47 = vector.extract_strided_slice %43 {offsets = [0, 128], sizes = [8, 128], strides = [1, 1]} : vector<8x384xf32> to vector<8x128xf32>
    %48 = vector.extract_strided_slice %43 {offsets = [0, 256], sizes = [8, 128], strides = [1, 1]} : vector<8x384xf32> to vector<8x128xf32>
    %49 = arith.mulf %47, %12 : vector<8x128xf32>
    %50 = arith.mulf %46, %45 : vector<8x128xf32>
    %51 = arith.addf %49, %50 : vector<8x128xf32>
    %52 = math.tanh %51 : vector<8x128xf32>
    %53 = arith.mulf %48, %52 : vector<8x128xf32>
    %c1_i32 = arith.constant 1 : i32
    %54 = arith.index_cast %c1_i32 : i32 to index
    %c0_22 = arith.constant 0 : index
    %c0_23 = arith.constant 0 : index
    %55 = vector.load %arg8[%54, %c0_22, %c0_23] : memref<8x8x512xf32, #tpu.memory_space<vmem>>, vector<1x8x512xf32>
    %56 = vector.shape_cast %55 : vector<1x8x512xf32> to vector<8x512xf32>
    %cst_24 = arith.constant dense<0.000000e+00> : vector<8x512xf32>
    %57 = tpu.matmul %33, %9, %cst_24 {dimension_numbers = #tpu.dot_dimension_numbers<[1], [0], [0], [1], [0, 0, 1, 1], [], []>} : vector<8x128xf32>, vector<128x512xf32>, vector<8x512xf32> -> vector<8x512xf32>
    %58 = arith.addf %56, %57 : vector<8x512xf32>
    %59 = vector.extract_strided_slice %58 {offsets = [0, 0], sizes = [8, 384], strides = [1, 1]} : vector<8x512xf32> to vector<8x384xf32>
    %60 = arith.negf %59 : vector<8x384xf32>
    %61 = math.exp %60 : vector<8x384xf32>
    %cst_25 = arith.constant 1.000000e+00 : f32
    %62 = vector.broadcast %cst_25 : f32 to vector<8x384xf32>
    %63 = arith.addf %62, %61 : vector<8x384xf32>
    %64 = arith.divf %62, %63 : vector<8x384xf32>
    %65 = vector.extract_strided_slice %58 {offsets = [0, 384], sizes = [8, 128], strides = [1, 1]} : vector<8x512xf32> to vector<8x128xf32>
    %66 = math.tanh %65 : vector<8x128xf32>
    %67 = vector.extract_strided_slice %64 {offsets = [0, 0], sizes = [8, 128], strides = [1, 1]} : vector<8x384xf32> to vector<8x128xf32>
    %68 = vector.extract_strided_slice %64 {offsets = [0, 128], sizes = [8, 128], strides = [1, 1]} : vector<8x384xf32> to vector<8x128xf32>
    %69 = vector.extract_strided_slice %64 {offsets = [0, 256], sizes = [8, 128], strides = [1, 1]} : vector<8x384xf32> to vector<8x128xf32>
    %70 = arith.mulf %68, %31 : vector<8x128xf32>
    %71 = arith.mulf %67, %66 : vector<8x128xf32>
    %72 = arith.addf %70, %71 : vector<8x128xf32>
    %73 = math.tanh %72 : vector<8x128xf32>
    %74 = arith.mulf %69, %73 : vector<8x128xf32>
    %75 = tpu.concatenate %74, %53 in 1 : vector<8x128xf32>, vector<8x128xf32> -> vector<8x256xf32>
    %cst_26 = arith.constant dense<0.000000e+00> : vector<8x512xf32>
    %76 = tpu.matmul %75, %10, %cst_26 {dimension_numbers = #tpu.dot_dimension_numbers<[1], [0], [0], [1], [0, 0, 1, 1], [], []>} : vector<8x256xf32>, vector<256x512xf32>, vector<8x512xf32> -> vector<8x512xf32>
    %77 = vector.broadcast %11 : vector<1x512xf32> to vector<8x512xf32>
    %78 = arith.addf %76, %77 : vector<8x512xf32>
    %79 = vector.extract_strided_slice %78 {offsets = [0, 0], sizes = [8, 384], strides = [1, 1]} : vector<8x512xf32> to vector<8x384xf32>
    %80 = arith.negf %79 : vector<8x384xf32>
    %81 = math.exp %80 : vector<8x384xf32>
    %cst_27 = arith.constant 1.000000e+00 : f32
    %82 = vector.broadcast %cst_27 : f32 to vector<8x384xf32>
    %83 = arith.addf %82, %81 : vector<8x384xf32>
    %84 = arith.divf %82, %83 : vector<8x384xf32>
    %85 = vector.extract_strided_slice %78 {offsets = [0, 384], sizes = [8, 128], strides = [1, 1]} : vector<8x512xf32> to vector<8x128xf32>
    %86 = math.tanh %85 : vector<8x128xf32>
    %87 = vector.extract_strided_slice %84 {offsets = [0, 0], sizes = [8, 128], strides = [1, 1]} : vector<8x384xf32> to vector<8x128xf32>
    %88 = vector.extract_strided_slice %84 {offsets = [0, 128], sizes = [8, 128], strides = [1, 1]} : vector<8x384xf32> to vector<8x128xf32>
    %89 = vector.extract_strided_slice %84 {offsets = [0, 256], sizes = [8, 128], strides = [1, 1]} : vector<8x384xf32> to vector<8x128xf32>
    %90 = arith.mulf %88, %51 : vector<8x128xf32>
    %91 = arith.mulf %87, %86 : vector<8x128xf32>
    %92 = arith.addf %90, %91 : vector<8x128xf32>
    %93 = math.tanh %92 : vector<8x128xf32>
    %94 = arith.mulf %89, %93 : vector<8x128xf32>
    %c2_i32 = arith.constant 2 : i32
    %95 = arith.index_cast %c2_i32 : i32 to index
    %c0_28 = arith.constant 0 : index
    %c0_29 = arith.constant 0 : index
    %96 = vector.load %arg8[%95, %c0_28, %c0_29] : memref<8x8x512xf32, #tpu.memory_space<vmem>>, vector<1x8x512xf32>
    %97 = vector.shape_cast %96 : vector<1x8x512xf32> to vector<8x512xf32>
    %cst_30 = arith.constant dense<0.000000e+00> : vector<8x512xf32>
    %98 = tpu.matmul %74, %9, %cst_30 {dimension_numbers = #tpu.dot_dimension_numbers<[1], [0], [0], [1], [0, 0, 1, 1], [], []>} : vector<8x128xf32>, vector<128x512xf32>, vector<8x512xf32> -> vector<8x512xf32>
    %99 = arith.addf %97, %98 : vector<8x512xf32>
    %100 = vector.extract_strided_slice %99 {offsets = [0, 0], sizes = [8, 384], strides = [1, 1]} : vector<8x512xf32> to vector<8x384xf32>
    %101 = arith.negf %100 : vector<8x384xf32>
    %102 = math.exp %101 : vector<8x384xf32>
    %cst_31 = arith.constant 1.000000e+00 : f32
    %103 = vector.broadcast %cst_31 : f32 to vector<8x384xf32>
    %104 = arith.addf %103, %102 : vector<8x384xf32>
    %105 = arith.divf %103, %104 : vector<8x384xf32>
    %106 = vector.extract_strided_slice %99 {offsets = [0, 384], sizes = [8, 128], strides = [1, 1]} : vector<8x512xf32> to vector<8x128xf32>
    %107 = math.tanh %106 : vector<8x128xf32>
    %108 = vector.extract_strided_slice %105 {offsets = [0, 0], sizes = [8, 128], strides = [1, 1]} : vector<8x384xf32> to vector<8x128xf32>
    %109 = vector.extract_strided_slice %105 {offsets = [0, 128], sizes = [8, 128], strides = [1, 1]} : vector<8x384xf32> to vector<8x128xf32>
    %110 = vector.extract_strided_slice %105 {offsets = [0, 256], sizes = [8, 128], strides = [1, 1]} : vector<8x384xf32> to vector<8x128xf32>
    %111 = arith.mulf %109, %72 : vector<8x128xf32>
    %112 = arith.mulf %108, %107 : vector<8x128xf32>
    %113 = arith.addf %111, %112 : vector<8x128xf32>
    %114 = math.tanh %113 : vector<8x128xf32>
    %115 = arith.mulf %110, %114 : vector<8x128xf32>
    %116 = tpu.concatenate %115, %94 in 1 : vector<8x128xf32>, vector<8x128xf32> -> vector<8x256xf32>
    %cst_32 = arith.constant dense<0.000000e+00> : vector<8x512xf32>
    %117 = tpu.matmul %116, %10, %cst_32 {dimension_numbers = #tpu.dot_dimension_numbers<[1], [0], [0], [1], [0, 0, 1, 1], [], []>} : vector<8x256xf32>, vector<256x512xf32>, vector<8x512xf32> -> vector<8x512xf32>
    %118 = vector.broadcast %11 : vector<1x512xf32> to vector<8x512xf32>
    %119 = arith.addf %117, %118 : vector<8x512xf32>
    %120 = vector.extract_strided_slice %119 {offsets = [0, 0], sizes = [8, 384], strides = [1, 1]} : vector<8x512xf32> to vector<8x384xf32>
    %121 = arith.negf %120 : vector<8x384xf32>
    %122 = math.exp %121 : vector<8x384xf32>
    %cst_33 = arith.constant 1.000000e+00 : f32
    %123 = vector.broadcast %cst_33 : f32 to vector<8x384xf32>
    %124 = arith.addf %123, %122 : vector<8x384xf32>
    %125 = arith.divf %123, %124 : vector<8x384xf32>
    %126 = vector.extract_strided_slice %119 {offsets = [0, 384], sizes = [8, 128], strides = [1, 1]} : vector<8x512xf32> to vector<8x128xf32>
    %127 = math.tanh %126 : vector<8x128xf32>
    %128 = vector.extract_strided_slice %125 {offsets = [0, 0], sizes = [8, 128], strides = [1, 1]} : vector<8x384xf32> to vector<8x128xf32>
    %129 = vector.extract_strided_slice %125 {offsets = [0, 128], sizes = [8, 128], strides = [1, 1]} : vector<8x384xf32> to vector<8x128xf32>
    %130 = vector.extract_strided_slice %125 {offsets = [0, 256], sizes = [8, 128], strides = [1, 1]} : vector<8x384xf32> to vector<8x128xf32>
    %131 = arith.mulf %129, %92 : vector<8x128xf32>
    %132 = arith.mulf %128, %127 : vector<8x128xf32>
    %133 = arith.addf %131, %132 : vector<8x128xf32>
    %134 = math.tanh %133 : vector<8x128xf32>
    %135 = arith.mulf %130, %134 : vector<8x128xf32>
    %c3_i32 = arith.constant 3 : i32
    %136 = arith.index_cast %c3_i32 : i32 to index
    %c0_34 = arith.constant 0 : index
    %c0_35 = arith.constant 0 : index
    %137 = vector.load %arg8[%136, %c0_34, %c0_35] : memref<8x8x512xf32, #tpu.memory_space<vmem>>, vector<1x8x512xf32>
    %138 = vector.shape_cast %137 : vector<1x8x512xf32> to vector<8x512xf32>
    %cst_36 = arith.constant dense<0.000000e+00> : vector<8x512xf32>
    %139 = tpu.matmul %115, %9, %cst_36 {dimension_numbers = #tpu.dot_dimension_numbers<[1], [0], [0], [1], [0, 0, 1, 1], [], []>} : vector<8x128xf32>, vector<128x512xf32>, vector<8x512xf32> -> vector<8x512xf32>
    %140 = arith.addf %138, %139 : vector<8x512xf32>
    %141 = vector.extract_strided_slice %140 {offsets = [0, 0], sizes = [8, 384], strides = [1, 1]} : vector<8x512xf32> to vector<8x384xf32>
    %142 = arith.negf %141 : vector<8x384xf32>
    %143 = math.exp %142 : vector<8x384xf32>
    %cst_37 = arith.constant 1.000000e+00 : f32
    %144 = vector.broadcast %cst_37 : f32 to vector<8x384xf32>
    %145 = arith.addf %144, %143 : vector<8x384xf32>
    %146 = arith.divf %144, %145 : vector<8x384xf32>
    %147 = vector.extract_strided_slice %140 {offsets = [0, 384], sizes = [8, 128], strides = [1, 1]} : vector<8x512xf32> to vector<8x128xf32>
    %148 = math.tanh %147 : vector<8x128xf32>
    %149 = vector.extract_strided_slice %146 {offsets = [0, 0], sizes = [8, 128], strides = [1, 1]} : vector<8x384xf32> to vector<8x128xf32>
    %150 = vector.extract_strided_slice %146 {offsets = [0, 128], sizes = [8, 128], strides = [1, 1]} : vector<8x384xf32> to vector<8x128xf32>
    %151 = vector.extract_strided_slice %146 {offsets = [0, 256], sizes = [8, 128], strides = [1, 1]} : vector<8x384xf32> to vector<8x128xf32>
    %152 = arith.mulf %150, %113 : vector<8x128xf32>
    %153 = arith.mulf %149, %148 : vector<8x128xf32>
    %154 = arith.addf %152, %153 : vector<8x128xf32>
    %155 = math.tanh %154 : vector<8x128xf32>
    %156 = arith.mulf %151, %155 : vector<8x128xf32>
    %157 = tpu.concatenate %156, %135 in 1 : vector<8x128xf32>, vector<8x128xf32> -> vector<8x256xf32>
    %cst_38 = arith.constant dense<0.000000e+00> : vector<8x512xf32>
    %158 = tpu.matmul %157, %10, %cst_38 {dimension_numbers = #tpu.dot_dimension_numbers<[1], [0], [0], [1], [0, 0, 1, 1], [], []>} : vector<8x256xf32>, vector<256x512xf32>, vector<8x512xf32> -> vector<8x512xf32>
    %159 = vector.broadcast %11 : vector<1x512xf32> to vector<8x512xf32>
    %160 = arith.addf %158, %159 : vector<8x512xf32>
    %161 = vector.extract_strided_slice %160 {offsets = [0, 0], sizes = [8, 384], strides = [1, 1]} : vector<8x512xf32> to vector<8x384xf32>
    %162 = arith.negf %161 : vector<8x384xf32>
    %163 = math.exp %162 : vector<8x384xf32>
    %cst_39 = arith.constant 1.000000e+00 : f32
    %164 = vector.broadcast %cst_39 : f32 to vector<8x384xf32>
    %165 = arith.addf %164, %163 : vector<8x384xf32>
    %166 = arith.divf %164, %165 : vector<8x384xf32>
    %167 = vector.extract_strided_slice %160 {offsets = [0, 384], sizes = [8, 128], strides = [1, 1]} : vector<8x512xf32> to vector<8x128xf32>
    %168 = math.tanh %167 : vector<8x128xf32>
    %169 = vector.extract_strided_slice %166 {offsets = [0, 0], sizes = [8, 128], strides = [1, 1]} : vector<8x384xf32> to vector<8x128xf32>
    %170 = vector.extract_strided_slice %166 {offsets = [0, 128], sizes = [8, 128], strides = [1, 1]} : vector<8x384xf32> to vector<8x128xf32>
    %171 = vector.extract_strided_slice %166 {offsets = [0, 256], sizes = [8, 128], strides = [1, 1]} : vector<8x384xf32> to vector<8x128xf32>
    %172 = arith.mulf %170, %133 : vector<8x128xf32>
    %173 = arith.mulf %169, %168 : vector<8x128xf32>
    %174 = arith.addf %172, %173 : vector<8x128xf32>
    %175 = math.tanh %174 : vector<8x128xf32>
    %176 = arith.mulf %171, %175 : vector<8x128xf32>
    %c4_i32 = arith.constant 4 : i32
    %177 = arith.index_cast %c4_i32 : i32 to index
    %c0_40 = arith.constant 0 : index
    %c0_41 = arith.constant 0 : index
    %178 = vector.load %arg8[%177, %c0_40, %c0_41] : memref<8x8x512xf32, #tpu.memory_space<vmem>>, vector<1x8x512xf32>
    %179 = vector.shape_cast %178 : vector<1x8x512xf32> to vector<8x512xf32>
    %cst_42 = arith.constant dense<0.000000e+00> : vector<8x512xf32>
    %180 = tpu.matmul %156, %9, %cst_42 {dimension_numbers = #tpu.dot_dimension_numbers<[1], [0], [0], [1], [0, 0, 1, 1], [], []>} : vector<8x128xf32>, vector<128x512xf32>, vector<8x512xf32> -> vector<8x512xf32>
    %181 = arith.addf %179, %180 : vector<8x512xf32>
    %182 = vector.extract_strided_slice %181 {offsets = [0, 0], sizes = [8, 384], strides = [1, 1]} : vector<8x512xf32> to vector<8x384xf32>
    %183 = arith.negf %182 : vector<8x384xf32>
    %184 = math.exp %183 : vector<8x384xf32>
    %cst_43 = arith.constant 1.000000e+00 : f32
    %185 = vector.broadcast %cst_43 : f32 to vector<8x384xf32>
    %186 = arith.addf %185, %184 : vector<8x384xf32>
    %187 = arith.divf %185, %186 : vector<8x384xf32>
    %188 = vector.extract_strided_slice %181 {offsets = [0, 384], sizes = [8, 128], strides = [1, 1]} : vector<8x512xf32> to vector<8x128xf32>
    %189 = math.tanh %188 : vector<8x128xf32>
    %190 = vector.extract_strided_slice %187 {offsets = [0, 0], sizes = [8, 128], strides = [1, 1]} : vector<8x384xf32> to vector<8x128xf32>
    %191 = vector.extract_strided_slice %187 {offsets = [0, 128], sizes = [8, 128], strides = [1, 1]} : vector<8x384xf32> to vector<8x128xf32>
    %192 = vector.extract_strided_slice %187 {offsets = [0, 256], sizes = [8, 128], strides = [1, 1]} : vector<8x384xf32> to vector<8x128xf32>
    %193 = arith.mulf %191, %154 : vector<8x128xf32>
    %194 = arith.mulf %190, %189 : vector<8x128xf32>
    %195 = arith.addf %193, %194 : vector<8x128xf32>
    %196 = math.tanh %195 : vector<8x128xf32>
    %197 = arith.mulf %192, %196 : vector<8x128xf32>
    %198 = tpu.concatenate %197, %176 in 1 : vector<8x128xf32>, vector<8x128xf32> -> vector<8x256xf32>
    %cst_44 = arith.constant dense<0.000000e+00> : vector<8x512xf32>
    %199 = tpu.matmul %198, %10, %cst_44 {dimension_numbers = #tpu.dot_dimension_numbers<[1], [0], [0], [1], [0, 0, 1, 1], [], []>} : vector<8x256xf32>, vector<256x512xf32>, vector<8x512xf32> -> vector<8x512xf32>
    %200 = vector.broadcast %11 : vector<1x512xf32> to vector<8x512xf32>
    %201 = arith.addf %199, %200 : vector<8x512xf32>
    %202 = vector.extract_strided_slice %201 {offsets = [0, 0], sizes = [8, 384], strides = [1, 1]} : vector<8x512xf32> to vector<8x384xf32>
    %203 = arith.negf %202 : vector<8x384xf32>
    %204 = math.exp %203 : vector<8x384xf32>
    %cst_45 = arith.constant 1.000000e+00 : f32
    %205 = vector.broadcast %cst_45 : f32 to vector<8x384xf32>
    %206 = arith.addf %205, %204 : vector<8x384xf32>
    %207 = arith.divf %205, %206 : vector<8x384xf32>
    %208 = vector.extract_strided_slice %201 {offsets = [0, 384], sizes = [8, 128], strides = [1, 1]} : vector<8x512xf32> to vector<8x128xf32>
    %209 = math.tanh %208 : vector<8x128xf32>
    %210 = vector.extract_strided_slice %207 {offsets = [0, 0], sizes = [8, 128], strides = [1, 1]} : vector<8x384xf32> to vector<8x128xf32>
    %211 = vector.extract_strided_slice %207 {offsets = [0, 128], sizes = [8, 128], strides = [1, 1]} : vector<8x384xf32> to vector<8x128xf32>
    %212 = vector.extract_strided_slice %207 {offsets = [0, 256], sizes = [8, 128], strides = [1, 1]} : vector<8x384xf32> to vector<8x128xf32>
    %213 = arith.mulf %211, %174 : vector<8x128xf32>
    %214 = arith.mulf %210, %209 : vector<8x128xf32>
    %215 = arith.addf %213, %214 : vector<8x128xf32>
    %216 = math.tanh %215 : vector<8x128xf32>
    %217 = arith.mulf %212, %216 : vector<8x128xf32>
    %c5_i32 = arith.constant 5 : i32
    %218 = arith.index_cast %c5_i32 : i32 to index
    %c0_46 = arith.constant 0 : index
    %c0_47 = arith.constant 0 : index
    %219 = vector.load %arg8[%218, %c0_46, %c0_47] : memref<8x8x512xf32, #tpu.memory_space<vmem>>, vector<1x8x512xf32>
    %220 = vector.shape_cast %219 : vector<1x8x512xf32> to vector<8x512xf32>
    %cst_48 = arith.constant dense<0.000000e+00> : vector<8x512xf32>
    %221 = tpu.matmul %197, %9, %cst_48 {dimension_numbers = #tpu.dot_dimension_numbers<[1], [0], [0], [1], [0, 0, 1, 1], [], []>} : vector<8x128xf32>, vector<128x512xf32>, vector<8x512xf32> -> vector<8x512xf32>
    %222 = arith.addf %220, %221 : vector<8x512xf32>
    %223 = vector.extract_strided_slice %222 {offsets = [0, 0], sizes = [8, 384], strides = [1, 1]} : vector<8x512xf32> to vector<8x384xf32>
    %224 = arith.negf %223 : vector<8x384xf32>
    %225 = math.exp %224 : vector<8x384xf32>
    %cst_49 = arith.constant 1.000000e+00 : f32
    %226 = vector.broadcast %cst_49 : f32 to vector<8x384xf32>
    %227 = arith.addf %226, %225 : vector<8x384xf32>
    %228 = arith.divf %226, %227 : vector<8x384xf32>
    %229 = vector.extract_strided_slice %222 {offsets = [0, 384], sizes = [8, 128], strides = [1, 1]} : vector<8x512xf32> to vector<8x128xf32>
    %230 = math.tanh %229 : vector<8x128xf32>
    %231 = vector.extract_strided_slice %228 {offsets = [0, 0], sizes = [8, 128], strides = [1, 1]} : vector<8x384xf32> to vector<8x128xf32>
    %232 = vector.extract_strided_slice %228 {offsets = [0, 128], sizes = [8, 128], strides = [1, 1]} : vector<8x384xf32> to vector<8x128xf32>
    %233 = vector.extract_strided_slice %228 {offsets = [0, 256], sizes = [8, 128], strides = [1, 1]} : vector<8x384xf32> to vector<8x128xf32>
    %234 = arith.mulf %232, %195 : vector<8x128xf32>
    %235 = arith.mulf %231, %230 : vector<8x128xf32>
    %236 = arith.addf %234, %235 : vector<8x128xf32>
    %237 = math.tanh %236 : vector<8x128xf32>
    %238 = arith.mulf %233, %237 : vector<8x128xf32>
    %239 = tpu.concatenate %238, %217 in 1 : vector<8x128xf32>, vector<8x128xf32> -> vector<8x256xf32>
    %cst_50 = arith.constant dense<0.000000e+00> : vector<8x512xf32>
    %240 = tpu.matmul %239, %10, %cst_50 {dimension_numbers = #tpu.dot_dimension_numbers<[1], [0], [0], [1], [0, 0, 1, 1], [], []>} : vector<8x256xf32>, vector<256x512xf32>, vector<8x512xf32> -> vector<8x512xf32>
    %241 = vector.broadcast %11 : vector<1x512xf32> to vector<8x512xf32>
    %242 = arith.addf %240, %241 : vector<8x512xf32>
    %243 = vector.extract_strided_slice %242 {offsets = [0, 0], sizes = [8, 384], strides = [1, 1]} : vector<8x512xf32> to vector<8x384xf32>
    %244 = arith.negf %243 : vector<8x384xf32>
    %245 = math.exp %244 : vector<8x384xf32>
    %cst_51 = arith.constant 1.000000e+00 : f32
    %246 = vector.broadcast %cst_51 : f32 to vector<8x384xf32>
    %247 = arith.addf %246, %245 : vector<8x384xf32>
    %248 = arith.divf %246, %247 : vector<8x384xf32>
    %249 = vector.extract_strided_slice %242 {offsets = [0, 384], sizes = [8, 128], strides = [1, 1]} : vector<8x512xf32> to vector<8x128xf32>
    %250 = math.tanh %249 : vector<8x128xf32>
    %251 = vector.extract_strided_slice %248 {offsets = [0, 0], sizes = [8, 128], strides = [1, 1]} : vector<8x384xf32> to vector<8x128xf32>
    %252 = vector.extract_strided_slice %248 {offsets = [0, 128], sizes = [8, 128], strides = [1, 1]} : vector<8x384xf32> to vector<8x128xf32>
    %253 = vector.extract_strided_slice %248 {offsets = [0, 256], sizes = [8, 128], strides = [1, 1]} : vector<8x384xf32> to vector<8x128xf32>
    %254 = arith.mulf %252, %215 : vector<8x128xf32>
    %255 = arith.mulf %251, %250 : vector<8x128xf32>
    %256 = arith.addf %254, %255 : vector<8x128xf32>
    %257 = math.tanh %256 : vector<8x128xf32>
    %258 = arith.mulf %253, %257 : vector<8x128xf32>
    %c6_i32 = arith.constant 6 : i32
    %259 = arith.index_cast %c6_i32 : i32 to index
    %c0_52 = arith.constant 0 : index
    %c0_53 = arith.constant 0 : index
    %260 = vector.load %arg8[%259, %c0_52, %c0_53] : memref<8x8x512xf32, #tpu.memory_space<vmem>>, vector<1x8x512xf32>
    %261 = vector.shape_cast %260 : vector<1x8x512xf32> to vector<8x512xf32>
    %cst_54 = arith.constant dense<0.000000e+00> : vector<8x512xf32>
    %262 = tpu.matmul %238, %9, %cst_54 {dimension_numbers = #tpu.dot_dimension_numbers<[1], [0], [0], [1], [0, 0, 1, 1], [], []>} : vector<8x128xf32>, vector<128x512xf32>, vector<8x512xf32> -> vector<8x512xf32>
    %263 = arith.addf %261, %262 : vector<8x512xf32>
    %264 = vector.extract_strided_slice %263 {offsets = [0, 0], sizes = [8, 384], strides = [1, 1]} : vector<8x512xf32> to vector<8x384xf32>
    %265 = arith.negf %264 : vector<8x384xf32>
    %266 = math.exp %265 : vector<8x384xf32>
    %cst_55 = arith.constant 1.000000e+00 : f32
    %267 = vector.broadcast %cst_55 : f32 to vector<8x384xf32>
    %268 = arith.addf %267, %266 : vector<8x384xf32>
    %269 = arith.divf %267, %268 : vector<8x384xf32>
    %270 = vector.extract_strided_slice %263 {offsets = [0, 384], sizes = [8, 128], strides = [1, 1]} : vector<8x512xf32> to vector<8x128xf32>
    %271 = math.tanh %270 : vector<8x128xf32>
    %272 = vector.extract_strided_slice %269 {offsets = [0, 0], sizes = [8, 128], strides = [1, 1]} : vector<8x384xf32> to vector<8x128xf32>
    %273 = vector.extract_strided_slice %269 {offsets = [0, 128], sizes = [8, 128], strides = [1, 1]} : vector<8x384xf32> to vector<8x128xf32>
    %274 = vector.extract_strided_slice %269 {offsets = [0, 256], sizes = [8, 128], strides = [1, 1]} : vector<8x384xf32> to vector<8x128xf32>
    %275 = arith.mulf %273, %236 : vector<8x128xf32>
    %276 = arith.mulf %272, %271 : vector<8x128xf32>
    %277 = arith.addf %275, %276 : vector<8x128xf32>
    %278 = math.tanh %277 : vector<8x128xf32>
    %279 = arith.mulf %274, %278 : vector<8x128xf32>
    %280 = tpu.concatenate %279, %258 in 1 : vector<8x128xf32>, vector<8x128xf32> -> vector<8x256xf32>
    %cst_56 = arith.constant dense<0.000000e+00> : vector<8x512xf32>
    %281 = tpu.matmul %280, %10, %cst_56 {dimension_numbers = #tpu.dot_dimension_numbers<[1], [0], [0], [1], [0, 0, 1, 1], [], []>} : vector<8x256xf32>, vector<256x512xf32>, vector<8x512xf32> -> vector<8x512xf32>
    %282 = vector.broadcast %11 : vector<1x512xf32> to vector<8x512xf32>
    %283 = arith.addf %281, %282 : vector<8x512xf32>
    %284 = vector.extract_strided_slice %283 {offsets = [0, 0], sizes = [8, 384], strides = [1, 1]} : vector<8x512xf32> to vector<8x384xf32>
    %285 = arith.negf %284 : vector<8x384xf32>
    %286 = math.exp %285 : vector<8x384xf32>
    %cst_57 = arith.constant 1.000000e+00 : f32
    %287 = vector.broadcast %cst_57 : f32 to vector<8x384xf32>
    %288 = arith.addf %287, %286 : vector<8x384xf32>
    %289 = arith.divf %287, %288 : vector<8x384xf32>
    %290 = vector.extract_strided_slice %283 {offsets = [0, 384], sizes = [8, 128], strides = [1, 1]} : vector<8x512xf32> to vector<8x128xf32>
    %291 = math.tanh %290 : vector<8x128xf32>
    %292 = vector.extract_strided_slice %289 {offsets = [0, 0], sizes = [8, 128], strides = [1, 1]} : vector<8x384xf32> to vector<8x128xf32>
    %293 = vector.extract_strided_slice %289 {offsets = [0, 128], sizes = [8, 128], strides = [1, 1]} : vector<8x384xf32> to vector<8x128xf32>
    %294 = vector.extract_strided_slice %289 {offsets = [0, 256], sizes = [8, 128], strides = [1, 1]} : vector<8x384xf32> to vector<8x128xf32>
    %295 = arith.mulf %293, %256 : vector<8x128xf32>
    %296 = arith.mulf %292, %291 : vector<8x128xf32>
    %297 = arith.addf %295, %296 : vector<8x128xf32>
    %298 = math.tanh %297 : vector<8x128xf32>
    %299 = arith.mulf %294, %298 : vector<8x128xf32>
    %c7_i32 = arith.constant 7 : i32
    %300 = arith.index_cast %c7_i32 : i32 to index
    %c0_58 = arith.constant 0 : index
    %c0_59 = arith.constant 0 : index
    %301 = vector.load %arg8[%300, %c0_58, %c0_59] : memref<8x8x512xf32, #tpu.memory_space<vmem>>, vector<1x8x512xf32>
    %302 = vector.shape_cast %301 : vector<1x8x512xf32> to vector<8x512xf32>
    %cst_60 = arith.constant dense<0.000000e+00> : vector<8x512xf32>
    %303 = tpu.matmul %279, %9, %cst_60 {dimension_numbers = #tpu.dot_dimension_numbers<[1], [0], [0], [1], [0, 0, 1, 1], [], []>} : vector<8x128xf32>, vector<128x512xf32>, vector<8x512xf32> -> vector<8x512xf32>
    %304 = arith.addf %302, %303 : vector<8x512xf32>
    %305 = vector.extract_strided_slice %304 {offsets = [0, 0], sizes = [8, 384], strides = [1, 1]} : vector<8x512xf32> to vector<8x384xf32>
    %306 = arith.negf %305 : vector<8x384xf32>
    %307 = math.exp %306 : vector<8x384xf32>
    %cst_61 = arith.constant 1.000000e+00 : f32
    %308 = vector.broadcast %cst_61 : f32 to vector<8x384xf32>
    %309 = arith.addf %308, %307 : vector<8x384xf32>
    %310 = arith.divf %308, %309 : vector<8x384xf32>
    %311 = vector.extract_strided_slice %304 {offsets = [0, 384], sizes = [8, 128], strides = [1, 1]} : vector<8x512xf32> to vector<8x128xf32>
    %312 = math.tanh %311 : vector<8x128xf32>
    %313 = vector.extract_strided_slice %310 {offsets = [0, 0], sizes = [8, 128], strides = [1, 1]} : vector<8x384xf32> to vector<8x128xf32>
    %314 = vector.extract_strided_slice %310 {offsets = [0, 128], sizes = [8, 128], strides = [1, 1]} : vector<8x384xf32> to vector<8x128xf32>
    %315 = vector.extract_strided_slice %310 {offsets = [0, 256], sizes = [8, 128], strides = [1, 1]} : vector<8x384xf32> to vector<8x128xf32>
    %316 = arith.mulf %314, %277 : vector<8x128xf32>
    %317 = arith.mulf %313, %312 : vector<8x128xf32>
    %318 = arith.addf %316, %317 : vector<8x128xf32>
    %319 = math.tanh %318 : vector<8x128xf32>
    %320 = arith.mulf %315, %319 : vector<8x128xf32>
    %321 = tpu.concatenate %320, %299 in 1 : vector<8x128xf32>, vector<8x128xf32> -> vector<8x256xf32>
    %cst_62 = arith.constant dense<0.000000e+00> : vector<8x512xf32>
    %322 = tpu.matmul %321, %10, %cst_62 {dimension_numbers = #tpu.dot_dimension_numbers<[1], [0], [0], [1], [0, 0, 1, 1], [], []>} : vector<8x256xf32>, vector<256x512xf32>, vector<8x512xf32> -> vector<8x512xf32>
    %323 = vector.broadcast %11 : vector<1x512xf32> to vector<8x512xf32>
    %324 = arith.addf %322, %323 : vector<8x512xf32>
    %325 = vector.extract_strided_slice %324 {offsets = [0, 0], sizes = [8, 384], strides = [1, 1]} : vector<8x512xf32> to vector<8x384xf32>
    %326 = arith.negf %325 : vector<8x384xf32>
    %327 = math.exp %326 : vector<8x384xf32>
    %cst_63 = arith.constant 1.000000e+00 : f32
    %328 = vector.broadcast %cst_63 : f32 to vector<8x384xf32>
    %329 = arith.addf %328, %327 : vector<8x384xf32>
    %330 = arith.divf %328, %329 : vector<8x384xf32>
    %331 = vector.extract_strided_slice %324 {offsets = [0, 384], sizes = [8, 128], strides = [1, 1]} : vector<8x512xf32> to vector<8x128xf32>
    %332 = math.tanh %331 : vector<8x128xf32>
    %333 = vector.extract_strided_slice %330 {offsets = [0, 0], sizes = [8, 128], strides = [1, 1]} : vector<8x384xf32> to vector<8x128xf32>
    %334 = vector.extract_strided_slice %330 {offsets = [0, 128], sizes = [8, 128], strides = [1, 1]} : vector<8x384xf32> to vector<8x128xf32>
    %335 = vector.extract_strided_slice %330 {offsets = [0, 256], sizes = [8, 128], strides = [1, 1]} : vector<8x384xf32> to vector<8x128xf32>
    %336 = arith.mulf %334, %297 : vector<8x128xf32>
    %337 = arith.mulf %333, %332 : vector<8x128xf32>
    %338 = arith.addf %336, %337 : vector<8x128xf32>
    %339 = math.tanh %338 : vector<8x128xf32>
    %340 = arith.mulf %335, %339 : vector<8x128xf32>
    %c8_i32 = arith.constant 8 : i32
    %c0_64 = arith.constant 0 : index
    %c0_65 = arith.constant 0 : index
    %341 = vector.load %arg7[%c0_64, %c0_65] : memref<8x128xf32, #tpu.memory_space<vmem>>, vector<8x128xf32>
    tpu.vector_store %arg7[%c0_64, %c0_65], %340 {strides = array<i32>} : memref<8x128xf32, #tpu.memory_space<vmem>>, vector<8x128xf32>,
    return
  }
  func.func @transform_0(%arg0: i32) -> (i32, i32, i32) {
    %c0_i32 = arith.constant 0 : i32
    %c0_i32_0 = arith.constant 0 : i32
    %c0_i32_1 = arith.constant 0 : i32
    %c0_i32_2 = arith.constant 0 : i32
    return %c0_i32, %c0_i32_0, %c0_i32_1 : i32, i32, i32
  }
  func.func @transform_1(%arg0: i32) -> (i32, i32) {
    %c0_i32 = arith.constant 0 : i32
    %c0_i32_0 = arith.constant 0 : i32
    %c0_i32_1 = arith.constant 0 : i32
    return %c0_i32, %c0_i32_0 : i32, i32
  }
  func.func @transform_2(%arg0: i32) -> (i32, i32) {
    %c0_i32 = arith.constant 0 : i32
    %c0_i32_0 = arith.constant 0 : i32
    %c0_i32_1 = arith.constant 0 : i32
    return %c0_i32, %c0_i32_0 : i32, i32
  }
  func.func @transform_3(%arg0: i32) -> (i32, i32) {
    %c0_i32 = arith.constant 0 : i32
    %c0_i32_0 = arith.constant 0 : i32
    %c0_i32_1 = arith.constant 0 : i32
    return %c0_i32, %c0_i32_0 : i32, i32
  }
  func.func @transform_4(%arg0: i32) -> (i32, i32) {
    %c0_i32 = arith.constant 0 : i32
    %c0_i32_0 = arith.constant 0 : i32
    %c0_i32_1 = arith.constant 0 : i32
    return %c0_i32, %c0_i32_0 : i32, i32
  }
  func.func @transform_5(%arg0: i32) -> (i32, i32) {
    %c0_i32 = arith.constant 0 : i32
    %c0_i32_0 = arith.constant 0 : i32
    %c0_i32_1 = arith.constant 0 : i32
    return %c0_i32, %c0_i32_0 : i32, i32
  }
  func.func @transform_6(%arg0: i32) -> (i32, i32) {
    %c0_i32 = arith.constant 0 : i32
    %c0_i32_0 = arith.constant 0 : i32
    %c0_i32_1 = arith.constant 0 : i32
    return %c0_i32, %c0_i32_0 : i32, i32
  }
}

</mosaic_0001>

<llo_original>
// kernel: tpu_custom_call.1
$region0: #{tpu_custom_call.1}
  #allocation0 [shape = 'u32[]', space=smem, size = 0x4, offset = 0x4, fixed_abs, tag = 'smem constant byte address 0x4 - core index']
  #allocation1 [shape = 'u32[72,128]{1,0:T(1,128)}', space=vmem, size = 0x9000, scoped, tag = 'internal scratch']
  #allocation2 [shape = 'f32[8,8,512]{2,1,0:T(8,128)}', space=vmem, size = 0x20000, scoped, tag = 'scratch operand']
  %s0 = inlined_call_operand.hbm [shape: f32[8,8,128], index: 0, kind: input, shape index: {}]
  %s1 = inlined_call_operand.hbm [shape: f32[128,512], index: 1, kind: input, shape index: {}]
  %s2 = inlined_call_operand.hbm [shape: f32[128,512], index: 2, kind: input, shape index: {}]
  %s3 = inlined_call_operand.hbm [shape: f32[1,512], index: 3, kind: input, shape index: {}]
  %s4 = inlined_call_operand.hbm [shape: f32[256,512], index: 4, kind: input, shape index: {}]
  %s5 = inlined_call_operand.vmem [shape: f32[1,512], index: 5, kind: input, shape index: {}]
  %s6 = inlined_call_operand.hbm [shape: f32[8,128], index: 6, kind: output, shape index: {}]
  %s7 = sld [smem:[#allocation0]]
  $region54: #{tpu_custom_call.1} parent=0
    _
  %s9 = ssub.s32 1, %s7
  %s10 = scalar_select 0, %s9, %s7
  $region1: #{tpu_custom_call.1} parent=0
    #allocation3 [shape = 'u8[32768]{0}', space=vmem, size = 0x8000, scoped, tag = 'input window, operand 0, single buffered']
    #allocation4 [shape = 's32[1]{0}', space=sflag, size = 0x4, scoped, tag = 'scoped memory for tpu_custom_call.1']
    #allocation5 [shape = 's32[1]{0}', space=sflag, size = 0x4, scoped, tag = 'scoped memory for tpu_custom_call.1']
    #allocation6 [shape = 'u8[262144]{0}', space=vmem, size = 0x40000, scoped, tag = 'input window, operand 1, single buffered']
    #allocation7 [shape = 's32[1]{0}', space=sflag, size = 0x4, scoped, tag = 'scoped memory for tpu_custom_call.1']
    #allocation8 [shape = 'u8[262144]{0}', space=vmem, size = 0x40000, scoped, tag = 'input window, operand 2, single buffered']
    #allocation9 [shape = 'u8[2048]{0}', space=vmem, size = 0x800, scoped, tag = 'input window, operand 3, single buffered']
    #allocation10 [shape = 's32[1]{0}', space=sflag, size = 0x4, scoped, tag = 'scoped memory for tpu_custom_call.1']
    #allocation11 [shape = 'u8[524288]{0}', space=vmem, size = 0x80000, scoped, tag = 'input window, operand 4, single buffered']
    #allocation12 [shape = 'u8[4096]{0}', space=vmem, size = 0x1000, scoped, tag = 'output window, operand 0, single buffered']
    %11 = vsyncpa [#allocation4], 0
    %12 = vsyncpa [#allocation7], 0
    %13 = vsyncpa [#allocation10], 0
    %14 = vsyncpa [#allocation5], 0
    // Predicated region
    $region2: #{tpu_custom_call.1} parent=1 // pred_check
      _
    $region3: #{tpu_custom_call.1} parent=1 // pred_check_branch
      %16 = sbr.rel (0) target = $region5
    $region4: #{tpu_custom_call.1} parent=1 // pred_region
      %18 = vsyncadd [#allocation4], 0
      %s19 = sshll.u32 %s0, 4
      %s20 = int_to_ptr.hbm [resolvable:$true] %s19
      %s21 = sshll.u32 [#allocation3], 4
      %s22 = int_to_ptr.vmem [resolvable:$true] %s21
      %27 = dma.hbm_to_vmem [thread:$0]  %s20, 1024, %s22, [#allocation4], 128, 128, 8
    $region5: #{tpu_custom_call.1} parent=1 // pred_fallthru
      _
    // Predicated region
    $region6: #{tpu_custom_call.1} parent=1 // pred_check
      _
    $region7: #{tpu_custom_call.1} parent=1 // pred_check_branch
      %29 = sbr.rel (0) target = $region9
    $region8: #{tpu_custom_call.1} parent=1 // pred_region
      %31 = vsyncadd [#allocation7], 0
      %s32 = sshll.u32 %s1, 4
      %s33 = int_to_ptr.hbm [resolvable:$true] %s32
      %s34 = sshll.u32 [#allocation6], 4
      %s35 = int_to_ptr.vmem [resolvable:$true] %s34
      %40 = dma.hbm_to_vmem [thread:$0]  %s33, 8192, %s35, [#allocation7], 512, 512, 32
    $region9: #{tpu_custom_call.1} parent=1 // pred_fallthru
      _
    // Predicated region
    $region10: #{tpu_custom_call.1} parent=1 // pred_check
      _
    $region11: #{tpu_custom_call.1} parent=1 // pred_check_branch
      %42 = sbr.rel (0) target = $region13
    $region12: #{tpu_custom_call.1} parent=1 // pred_region
      %44 = vsyncadd [#allocation7], 0
      %s45 = sshll.u32 %s2, 4
      %s46 = int_to_ptr.hbm [resolvable:$true] %s45
      %s47 = sshll.u32 [#allocation8], 4
      %s48 = int_to_ptr.vmem [resolvable:$true] %s47
      %53 = dma.hbm_to_vmem [thread:$0]  %s46, 8192, %s48, [#allocation7], 512, 512, 32
    $region13: #{tpu_custom_call.1} parent=1 // pred_fallthru
      _
    // Predicated region
    $region14: #{tpu_custom_call.1} parent=1 // pred_check
      _
    $region15: #{tpu_custom_call.1} parent=1 // pred_check_branch
      %55 = sbr.rel (0) target = $region17
    $region16: #{tpu_custom_call.1} parent=1 // pred_region
      %57 = vsyncadd [#allocation10], 0
      %s59 = sshll.u32 %s3, 4
      %s60 = int_to_ptr.hbm [resolvable:$true] %s59
      %s61 = sshll.u32 [#allocation9], 4
      %s62 = int_to_ptr.vmem [resolvable:$true] %s61
      %64 = dma.hbm_to_vmem [thread:$0]  %s60, 64, %s62, [#allocation10]
    $region17: #{tpu_custom_call.1} parent=1 // pred_fallthru
      _
    // Predicated region
    $region18: #{tpu_custom_call.1} parent=1 // pred_check
      _
    $region19: #{tpu_custom_call.1} parent=1 // pred_check_branch
      %66 = sbr.rel (0) target = $region21
    $region20: #{tpu_custom_call.1} parent=1 // pred_region
      %68 = vsyncadd [#allocation10], 0
      %s69 = sshll.u32 %s4, 4
      %s70 = int_to_ptr.hbm [resolvable:$true] %s69
      %s71 = sshll.u32 [#allocation11], 4
      %s72 = int_to_ptr.vmem [resolvable:$true] %s71
      %77 = dma.hbm_to_vmem [thread:$0]  %s70, 16384, %s72, [#allocation10], 512, 512, 32
    $region21: #{tpu_custom_call.1} parent=1 // pred_fallthru
      _
    // Predicated region
    $region22: #{tpu_custom_call.1} parent=1 // pred_check
      _
    $region23: #{tpu_custom_call.1} parent=1 // pred_check_branch
      %79 = sbr.rel (0) target = $region25
    $region24: #{tpu_custom_call.1} parent=1 // pred_region
      _
    $region25: #{tpu_custom_call.1} parent=1 // pred_fallthru
      _
    // Predicated region
    $region26: #{tpu_custom_call.1} parent=1 // pred_check
      _
    $region27: #{tpu_custom_call.1} parent=1 // pred_check_branch
      %81 = sbr.rel (0) target = $region29
    $region28: #{tpu_custom_call.1} parent=1 // pred_region
      %83 = dma.done [#allocation4], 1024
    $region29: #{tpu_custom_call.1} parent=1 // pred_fallthru
      _
    // Predicated region
    $region30: #{tpu_custom_call.1} parent=1 // pred_check
      _
    $region31: #{tpu_custom_call.1} parent=1 // pred_check_branch
      %85 = sbr.rel (0) target = $region33
    $region32: #{tpu_custom_call.1} parent=1 // pred_region
      %87 = dma.done [#allocation7], 8192
    $region33: #{tpu_custom_call.1} parent=1 // pred_fallthru
      _
    // Predicated region
    $region34: #{tpu_custom_call.1} parent=1 // pred_check
      _
    $region35: #{tpu_custom_call.1} parent=1 // pred_check_branch
      %89 = sbr.rel (0) target = $region37
    $region36: #{tpu_custom_call.1} parent=1 // pred_region
      %91 = dma.done [#allocation7], 8192
    $region37: #{tpu_custom_call.1} parent=1 // pred_fallthru
      _
    // Predicated region
    $region38: #{tpu_custom_call.1} parent=1 // pred_check
      _
    $region39: #{tpu_custom_call.1} parent=1 // pred_check_branch
      %93 = sbr.rel (0) target = $region41
    $region40: #{tpu_custom_call.1} parent=1 // pred_region
      %95 = dma.done [#allocation10], 64
    $region41: #{tpu_custom_call.1} parent=1 // pred_fallthru
      _
    // Predicated region
    $region42: #{tpu_custom_call.1} parent=1 // pred_check
      _
    $region43: #{tpu_custom_call.1} parent=1 // pred_check_branch
      %97 = sbr.rel (0) target = $region45
    $region44: #{tpu_custom_call.1} parent=1 // pred_region
      %99 = dma.done [#allocation10], 16384
    $region45: #{tpu_custom_call.1} parent=1 // pred_fallthru
      _
    %v100 = vld [vmem:[#allocation3] sm:$0xff]
    %v101 = vld [vmem:[#allocation3 + $0x8] sm:$0xff]
    %v102 = vld [vmem:[#allocation3 + $0x10] sm:$0xff]
    %v103 = vld [vmem:[#allocation3 + $0x18] sm:$0xff]
    %v104 = vld [vmem:[#allocation3 + $0x20] sm:$0xff]
    %v105 = vld [vmem:[#allocation3 + $0x28] sm:$0xff]
    %v106 = vld [vmem:[#allocation3 + $0x30] sm:$0xff]
    %v107 = vld [vmem:[#allocation3 + $0x38] sm:$0xff]
    %v108 = vld [vmem:[#allocation6] sm:$0xff]
    %v109 = vld [vmem:[#allocation6 + $0x8] sm:$0xff]
    %v110 = vld [vmem:[#allocation6 + $0x10] sm:$0xff]
    %v111 = vld [vmem:[#allocation6 + $0x18] sm:$0xff]
    %v112 = vld [vmem:[#allocation6 + $0x20] sm:$0xff]
    %v113 = vld [vmem:[#allocation6 + $0x28] sm:$0xff]
    %v114 = vld [vmem:[#allocation6 + $0x30] sm:$0xff]
    %v115 = vld [vmem:[#allocation6 + $0x38] sm:$0xff]
    %v116 = vld [vmem:[#allocation6 + $0x40] sm:$0xff]
    %v117 = vld [vmem:[#allocation6 + $0x48] sm:$0xff]
    %v118 = vld [vmem:[#allocation6 + $0x50] sm:$0xff]
    %v119 = vld [vmem:[#allocation6 + $0x58] sm:$0xff]
    %v120 = vld [vmem:[#allocation6 + $0x60] sm:$0xff]
    %v121 = vld [vmem:[#allocation6 + $0x68] sm:$0xff]
    %v122 = vld [vmem:[#allocation6 + $0x70] sm:$0xff]
    %v123 = vld [vmem:[#allocation6 + $0x78] sm:$0xff]
    %v124 = vld [vmem:[#allocation6 + $0x80] sm:$0xff]
    %v125 = vld [vmem:[#allocation6 + $0x88] sm:$0xff]
    %v126 = vld [vmem:[#allocation6 + $0x90] sm:$0xff]
    %v127 = vld [vmem:[#allocation6 + $0x98] sm:$0xff]
    %v128 = vld [vmem:[#allocation6 + $0xa0] sm:$0xff]
    %v129 = vld [vmem:[#allocation6 + $0xa8] sm:$0xff]
    %v130 = vld [vmem:[#allocation6 + $0xb0] sm:$0xff]
    %v131 = vld [vmem:[#allocation6 + $0xb8] sm:$0xff]
    %v132 = vld [vmem:[#allocation6 + $0xc0] sm:$0xff]
    %v133 = vld [vmem:[#allocation6 + $0xc8] sm:$0xff]
    %v134 = vld [vmem:[#allocation6 + $0xd0] sm:$0xff]
    %v135 = vld [vmem:[#allocation6 + $0xd8] sm:$0xff]
    %v136 = vld [vmem:[#allocation6 + $0xe0] sm:$0xff]
    %v137 = vld [vmem:[#allocation6 + $0xe8] sm:$0xff]
    %v138 = vld [vmem:[#allocation6 + $0xf0] sm:$0xff]
    %v139 = vld [vmem:[#allocation6 + $0xf8] sm:$0xff]
    %v140 = vld [vmem:[#allocation6 + $0x100] sm:$0xff]
    %v141 = vld [vmem:[#allocation6 + $0x108] sm:$0xff]
    %v142 = vld [vmem:[#allocation6 + $0x110] sm:$0xff]
    %v143 = vld [vmem:[#allocation6 + $0x118] sm:$0xff]
    %v144 = vld [vmem:[#allocation6 + $0x120] sm:$0xff]
    %v145 = vld [vmem:[#allocation6 + $0x128] sm:$0xff]
    %v146 = vld [vmem:[#allocation6 + $0x130] sm:$0xff]
    %v147 = vld [vmem:[#allocation6 + $0x138] sm:$0xff]
    %v148 = vld [vmem:[#allocation6 + $0x140] sm:$0xff]
    %v149 = vld [vmem:[#allocation6 + $0x148] sm:$0xff]
    %v150 = vld [vmem:[#allocation6 + $0x150] sm:$0xff]
    %v151 = vld [vmem:[#allocation6 + $0x158] sm:$0xff]
    %v152 = vld [vmem:[#allocation6 + $0x160] sm:$0xff]
    %v153 = vld [vmem:[#allocation6 + $0x168] sm:$0xff]
    %v154 = vld [vmem:[#allocation6 + $0x170] sm:$0xff]
    %v155 = vld [vmem:[#allocation6 + $0x178] sm:$0xff]
    %v156 = vld [vmem:[#allocation6 + $0x180] sm:$0xff]
    %v157 = vld [vmem:[#allocation6 + $0x188] sm:$0xff]
    %v158 = vld [vmem:[#allocation6 + $0x190] sm:$0xff]
    %v159 = vld [vmem:[#allocation6 + $0x198] sm:$0xff]
    %v160 = vld [vmem:[#allocation6 + $0x1a0] sm:$0xff]
    %v161 = vld [vmem:[#allocation6 + $0x1a8] sm:$0xff]
    %v162 = vld [vmem:[#allocation6 + $0x1b0] sm:$0xff]
    %v163 = vld [vmem:[#allocation6 + $0x1b8] sm:$0xff]
    %v164 = vld [vmem:[#allocation6 + $0x1c0] sm:$0xff]
    %v165 = vld [vmem:[#allocation6 + $0x1c8] sm:$0xff]
    %v166 = vld [vmem:[#allocation6 + $0x1d0] sm:$0xff]
    %v167 = vld [vmem:[#allocation6 + $0x1d8] sm:$0xff]
    %v168 = vld [vmem:[#allocation6 + $0x1e0] sm:$0xff]
    %v169 = vld [vmem:[#allocation6 + $0x1e8] sm:$0xff]
    %v170 = vld [vmem:[#allocation6 + $0x1f0] sm:$0xff]
    %v171 = vld [vmem:[#allocation6 + $0x1f8] sm:$0xff]
    %v172 = vld [vmem:[#allocation9] sm:$0xf]
    %v174 = vperm.slane %v172, 0
    %v175 = vperm.slane %v172, 1
    %v176 = vperm.slane %v172, 2
    %v177 = vperm.slane %v172, 3
    %182 = vmatpush.msra.mxu0 %v168
    %183 = vmatpush.msra.mxu0 %v164
    %184 = vmatpush.msra.mxu0 %v160
    %185 = vmatpush.msra.mxu0 %v156
    %186 = vmatpush.msra.mxu0 %v152
    %187 = vmatpush.msra.mxu0 %v148
    %188 = vmatpush.msra.mxu0 %v144
    %189 = vmatpush.msra.mxu0 %v140
    %190 = vmatpush.msra.mxu0 %v136
    %191 = vmatpush.msra.mxu0 %v132
    %192 = vmatpush.msra.mxu0 %v128
    %193 = vmatpush.msra.mxu0 %v124
    %194 = vmatpush.msra.mxu0 %v120
    %195 = vmatpush.msra.mxu0 %v116
    %196 = vmatpush.msra.mxu0 %v112
    %197 = vmatpush.msra.mxu0 %v108
    %198 = vmatmul.f32.gmra.mxu0 %v100
    %v199 = vpop.f32.mrf.mxu0
    %v200 = vadd.f32 %v174, %v199
    %201 = vmatmul.f32.gmra.mxu0 %v101
    %v202 = vpop.f32.mrf.mxu0
    %v203 = vadd.f32 %v174, %v202
    %204 = vmatmul.f32.gmra.mxu0 %v102
    %v205 = vpop.f32.mrf.mxu0
    %v206 = vadd.f32 %v174, %v205
    %207 = vmatmul.f32.gmra.mxu0 %v103
    %v208 = vpop.f32.mrf.mxu0
    %v209 = vadd.f32 %v174, %v208
    %210 = vmatmul.f32.gmra.mxu0 %v104
    %v211 = vpop.f32.mrf.mxu0
    %v212 = vadd.f32 %v174, %v211
    %213 = vmatmul.f32.gmra.mxu0 %v105
    %v214 = vpop.f32.mrf.mxu0
    %v215 = vadd.f32 %v174, %v214
    %216 = vmatmul.f32.gmra.mxu0 %v106
    %v217 = vpop.f32.mrf.mxu0
    %v218 = vadd.f32 %v174, %v217
    %219 = vmatmul.f32.gmra.mxu0 %v107
    %v220 = vpop.f32.mrf.mxu0
    %v221 = vadd.f32 %v174, %v220
    %222 = vdwg.mxu0
    %223 = vmatpush.msra.mxu0 %v169
    %224 = vmatpush.msra.mxu0 %v165
    %225 = vmatpush.msra.mxu0 %v161
    %226 = vmatpush.msra.mxu0 %v157
    %227 = vmatpush.msra.mxu0 %v153
    %228 = vmatpush.msra.mxu0 %v149
    %229 = vmatpush.msra.mxu0 %v145
    %230 = vmatpush.msra.mxu0 %v141
    %231 = vmatpush.msra.mxu0 %v137
    %232 = vmatpush.msra.mxu0 %v133
    %233 = vmatpush.msra.mxu0 %v129
    %234 = vmatpush.msra.mxu0 %v125
    %235 = vmatpush.msra.mxu0 %v121
    %236 = vmatpush.msra.mxu0 %v117
    %237 = vmatpush.msra.mxu0 %v113
    %238 = vmatpush.msra.mxu0 %v109
    %239 = vmatmul.f32.gmra.mxu0 %v100
    %v240 = vpop.f32.mrf.mxu0
    %v241 = vadd.f32 %v175, %v240
    %242 = vmatmul.f32.gmra.mxu0 %v101
    %v243 = vpop.f32.mrf.mxu0
    %v244 = vadd.f32 %v175, %v243
    %245 = vmatmul.f32.gmra.mxu0 %v102
    %v246 = vpop.f32.mrf.mxu0
    %v247 = vadd.f32 %v175, %v246
    %248 = vmatmul.f32.gmra.mxu0 %v103
    %v249 = vpop.f32.mrf.mxu0
    %v250 = vadd.f32 %v175, %v249
    %251 = vmatmul.f32.gmra.mxu0 %v104
    %v252 = vpop.f32.mrf.mxu0
    %v253 = vadd.f32 %v175, %v252
    %254 = vmatmul.f32.gmra.mxu0 %v105
    %v255 = vpop.f32.mrf.mxu0
    %v256 = vadd.f32 %v175, %v255
    %257 = vmatmul.f32.gmra.mxu0 %v106
    %v258 = vpop.f32.mrf.mxu0
    %v259 = vadd.f32 %v175, %v258
    %260 = vmatmul.f32.gmra.mxu0 %v107
    %v261 = vpop.f32.mrf.mxu0
    %v262 = vadd.f32 %v175, %v261
    %263 = vdwg.mxu0
    %264 = vmatpush.msra.mxu0 %v170
    %265 = vmatpush.msra.mxu0 %v166
    %266 = vmatpush.msra.mxu0 %v162
    %267 = vmatpush.msra.mxu0 %v158
    %268 = vmatpush.msra.mxu0 %v154
    %269 = vmatpush.msra.mxu0 %v150
    %270 = vmatpush.msra.mxu0 %v146
    %271 = vmatpush.msra.mxu0 %v142
    %272 = vmatpush.msra.mxu0 %v138
    %273 = vmatpush.msra.mxu0 %v134
    %274 = vmatpush.msra.mxu0 %v130
    %275 = vmatpush.msra.mxu0 %v126
    %276 = vmatpush.msra.mxu0 %v122
    %277 = vmatpush.msra.mxu0 %v118
    %278 = vmatpush.msra.mxu0 %v114
    %279 = vmatpush.msra.mxu0 %v110
    %280 = vmatmul.f32.gmra.mxu0 %v100
    %v281 = vpop.f32.mrf.mxu0
    %v282 = vadd.f32 %v176, %v281
    %283 = vmatmul.f32.gmra.mxu0 %v101
    %v284 = vpop.f32.mrf.mxu0
    %v285 = vadd.f32 %v176, %v284
    %286 = vmatmul.f32.gmra.mxu0 %v102
    %v287 = vpop.f32.mrf.mxu0
    %v288 = vadd.f32 %v176, %v287
    %289 = vmatmul.f32.gmra.mxu0 %v103
    %v290 = vpop.f32.mrf.mxu0
    %v291 = vadd.f32 %v176, %v290
    %292 = vmatmul.f32.gmra.mxu0 %v104
    %v293 = vpop.f32.mrf.mxu0
    %v294 = vadd.f32 %v176, %v293
    %295 = vmatmul.f32.gmra.mxu0 %v105
    %v296 = vpop.f32.mrf.mxu0
    %v297 = vadd.f32 %v176, %v296
    %298 = vmatmul.f32.gmra.mxu0 %v106
    %v299 = vpop.f32.mrf.mxu0
    %v300 = vadd.f32 %v176, %v299
    %301 = vmatmul.f32.gmra.mxu0 %v107
    %v302 = vpop.f32.mrf.mxu0
    %v303 = vadd.f32 %v176, %v302
    %304 = vdwg.mxu0
    %305 = vmatpush.msra.mxu0 %v171
    %306 = vmatpush.msra.mxu0 %v167
    %307 = vmatpush.msra.mxu0 %v163
    %308 = vmatpush.msra.mxu0 %v159
    %309 = vmatpush.msra.mxu0 %v155
    %310 = vmatpush.msra.mxu0 %v151
    %311 = vmatpush.msra.mxu0 %v147
    %312 = vmatpush.msra.mxu0 %v143
    %313 = vmatpush.msra.mxu0 %v139
    %314 = vmatpush.msra.mxu0 %v135
    %315 = vmatpush.msra.mxu0 %v131
    %316 = vmatpush.msra.mxu0 %v127
    %317 = vmatpush.msra.mxu0 %v123
    %318 = vmatpush.msra.mxu0 %v119
    %319 = vmatpush.msra.mxu0 %v115
    %320 = vmatpush.msra.mxu0 %v111
    %321 = vmatmul.f32.gmra.mxu0 %v100
    %v322 = vpop.f32.mrf.mxu0
    %v323 = vadd.f32 %v177, %v322
    %324 = vmatmul.f32.gmra.mxu0 %v101
    %v325 = vpop.f32.mrf.mxu0
    %v326 = vadd.f32 %v177, %v325
    %327 = vmatmul.f32.gmra.mxu0 %v102
    %v328 = vpop.f32.mrf.mxu0
    %v329 = vadd.f32 %v177, %v328
    %330 = vmatmul.f32.gmra.mxu0 %v103
    %v331 = vpop.f32.mrf.mxu0
    %v332 = vadd.f32 %v177, %v331
    %333 = vmatmul.f32.gmra.mxu0 %v104
    %v334 = vpop.f32.mrf.mxu0
    %v335 = vadd.f32 %v177, %v334
    %336 = vmatmul.f32.gmra.mxu0 %v105
    %v337 = vpop.f32.mrf.mxu0
    %v338 = vadd.f32 %v177, %v337
    %339 = vmatmul.f32.gmra.mxu0 %v106
    %v340 = vpop.f32.mrf.mxu0
    %v341 = vadd.f32 %v177, %v340
    %342 = vmatmul.f32.gmra.mxu0 %v107
    %v343 = vpop.f32.mrf.mxu0
    %v344 = vadd.f32 %v177, %v343
    %345 = vdwg.mxu0
    %346 = vst [vmem:[#allocation2] sm:$0xff] %v200
    %347 = vst [vmem:[#allocation2 + $0x8] sm:$0xff] %v241
    %348 = vst [vmem:[#allocation2 + $0x10] sm:$0xff] %v282
    %349 = vst [vmem:[#allocation2 + $0x18] sm:$0xff] %v323
    %350 = vst [vmem:[#allocation2 + $0x20] sm:$0xff] %v203
    %351 = vst [vmem:[#allocation2 + $0x28] sm:$0xff] %v244
    %352 = vst [vmem:[#allocation2 + $0x30] sm:$0xff] %v285
    %353 = vst [vmem:[#allocation2 + $0x38] sm:$0xff] %v326
    %354 = vst [vmem:[#allocation2 + $0x40] sm:$0xff] %v206
    %355 = vst [vmem:[#allocation2 + $0x48] sm:$0xff] %v247
    %356 = vst [vmem:[#allocation2 + $0x50] sm:$0xff] %v288
    %357 = vst [vmem:[#allocation2 + $0x58] sm:$0xff] %v329
    %358 = vst [vmem:[#allocation2 + $0x60] sm:$0xff] %v209
    %359 = vst [vmem:[#allocation2 + $0x68] sm:$0xff] %v250
    %360 = vst [vmem:[#allocation2 + $0x70] sm:$0xff] %v291
    %361 = vst [vmem:[#allocation2 + $0x78] sm:$0xff] %v332
    %362 = vst [vmem:[#allocation2 + $0x80] sm:$0xff] %v212
    %363 = vst [vmem:[#allocation2 + $0x88] sm:$0xff] %v253
    %364 = vst [vmem:[#allocation2 + $0x90] sm:$0xff] %v294
    %365 = vst [vmem:[#allocation2 + $0x98] sm:$0xff] %v335
    %366 = vst [vmem:[#allocation2 + $0xa0] sm:$0xff] %v215
    %367 = vst [vmem:[#allocation2 + $0xa8] sm:$0xff] %v256
    %368 = vst [vmem:[#allocation2 + $0xb0] sm:$0xff] %v297
    %369 = vst [vmem:[#allocation2 + $0xb8] sm:$0xff] %v338
    %370 = vst [vmem:[#allocation2 + $0xc0] sm:$0xff] %v218
    %371 = vst [vmem:[#allocation2 + $0xc8] sm:$0xff] %v259
    %372 = vst [vmem:[#allocation2 + $0xd0] sm:$0xff] %v300
    %373 = vst [vmem:[#allocation2 + $0xd8] sm:$0xff] %v341
    %374 = vst [vmem:[#allocation2 + $0xe0] sm:$0xff] %v221
    %375 = vst [vmem:[#allocation2 + $0xe8] sm:$0xff] %v262
    %376 = vst [vmem:[#allocation2 + $0xf0] sm:$0xff] %v303
    %377 = vst [vmem:[#allocation2 + $0xf8] sm:$0xff] %v344
    %v378 = vld [vmem:[#allocation8] sm:$0xff]
    %v379 = vld [vmem:[#allocation8 + $0x8] sm:$0xff]
    %v380 = vld [vmem:[#allocation8 + $0x10] sm:$0xff]
    %v381 = vld [vmem:[#allocation8 + $0x18] sm:$0xff]
    %v382 = vld [vmem:[#allocation8 + $0x20] sm:$0xff]
    %v383 = vld [vmem:[#allocation8 + $0x28] sm:$0xff]
    %v384 = vld [vmem:[#allocation8 + $0x30] sm:$0xff]
    %v385 = vld [vmem:[#allocation8 + $0x38] sm:$0xff]
    %v386 = vld [vmem:[#allocation8 + $0x40] sm:$0xff]
    %v387 = vld [vmem:[#allocation8 + $0x48] sm:$0xff]
    %v388 = vld [vmem:[#allocation8 + $0x50] sm:$0xff]
    %v389 = vld [vmem:[#allocation8 + $0x58] sm:$0xff]
    %v390 = vld [vmem:[#allocation8 + $0x60] sm:$0xff]
    %v391 = vld [vmem:[#allocation8 + $0x68] sm:$0xff]
    %v392 = vld [vmem:[#allocation8 + $0x70] sm:$0xff]
    %v393 = vld [vmem:[#allocation8 + $0x78] sm:$0xff]
    %v394 = vld [vmem:[#allocation8 + $0x80] sm:$0xff]
    %v395 = vld [vmem:[#allocation8 + $0x88] sm:$0xff]
    %v396 = vld [vmem:[#allocation8 + $0x90] sm:$0xff]
    %v397 = vld [vmem:[#allocation8 + $0x98] sm:$0xff]
    %v398 = vld [vmem:[#allocation8 + $0xa0] sm:$0xff]
    %v399 = vld [vmem:[#allocation8 + $0xa8] sm:$0xff]
    %v400 = vld [vmem:[#allocation8 + $0xb0] sm:$0xff]
    %v401 = vld [vmem:[#allocation8 + $0xb8] sm:$0xff]
    %v402 = vld [vmem:[#allocation8 + $0xc0] sm:$0xff]
    %v403 = vld [vmem:[#allocation8 + $0xc8] sm:$0xff]
    %v404 = vld [vmem:[#allocation8 + $0xd0] sm:$0xff]
    %v405 = vld [vmem:[#allocation8 + $0xd8] sm:$0xff]
    %v406 = vld [vmem:[#allocation8 + $0xe0] sm:$0xff]
    %v407 = vld [vmem:[#allocation8 + $0xe8] sm:$0xff]
    %v408 = vld [vmem:[#allocation8 + $0xf0] sm:$0xff]
    %v409 = vld [vmem:[#allocation8 + $0xf8] sm:$0xff]
    %v410 = vld [vmem:[#allocation8 + $0x100] sm:$0xff]
    %v411 = vld [vmem:[#allocation8 + $0x108] sm:$0xff]
    %v412 = vld [vmem:[#allocation8 + $0x110] sm:$0xff]
    %v413 = vld [vmem:[#allocation8 + $0x118] sm:$0xff]
    %v414 = vld [vmem:[#allocation8 + $0x120] sm:$0xff]
    %v415 = vld [vmem:[#allocation8 + $0x128] sm:$0xff]
    %v416 = vld [vmem:[#allocation8 + $0x130] sm:$0xff]
    %v417 = vld [vmem:[#allocation8 + $0x138] sm:$0xff]
    %v418 = vld [vmem:[#allocation8 + $0x140] sm:$0xff]
    %v419 = vld [vmem:[#allocation8 + $0x148] sm:$0xff]
    %v420 = vld [vmem:[#allocation8 + $0x150] sm:$0xff]
    %v421 = vld [vmem:[#allocation8 + $0x158] sm:$0xff]
    %v422 = vld [vmem:[#allocation8 + $0x160] sm:$0xff]
    %v423 = vld [vmem:[#allocation8 + $0x168] sm:$0xff]
    %v424 = vld [vmem:[#allocation8 + $0x170] sm:$0xff]
    %v425 = vld [vmem:[#allocation8 + $0x178] sm:$0xff]
    %v426 = vld [vmem:[#allocation8 + $0x180] sm:$0xff]
    %v427 = vld [vmem:[#allocation8 + $0x188] sm:$0xff]
    %v428 = vld [vmem:[#allocation8 + $0x190] sm:$0xff]
    %v429 = vld [vmem:[#allocation8 + $0x198] sm:$0xff]
    %v430 = vld [vmem:[#allocation8 + $0x1a0] sm:$0xff]
    %v431 = vld [vmem:[#allocation8 + $0x1a8] sm:$0xff]
    %v432 = vld [vmem:[#allocation8 + $0x1b0] sm:$0xff]
    %v433 = vld [vmem:[#allocation8 + $0x1b8] sm:$0xff]
    %v434 = vld [vmem:[#allocation8 + $0x1c0] sm:$0xff]
    %v435 = vld [vmem:[#allocation8 + $0x1c8] sm:$0xff]
    %v436 = vld [vmem:[#allocation8 + $0x1d0] sm:$0xff]
    %v437 = vld [vmem:[#allocation8 + $0x1d8] sm:$0xff]
    %v438 = vld [vmem:[#allocation8 + $0x1e0] sm:$0xff]
    %v439 = vld [vmem:[#allocation8 + $0x1e8] sm:$0xff]
    %v440 = vld [vmem:[#allocation8 + $0x1f0] sm:$0xff]
    %v441 = vld [vmem:[#allocation8 + $0x1f8] sm:$0xff]
    %v442 = vld [vmem:[#allocation11] sm:$0xff]
    %v443 = vld [vmem:[#allocation11 + $0x8] sm:$0xff]
    %v444 = vld [vmem:[#allocation11 + $0x10] sm:$0xff]
    %v445 = vld [vmem:[#allocation11 + $0x18] sm:$0xff]
    %v446 = vld [vmem:[#allocation11 + $0x20] sm:$0xff]
    %v447 = vld [vmem:[#allocation11 + $0x28] sm:$0xff]
    %v448 = vld [vmem:[#allocation11 + $0x30] sm:$0xff]
    %v449 = vld [vmem:[#allocation11 + $0x38] sm:$0xff]
    %v450 = vld [vmem:[#allocation11 + $0x40] sm:$0xff]
    %v451 = vld [vmem:[#allocation11 + $0x48] sm:$0xff]
    %v452 = vld [vmem:[#allocation11 + $0x50] sm:$0xff]
    %v453 = vld [vmem:[#allocation11 + $0x58] sm:$0xff]
    %v454 = vld [vmem:[#allocation11 + $0x60] sm:$0xff]
    %v455 = vld [vmem:[#allocation11 + $0x68] sm:$0xff]
    %v456 = vld [vmem:[#allocation11 + $0x70] sm:$0xff]
    %v457 = vld [vmem:[#allocation11 + $0x78] sm:$0xff]
    %v458 = vld [vmem:[#allocation11 + $0x80] sm:$0xff]
    %v459 = vld [vmem:[#allocation11 + $0x88] sm:$0xff]
    %v460 = vld [vmem:[#allocation11 + $0x90] sm:$0xff]
    %v461 = vld [vmem:[#allocation11 + $0x98] sm:$0xff]
    %v462 = vld [vmem:[#allocation11 + $0xa0] sm:$0xff]
    %v463 = vld [vmem:[#allocation11 + $0xa8] sm:$0xff]
    %v464 = vld [vmem:[#allocation11 + $0xb0] sm:$0xff]
    %v465 = vld [vmem:[#allocation11 + $0xb8] sm:$0xff]
    %v466 = vld [vmem:[#allocation11 + $0xc0] sm:$0xff]
    %v467 = vld [vmem:[#allocation11 + $0xc8] sm:$0xff]
    %v468 = vld [vmem:[#allocation11 + $0xd0] sm:$0xff]
    %v469 = vld [vmem:[#allocation11 + $0xd8] sm:$0xff]
    %v470 = vld [vmem:[#allocation11 + $0xe0] sm:$0xff]
    %v471 = vld [vmem:[#allocation11 + $0xe8] sm:$0xff]
    %v472 = vld [vmem:[#allocation11 + $0xf0] sm:$0xff]
    %v473 = vld [vmem:[#allocation11 + $0xf8] sm:$0xff]
    %v474 = vld [vmem:[#allocation11 + $0x100] sm:$0xff]
    %v475 = vld [vmem:[#allocation11 + $0x108] sm:$0xff]
    %v476 = vld [vmem:[#allocation11 + $0x110] sm:$0xff]
    %v477 = vld [vmem:[#allocation11 + $0x118] sm:$0xff]
    %v478 = vld [vmem:[#allocation11 + $0x120] sm:$0xff]
    %v479 = vld [vmem:[#allocation11 + $0x128] sm:$0xff]
    %v480 = vld [vmem:[#allocation11 + $0x130] sm:$0xff]
    %v481 = vld [vmem:[#allocation11 + $0x138] sm:$0xff]
    %v482 = vld [vmem:[#allocation11 + $0x140] sm:$0xff]
    %v483 = vld [vmem:[#allocation11 + $0x148] sm:$0xff]
    %v484 = vld [vmem:[#allocation11 + $0x150] sm:$0xff]
    %v485 = vld [vmem:[#allocation11 + $0x158] sm:$0xff]
    %v486 = vld [vmem:[#allocation11 + $0x160] sm:$0xff]
    %v487 = vld [vmem:[#allocation11 + $0x168] sm:$0xff]
    %v488 = vld [vmem:[#allocation11 + $0x170] sm:$0xff]
    %v489 = vld [vmem:[#allocation11 + $0x178] sm:$0xff]
    %v490 = vld [vmem:[#allocation11 + $0x180] sm:$0xff]
    %v491 = vld [vmem:[#allocation11 + $0x188] sm:$0xff]
    %v492 = vld [vmem:[#allocation11 + $0x190] sm:$0xff]
    %v493 = vld [vmem:[#allocation11 + $0x198] sm:$0xff]
    %v494 = vld [vmem:[#allocation11 + $0x1a0] sm:$0xff]
    %v495 = vld [vmem:[#allocation11 + $0x1a8] sm:$0xff]
    %v496 = vld [vmem:[#allocation11 + $0x1b0] sm:$0xff]
    %v497 = vld [vmem:[#allocation11 + $0x1b8] sm:$0xff]
    %v498 = vld [vmem:[#allocation11 + $0x1c0] sm:$0xff]
    %v499 = vld [vmem:[#allocation11 + $0x1c8] sm:$0xff]
    %v500 = vld [vmem:[#allocation11 + $0x1d0] sm:$0xff]
    %v501 = vld [vmem:[#allocation11 + $0x1d8] sm:$0xff]
    %v502 = vld [vmem:[#allocation11 + $0x1e0] sm:$0xff]
    %v503 = vld [vmem:[#allocation11 + $0x1e8] sm:$0xff]
    %v504 = vld [vmem:[#allocation11 + $0x1f0] sm:$0xff]
    %v505 = vld [vmem:[#allocation11 + $0x1f8] sm:$0xff]
    %v506 = vld [vmem:[#allocation11 + $0x200] sm:$0xff]
    %v507 = vld [vmem:[#allocation11 + $0x208] sm:$0xff]
    %v508 = vld [vmem:[#allocation11 + $0x210] sm:$0xff]
    %v509 = vld [vmem:[#allocation11 + $0x218] sm:$0xff]
    %v510 = vld [vmem:[#allocation11 + $0x220] sm:$0xff]
    %v511 = vld [vmem:[#allocation11 + $0x228] sm:$0xff]
    %v512 = vld [vmem:[#allocation11 + $0x230] sm:$0xff]
    %v513 = vld [vmem:[#allocation11 + $0x238] sm:$0xff]
    %v514 = vld [vmem:[#allocation11 + $0x240] sm:$0xff]
    %v515 = vld [vmem:[#allocation11 + $0x248] sm:$0xff]
    %v516 = vld [vmem:[#allocation11 + $0x250] sm:$0xff]
    %v517 = vld [vmem:[#allocation11 + $0x258] sm:$0xff]
    %v518 = vld [vmem:[#allocation11 + $0x260] sm:$0xff]
    %v519 = vld [vmem:[#allocation11 + $0x268] sm:$0xff]
    %v520 = vld [vmem:[#allocation11 + $0x270] sm:$0xff]
    %v521 = vld [vmem:[#allocation11 + $0x278] sm:$0xff]
    %v522 = vld [vmem:[#allocation11 + $0x280] sm:$0xff]
    %v523 = vld [vmem:[#allocation11 + $0x288] sm:$0xff]
    %v524 = vld [vmem:[#allocation11 + $0x290] sm:$0xff]
    %v525 = vld [vmem:[#allocation11 + $0x298] sm:$0xff]
    %v526 = vld [vmem:[#allocation11 + $0x2a0] sm:$0xff]
    %v527 = vld [vmem:[#allocation11 + $0x2a8] sm:$0xff]
    %v528 = vld [vmem:[#allocation11 + $0x2b0] sm:$0xff]
    %v529 = vld [vmem:[#allocation11 + $0x2b8] sm:$0xff]
    %v530 = vld [vmem:[#allocation11 + $0x2c0] sm:$0xff]
    %v531 = vld [vmem:[#allocation11 + $0x2c8] sm:$0xff]
    %v532 = vld [vmem:[#allocation11 + $0x2d0] sm:$0xff]
    %v533 = vld [vmem:[#allocation11 + $0x2d8] sm:$0xff]
    %v534 = vld [vmem:[#allocation11 + $0x2e0] sm:$0xff]
    %v535 = vld [vmem:[#allocation11 + $0x2e8] sm:$0xff]
    %v536 = vld [vmem:[#allocation11 + $0x2f0] sm:$0xff]
    %v537 = vld [vmem:[#allocation11 + $0x2f8] sm:$0xff]
    %v538 = vld [vmem:[#allocation11 + $0x300] sm:$0xff]
    %v539 = vld [vmem:[#allocation11 + $0x308] sm:$0xff]
    %v540 = vld [vmem:[#allocation11 + $0x310] sm:$0xff]
    %v541 = vld [vmem:[#allocation11 + $0x318] sm:$0xff]
    %v542 = vld [vmem:[#allocation11 + $0x320] sm:$0xff]
    %v543 = vld [vmem:[#allocation11 + $0x328] sm:$0xff]
    %v544 = vld [vmem:[#allocation11 + $0x330] sm:$0xff]
    %v545 = vld [vmem:[#allocation11 + $0x338] sm:$0xff]
    %v546 = vld [vmem:[#allocation11 + $0x340] sm:$0xff]
    %v547 = vld [vmem:[#allocation11 + $0x348] sm:$0xff]
    %v548 = vld [vmem:[#allocation11 + $0x350] sm:$0xff]
    %v549 = vld [vmem:[#allocation11 + $0x358] sm:$0xff]
    %v550 = vld [vmem:[#allocation11 + $0x360] sm:$0xff]
    %v551 = vld [vmem:[#allocation11 + $0x368] sm:$0xff]
    %v552 = vld [vmem:[#allocation11 + $0x370] sm:$0xff]
    %v553 = vld [vmem:[#allocation11 + $0x378] sm:$0xff]
    %v554 = vld [vmem:[#allocation11 + $0x380] sm:$0xff]
    %v555 = vld [vmem:[#allocation11 + $0x388] sm:$0xff]
    %v556 = vld [vmem:[#allocation11 + $0x390] sm:$0xff]
    %v557 = vld [vmem:[#allocation11 + $0x398] sm:$0xff]
    %v558 = vld [vmem:[#allocation11 + $0x3a0] sm:$0xff]
    %v559 = vld [vmem:[#allocation11 + $0x3a8] sm:$0xff]
    %v560 = vld [vmem:[#allocation11 + $0x3b0] sm:$0xff]
    %v561 = vld [vmem:[#allocation11 + $0x3b8] sm:$0xff]
    %v562 = vld [vmem:[#allocation11 + $0x3c0] sm:$0xff]
    %v563 = vld [vmem:[#allocation11 + $0x3c8] sm:$0xff]
    %v564 = vld [vmem:[#allocation11 + $0x3d0] sm:$0xff]
    %v565 = vld [vmem:[#allocation11 + $0x3d8] sm:$0xff]
    %v566 = vld [vmem:[#allocation11 + $0x3e0] sm:$0xff]
    %v567 = vld [vmem:[#allocation11 + $0x3e8] sm:$0xff]
    %v568 = vld [vmem:[#allocation11 + $0x3f0] sm:$0xff]
    %v569 = vld [vmem:[#allocation11 + $0x3f8] sm:$0xff]
    %v570 = vld [vmem:[%s5] sm:$0xf]
    %v571 = vld [vmem:[#allocation2] sm:$0xff]
    %v572 = vld [vmem:[#allocation2 + $0x8] sm:$0xff]
    %v573 = vld [vmem:[#allocation2 + $0x10] sm:$0xff]
    %v574 = vld [vmem:[#allocation2 + $0x18] sm:$0xff]
    %575 = vmatpush.msra.mxu0 %v438
    %576 = vmatpush.msra.mxu0 %v434
    %577 = vmatpush.msra.mxu0 %v430
    %578 = vmatpush.msra.mxu0 %v426
    %579 = vmatpush.msra.mxu0 %v422
    %580 = vmatpush.msra.mxu0 %v418
    %581 = vmatpush.msra.mxu0 %v414
    %582 = vmatpush.msra.mxu0 %v410
    %583 = vmatpush.msra.mxu0 %v406
    %584 = vmatpush.msra.mxu0 %v402
    %585 = vmatpush.msra.mxu0 %v398
    %586 = vmatpush.msra.mxu0 %v394
    %587 = vmatpush.msra.mxu0 %v390
    %588 = vmatpush.msra.mxu0 %v386
    %589 = vmatpush.msra.mxu0 %v382
    %590 = vmatpush.msra.mxu0 %v378
    %591 = vmatmul.f32.gmra.mxu0 0.0
    %v592 = vpop.f32.mrf.mxu0
    %v593 = vadd.f32 0.0, %v592
    %594 = vdwg.mxu0
    %595 = vmatpush.msra.mxu0 %v439
    %596 = vmatpush.msra.mxu0 %v435
    %597 = vmatpush.msra.mxu0 %v431
    %598 = vmatpush.msra.mxu0 %v427
    %599 = vmatpush.msra.mxu0 %v423
    %600 = vmatpush.msra.mxu0 %v419
    %601 = vmatpush.msra.mxu0 %v415
    %602 = vmatpush.msra.mxu0 %v411
    %603 = vmatpush.msra.mxu0 %v407
    %604 = vmatpush.msra.mxu0 %v403
    %605 = vmatpush.msra.mxu0 %v399
    %606 = vmatpush.msra.mxu0 %v395
    %607 = vmatpush.msra.mxu0 %v391
    %608 = vmatpush.msra.mxu0 %v387
    %609 = vmatpush.msra.mxu0 %v383
    %610 = vmatpush.msra.mxu0 %v379
    %611 = vmatmul.f32.gmra.mxu0 0.0
    %v612 = vpop.f32.mrf.mxu0
    %v613 = vadd.f32 0.0, %v612
    %614 = vdwg.mxu0
    %615 = vmatpush.msra.mxu0 %v440
    %616 = vmatpush.msra.mxu0 %v436
    %617 = vmatpush.msra.mxu0 %v432
    %618 = vmatpush.msra.mxu0 %v428
    %619 = vmatpush.msra.mxu0 %v424
    %620 = vmatpush.msra.mxu0 %v420
    %621 = vmatpush.msra.mxu0 %v416
    %622 = vmatpush.msra.mxu0 %v412
    %623 = vmatpush.msra.mxu0 %v408
    %624 = vmatpush.msra.mxu0 %v404
    %625 = vmatpush.msra.mxu0 %v400
    %626 = vmatpush.msra.mxu0 %v396
    %627 = vmatpush.msra.mxu0 %v392
    %628 = vmatpush.msra.mxu0 %v388
    %629 = vmatpush.msra.mxu0 %v384
    %630 = vmatpush.msra.mxu0 %v380
    %631 = vmatmul.f32.gmra.mxu0 0.0
    %v632 = vpop.f32.mrf.mxu0
    %v633 = vadd.f32 0.0, %v632
    %634 = vdwg.mxu0
    %635 = vmatpush.msra.mxu0 %v441
    %636 = vmatpush.msra.mxu0 %v437
    %637 = vmatpush.msra.mxu0 %v433
    %638 = vmatpush.msra.mxu0 %v429
    %639 = vmatpush.msra.mxu0 %v425
    %640 = vmatpush.msra.mxu0 %v421
    %641 = vmatpush.msra.mxu0 %v417
    %642 = vmatpush.msra.mxu0 %v413
    %643 = vmatpush.msra.mxu0 %v409
    %644 = vmatpush.msra.mxu0 %v405
    %645 = vmatpush.msra.mxu0 %v401
    %646 = vmatpush.msra.mxu0 %v397
    %647 = vmatpush.msra.mxu0 %v393
    %648 = vmatpush.msra.mxu0 %v389
    %649 = vmatpush.msra.mxu0 %v385
    %650 = vmatpush.msra.mxu0 %v381
    %651 = vmatmul.f32.gmra.mxu0 0.0
    %v652 = vpop.f32.mrf.mxu0
    %v653 = vadd.f32 0.0, %v652
    %654 = vdwg.mxu0
    %v655 = vadd.f32 %v571, %v593
    %v656 = vadd.f32 %v572, %v613
    %v657 = vadd.f32 %v573, %v633
    %v658 = vadd.f32 %v574, %v653
    %v659 = vxor.u32 %v655, 2147483648
    %v660 = vxor.u32 %v656, 2147483648
    %v661 = vxor.u32 %v657, 2147483648
    %v662 = vmul.f32 %v659, 1.442695
    %v663 = vpow.pop %v662
    %v664 = vmul.f32 %v660, 1.442695
    %v665 = vpow.pop %v664
    %v666 = vmul.f32 %v661, 1.442695
    %v667 = vpow.pop %v666
    %v668 = vadd.f32 %v663, 1.0
    %v669 = vadd.f32 %v665, 1.0
    %v670 = vadd.f32 %v667, 1.0
    %v671 = vrcp.pop %v668
    %v672 = vmul.f32 %v668, %v671
    %v673 = vsub.f32 1.0, %v672
    %v674 = vmul.f32 %v671, %v673
    %v675 = vadd.f32 %v671, %v674
    %vm676 = vweird.f32 %v668
    %vm677 = vweird.f32 %v671
    %vm678 = vmor %vm676, %vm677
    %v679 = vsel %vm678, %v671, %v675
    %v680 = vand.u32 2147483647, %v668
    %vm681 = vcmp.eq.f32.partialorder %v680, 8.507059e+37
    %v682 = vand.u32 %v668, 2147483648
    %v683 = vor.u32 1.1754944e-38, %v682
    %v684 = vsel %vm681, %v683, %v679
    %v685 = vmul.f32 1.0, %v684
    %v686 = vrcp.pop %v669
    %v687 = vmul.f32 %v669, %v686
    %v688 = vsub.f32 1.0, %v687
    %v689 = vmul.f32 %v686, %v688
    %v690 = vadd.f32 %v686, %v689
    %vm691 = vweird.f32 %v669
    %vm692 = vweird.f32 %v686
    %vm693 = vmor %vm691, %vm692
    %v694 = vsel %vm693, %v686, %v690
    %v695 = vand.u32 2147483647, %v669
    %vm696 = vcmp.eq.f32.partialorder %v695, 8.507059e+37
    %v697 = vand.u32 %v669, 2147483648
    %v698 = vor.u32 1.1754944e-38, %v697
    %v699 = vsel %vm696, %v698, %v694
    %v700 = vmul.f32 1.0, %v699
    %v701 = vrcp.pop %v670
    %v702 = vmul.f32 %v670, %v701
    %v703 = vsub.f32 1.0, %v702
    %v704 = vmul.f32 %v701, %v703
    %v705 = vadd.f32 %v701, %v704
    %vm706 = vweird.f32 %v670
    %vm707 = vweird.f32 %v701
    %vm708 = vmor %vm706, %vm707
    %v709 = vsel %vm708, %v701, %v705
    %v710 = vand.u32 2147483647, %v670
    %vm711 = vcmp.eq.f32.partialorder %v710, 8.507059e+37
    %v712 = vand.u32 %v670, 2147483648
    %v713 = vor.u32 1.1754944e-38, %v712
    %v714 = vsel %vm711, %v713, %v709
    %v715 = vmul.f32 1.0, %v714
    %v716 = vtanh.pop %v658
    %v717 = vmul.f32 %v700, 0.0
    %v718 = vmul.f32 %v685, %v716
    %v719 = vadd.f32 %v717, %v718
    %v720 = vtanh.pop %v719
    %v721 = vmul.f32 %v715, %v720
    %v723 = vperm.slane %v570, 0
    %v724 = vperm.slane %v570, 1
    %v725 = vperm.slane %v570, 2
    %v726 = vperm.slane %v570, 3
    %731 = vmatpush.msra.mxu0 %v502
    %732 = vmatpush.msra.mxu0 %v498
    %733 = vmatpush.msra.mxu0 %v494
    %734 = vmatpush.msra.mxu0 %v490
    %735 = vmatpush.msra.mxu0 %v486
    %736 = vmatpush.msra.mxu0 %v482
    %737 = vmatpush.msra.mxu0 %v478
    %738 = vmatpush.msra.mxu0 %v474
    %739 = vmatpush.msra.mxu0 %v470
    %740 = vmatpush.msra.mxu0 %v466
    %741 = vmatpush.msra.mxu0 %v462
    %742 = vmatpush.msra.mxu0 %v458
    %743 = vmatpush.msra.mxu0 %v454
    %744 = vmatpush.msra.mxu0 %v450
    %745 = vmatpush.msra.mxu0 %v446
    %746 = vmatpush.msra.mxu0 %v442
    %747 = vmatmul.f32.gmra.mxu0 %v721
    %v748 = vpop.f32.mrf.mxu0
    %v749 = vadd.f32 %v723, %v748
    %750 = vdwg.mxu0
    %751 = vmatpush.msra.mxu0 %v566
    %752 = vmatpush.msra.mxu0 %v562
    %753 = vmatpush.msra.mxu0 %v558
    %754 = vmatpush.msra.mxu0 %v554
    %755 = vmatpush.msra.mxu0 %v550
    %756 = vmatpush.msra.mxu0 %v546
    %757 = vmatpush.msra.mxu0 %v542
    %758 = vmatpush.msra.mxu0 %v538
    %759 = vmatpush.msra.mxu0 %v534
    %760 = vmatpush.msra.mxu0 %v530
    %761 = vmatpush.msra.mxu0 %v526
    %762 = vmatpush.msra.mxu0 %v522
    %763 = vmatpush.msra.mxu0 %v518
    %764 = vmatpush.msra.mxu0 %v514
    %765 = vmatpush.msra.mxu0 %v510
    %766 = vmatpush.msra.mxu0 %v506
    %767 = vmatmul.f32.gmra.mxu0 0.0
    %v768 = vpop.f32.mrf.mxu0
    %v769 = vadd.f32 %v749, %v768
    %770 = vdwg.mxu0
    %771 = vmatpush.msra.mxu0 %v503
    %772 = vmatpush.msra.mxu0 %v499
    %773 = vmatpush.msra.mxu0 %v495
    %774 = vmatpush.msra.mxu0 %v491
    %775 = vmatpush.msra.mxu0 %v487
    %776 = vmatpush.msra.mxu0 %v483
    %777 = vmatpush.msra.mxu0 %v479
    %778 = vmatpush.msra.mxu0 %v475
    %779 = vmatpush.msra.mxu0 %v471
    %780 = vmatpush.msra.mxu0 %v467
    %781 = vmatpush.msra.mxu0 %v463
    %782 = vmatpush.msra.mxu0 %v459
    %783 = vmatpush.msra.mxu0 %v455
    %784 = vmatpush.msra.mxu0 %v451
    %785 = vmatpush.msra.mxu0 %v447
    %786 = vmatpush.msra.mxu0 %v443
    %787 = vmatmul.f32.gmra.mxu0 %v721
    %v788 = vpop.f32.mrf.mxu0
    %v789 = vadd.f32 %v724, %v788
    %790 = vdwg.mxu0
    %791 = vmatpush.msra.mxu0 %v567
    %792 = vmatpush.msra.mxu0 %v563
    %793 = vmatpush.msra.mxu0 %v559
    %794 = vmatpush.msra.mxu0 %v555
    %795 = vmatpush.msra.mxu0 %v551
    %796 = vmatpush.msra.mxu0 %v547
    %797 = vmatpush.msra.mxu0 %v543
    %798 = vmatpush.msra.mxu0 %v539
    %799 = vmatpush.msra.mxu0 %v535
    %800 = vmatpush.msra.mxu0 %v531
    %801 = vmatpush.msra.mxu0 %v527
    %802 = vmatpush.msra.mxu0 %v523
    %803 = vmatpush.msra.mxu0 %v519
    %804 = vmatpush.msra.mxu0 %v515
    %805 = vmatpush.msra.mxu0 %v511
    %806 = vmatpush.msra.mxu0 %v507
    %807 = vmatmul.f32.gmra.mxu0 0.0
    %v808 = vpop.f32.mrf.mxu0
    %v809 = vadd.f32 %v789, %v808
    %810 = vdwg.mxu0
    %811 = vmatpush.msra.mxu0 %v504
    %812 = vmatpush.msra.mxu0 %v500
    %813 = vmatpush.msra.mxu0 %v496
    %814 = vmatpush.msra.mxu0 %v492
    %815 = vmatpush.msra.mxu0 %v488
    %816 = vmatpush.msra.mxu0 %v484
    %817 = vmatpush.msra.mxu0 %v480
    %818 = vmatpush.msra.mxu0 %v476
    %819 = vmatpush.msra.mxu0 %v472
    %820 = vmatpush.msra.mxu0 %v468
    %821 = vmatpush.msra.mxu0 %v464
    %822 = vmatpush.msra.mxu0 %v460
    %823 = vmatpush.msra.mxu0 %v456
    %824 = vmatpush.msra.mxu0 %v452
    %825 = vmatpush.msra.mxu0 %v448
    %826 = vmatpush.msra.mxu0 %v444
    %827 = vmatmul.f32.gmra.mxu0 %v721
    %v828 = vpop.f32.mrf.mxu0
    %v829 = vadd.f32 %v725, %v828
    %830 = vdwg.mxu0
    %831 = vmatpush.msra.mxu0 %v568
    %832 = vmatpush.msra.mxu0 %v564
    %833 = vmatpush.msra.mxu0 %v560
    %834 = vmatpush.msra.mxu0 %v556
    %835 = vmatpush.msra.mxu0 %v552
    %836 = vmatpush.msra.mxu0 %v548
    %837 = vmatpush.msra.mxu0 %v544
    %838 = vmatpush.msra.mxu0 %v540
    %839 = vmatpush.msra.mxu0 %v536
    %840 = vmatpush.msra.mxu0 %v532
    %841 = vmatpush.msra.mxu0 %v528
    %842 = vmatpush.msra.mxu0 %v524
    %843 = vmatpush.msra.mxu0 %v520
    %844 = vmatpush.msra.mxu0 %v516
    %845 = vmatpush.msra.mxu0 %v512
    %846 = vmatpush.msra.mxu0 %v508
    %847 = vmatmul.f32.gmra.mxu0 0.0
    %v848 = vpop.f32.mrf.mxu0
    %v849 = vadd.f32 %v829, %v848
    %850 = vdwg.mxu0
    %851 = vmatpush.msra.mxu0 %v505
    %852 = vmatpush.msra.mxu0 %v501
    %853 = vmatpush.msra.mxu0 %v497
    %854 = vmatpush.msra.mxu0 %v493
    %855 = vmatpush.msra.mxu0 %v489
    %856 = vmatpush.msra.mxu0 %v485
    %857 = vmatpush.msra.mxu0 %v481
    %858 = vmatpush.msra.mxu0 %v477
    %859 = vmatpush.msra.mxu0 %v473
    %860 = vmatpush.msra.mxu0 %v469
    %861 = vmatpush.msra.mxu0 %v465
    %862 = vmatpush.msra.mxu0 %v461
    %863 = vmatpush.msra.mxu0 %v457
    %864 = vmatpush.msra.mxu0 %v453
    %865 = vmatpush.msra.mxu0 %v449
    %866 = vmatpush.msra.mxu0 %v445
    %867 = vmatmul.f32.gmra.mxu0 %v721
    %v868 = vpop.f32.mrf.mxu0
    %v869 = vadd.f32 %v726, %v868
    %870 = vdwg.mxu0
    %871 = vmatpush.msra.mxu0 %v569
    %872 = vmatpush.msra.mxu0 %v565
    %873 = vmatpush.msra.mxu0 %v561
    %874 = vmatpush.msra.mxu0 %v557
    %875 = vmatpush.msra.mxu0 %v553
    %876 = vmatpush.msra.mxu0 %v549
    %877 = vmatpush.msra.mxu0 %v545
    %878 = vmatpush.msra.mxu0 %v541
    %879 = vmatpush.msra.mxu0 %v537
    %880 = vmatpush.msra.mxu0 %v533
    %881 = vmatpush.msra.mxu0 %v529
    %882 = vmatpush.msra.mxu0 %v525
    %883 = vmatpush.msra.mxu0 %v521
    %884 = vmatpush.msra.mxu0 %v517
    %885 = vmatpush.msra.mxu0 %v513
    %886 = vmatpush.msra.mxu0 %v509
    %887 = vmatmul.f32.gmra.mxu0 0.0
    %v888 = vpop.f32.mrf.mxu0
    %v889 = vadd.f32 %v869, %v888
    %890 = vdwg.mxu0
    %v891 = vxor.u32 %v769, 2147483648
    %v892 = vxor.u32 %v809, 2147483648
    %v893 = vxor.u32 %v849, 2147483648
    %v894 = vmul.f32 %v891, 1.442695
    %v895 = vpow.pop %v894
    %v896 = vmul.f32 %v892, 1.442695
    %v897 = vpow.pop %v896
    %v898 = vmul.f32 %v893, 1.442695
    %v899 = vpow.pop %v898
    %v900 = vadd.f32 %v895, 1.0
    %v901 = vadd.f32 %v897, 1.0
    %v902 = vadd.f32 %v899, 1.0
    %v903 = vrcp.pop %v900
    %v904 = vmul.f32 %v900, %v903
    %v905 = vsub.f32 1.0, %v904
    %v906 = vmul.f32 %v903, %v905
    %v907 = vadd.f32 %v903, %v906
    %vm908 = vweird.f32 %v900
    %vm909 = vweird.f32 %v903
    %vm910 = vmor %vm908, %vm909
    %v911 = vsel %vm910, %v903, %v907
    %v912 = vand.u32 2147483647, %v900
    %vm913 = vcmp.eq.f32.partialorder %v912, 8.507059e+37
    %v914 = vand.u32 %v900, 2147483648
    %v915 = vor.u32 1.1754944e-38, %v914
    %v916 = vsel %vm913, %v915, %v911
    %v917 = vmul.f32 1.0, %v916
    %v918 = vrcp.pop %v901
    %v919 = vmul.f32 %v901, %v918
    %v920 = vsub.f32 1.0, %v919
    %v921 = vmul.f32 %v918, %v920
    %v922 = vadd.f32 %v918, %v921
    %vm923 = vweird.f32 %v901
    %vm924 = vweird.f32 %v918
    %vm925 = vmor %vm923, %vm924
    %v926 = vsel %vm925, %v918, %v922
    %v927 = vand.u32 2147483647, %v901
    %vm928 = vcmp.eq.f32.partialorder %v927, 8.507059e+37
    %v929 = vand.u32 %v901, 2147483648
    %v930 = vor.u32 1.1754944e-38, %v929
    %v931 = vsel %vm928, %v930, %v926
    %v932 = vmul.f32 1.0, %v931
    %v933 = vrcp.pop %v902
    %v934 = vmul.f32 %v902, %v933
    %v935 = vsub.f32 1.0, %v934
    %v936 = vmul.f32 %v933, %v935
    %v937 = vadd.f32 %v933, %v936
    %vm938 = vweird.f32 %v902
    %vm939 = vweird.f32 %v933
    %vm940 = vmor %vm938, %vm939
    %v941 = vsel %vm940, %v933, %v937
    %v942 = vand.u32 2147483647, %v902
    %vm943 = vcmp.eq.f32.partialorder %v942, 8.507059e+37
    %v944 = vand.u32 %v902, 2147483648
    %v945 = vor.u32 1.1754944e-38, %v944
    %v946 = vsel %vm943, %v945, %v941
    %v947 = vmul.f32 1.0, %v946
    %v948 = vtanh.pop %v889
    %v949 = vmul.f32 %v932, 0.0
    %v950 = vmul.f32 %v917, %v948
    %v951 = vadd.f32 %v949, %v950
    %v952 = vtanh.pop %v951
    %v953 = vmul.f32 %v947, %v952
    %s954 = scalar_lea.vmem [#allocation2], 32
    %v955 = vld [vmem:[%s954] sm:$0xff]
    %v956 = vld [vmem:[%s954 + $0x8] sm:$0xff]
    %v957 = vld [vmem:[%s954 + $0x10] sm:$0xff]
    %v958 = vld [vmem:[%s954 + $0x18] sm:$0xff]
    %959 = vmatpush.msra.mxu0 %v438
    %960 = vmatpush.msra.mxu0 %v434
    %961 = vmatpush.msra.mxu0 %v430
    %962 = vmatpush.msra.mxu0 %v426
    %963 = vmatpush.msra.mxu0 %v422
    %964 = vmatpush.msra.mxu0 %v418
    %965 = vmatpush.msra.mxu0 %v414
    %966 = vmatpush.msra.mxu0 %v410
    %967 = vmatpush.msra.mxu0 %v406
    %968 = vmatpush.msra.mxu0 %v402
    %969 = vmatpush.msra.mxu0 %v398
    %970 = vmatpush.msra.mxu0 %v394
    %971 = vmatpush.msra.mxu0 %v390
    %972 = vmatpush.msra.mxu0 %v386
    %973 = vmatpush.msra.mxu0 %v382
    %974 = vmatpush.msra.mxu0 %v378
    %975 = vmatmul.f32.gmra.mxu0 %v721
    %v976 = vpop.f32.mrf.mxu0
    %v977 = vadd.f32 0.0, %v976
    %978 = vdwg.mxu0
    %979 = vmatpush.msra.mxu0 %v439
    %980 = vmatpush.msra.mxu0 %v435
    %981 = vmatpush.msra.mxu0 %v431
    %982 = vmatpush.msra.mxu0 %v427
    %983 = vmatpush.msra.mxu0 %v423
    %984 = vmatpush.msra.mxu0 %v419
    %985 = vmatpush.msra.mxu0 %v415
    %986 = vmatpush.msra.mxu0 %v411
    %987 = vmatpush.msra.mxu0 %v407
    %988 = vmatpush.msra.mxu0 %v403
    %989 = vmatpush.msra.mxu0 %v399
    %990 = vmatpush.msra.mxu0 %v395
    %991 = vmatpush.msra.mxu0 %v391
    %992 = vmatpush.msra.mxu0 %v387
    %993 = vmatpush.msra.mxu0 %v383
    %994 = vmatpush.msra.mxu0 %v379
    %995 = vmatmul.f32.gmra.mxu0 %v721
    %v996 = vpop.f32.mrf.mxu0
    %v997 = vadd.f32 0.0, %v996
    %998 = vdwg.mxu0
    %999 = vmatpush.msra.mxu0 %v440
    %1000 = vmatpush.msra.mxu0 %v436
    %1001 = vmatpush.msra.mxu0 %v432
    %1002 = vmatpush.msra.mxu0 %v428
    %1003 = vmatpush.msra.mxu0 %v424
    %1004 = vmatpush.msra.mxu0 %v420
    %1005 = vmatpush.msra.mxu0 %v416
    %1006 = vmatpush.msra.mxu0 %v412
    %1007 = vmatpush.msra.mxu0 %v408
    %1008 = vmatpush.msra.mxu0 %v404
    %1009 = vmatpush.msra.mxu0 %v400
    %1010 = vmatpush.msra.mxu0 %v396
    %1011 = vmatpush.msra.mxu0 %v392
    %1012 = vmatpush.msra.mxu0 %v388
    %1013 = vmatpush.msra.mxu0 %v384
    %1014 = vmatpush.msra.mxu0 %v380
    %1015 = vmatmul.f32.gmra.mxu0 %v721
    %v1016 = vpop.f32.mrf.mxu0
    %v1017 = vadd.f32 0.0, %v1016
    %1018 = vdwg.mxu0
    %1019 = vmatpush.msra.mxu0 %v441
    %1020 = vmatpush.msra.mxu0 %v437
    %1021 = vmatpush.msra.mxu0 %v433
    %1022 = vmatpush.msra.mxu0 %v429
    %1023 = vmatpush.msra.mxu0 %v425
    %1024 = vmatpush.msra.mxu0 %v421
    %1025 = vmatpush.msra.mxu0 %v417
    %1026 = vmatpush.msra.mxu0 %v413
    %1027 = vmatpush.msra.mxu0 %v409
    %1028 = vmatpush.msra.mxu0 %v405
    %1029 = vmatpush.msra.mxu0 %v401
    %1030 = vmatpush.msra.mxu0 %v397
    %1031 = vmatpush.msra.mxu0 %v393
    %1032 = vmatpush.msra.mxu0 %v389
    %1033 = vmatpush.msra.mxu0 %v385
    %1034 = vmatpush.msra.mxu0 %v381
    %1035 = vmatmul.f32.gmra.mxu0 %v721
    %v1036 = vpop.f32.mrf.mxu0
    %v1037 = vadd.f32 0.0, %v1036
    %1038 = vdwg.mxu0
    %v1039 = vadd.f32 %v955, %v977
    %v1040 = vadd.f32 %v956, %v997
    %v1041 = vadd.f32 %v957, %v1017
    %v1042 = vadd.f32 %v958, %v1037
    %v1043 = vxor.u32 %v1039, 2147483648
    %v1044 = vxor.u32 %v1040, 2147483648
    %v1045 = vxor.u32 %v1041, 2147483648
    %v1046 = vmul.f32 %v1043, 1.442695
    %v1047 = vpow.pop %v1046
    %v1048 = vmul.f32 %v1044, 1.442695
    %v1049 = vpow.pop %v1048
    %v1050 = vmul.f32 %v1045, 1.442695
    %v1051 = vpow.pop %v1050
    %v1052 = vadd.f32 %v1047, 1.0
    %v1053 = vadd.f32 %v1049, 1.0
    %v1054 = vadd.f32 %v1051, 1.0
    %v1055 = vrcp.pop %v1052
    %v1056 = vmul.f32 %v1052, %v1055
    %v1057 = vsub.f32 1.0, %v1056
    %v1058 = vmul.f32 %v1055, %v1057
    %v1059 = vadd.f32 %v1055, %v1058
    %vm1060 = vweird.f32 %v1052
    %vm1061 = vweird.f32 %v1055
    %vm1062 = vmor %vm1060, %vm1061
    %v1063 = vsel %vm1062, %v1055, %v1059
    %v1064 = vand.u32 2147483647, %v1052
    %vm1065 = vcmp.eq.f32.partialorder %v1064, 8.507059e+37
    %v1066 = vand.u32 %v1052, 2147483648
    %v1067 = vor.u32 1.1754944e-38, %v1066
    %v1068 = vsel %vm1065, %v1067, %v1063
    %v1069 = vmul.f32 1.0, %v1068
    %v1070 = vrcp.pop %v1053
    %v1071 = vmul.f32 %v1053, %v1070
    %v1072 = vsub.f32 1.0, %v1071
    %v1073 = vmul.f32 %v1070, %v1072
    %v1074 = vadd.f32 %v1070, %v1073
    %vm1075 = vweird.f32 %v1053
    %vm1076 = vweird.f32 %v1070
    %vm1077 = vmor %vm1075, %vm1076
    %v1078 = vsel %vm1077, %v1070, %v1074
    %v1079 = vand.u32 2147483647, %v1053
    %vm1080 = vcmp.eq.f32.partialorder %v1079, 8.507059e+37
    %v1081 = vand.u32 %v1053, 2147483648
    %v1082 = vor.u32 1.1754944e-38, %v1081
    %v1083 = vsel %vm1080, %v1082, %v1078
    %v1084 = vmul.f32 1.0, %v1083
    %v1085 = vrcp.pop %v1054
    %v1086 = vmul.f32 %v1054, %v1085
    %v1087 = vsub.f32 1.0, %v1086
    %v1088 = vmul.f32 %v1085, %v1087
    %v1089 = vadd.f32 %v1085, %v1088
    %vm1090 = vweird.f32 %v1054
    %vm1091 = vweird.f32 %v1085
    %vm1092 = vmor %vm1090, %vm1091
    %v1093 = vsel %vm1092, %v1085, %v1089
    %v1094 = vand.u32 2147483647, %v1054
    %vm1095 = vcmp.eq.f32.partialorder %v1094, 8.507059e+37
    %v1096 = vand.u32 %v1054, 2147483648
    %v1097 = vor.u32 1.1754944e-38, %v1096
    %v1098 = vsel %vm1095, %v1097, %v1093
    %v1099 = vmul.f32 1.0, %v1098
    %v1100 = vtanh.pop %v1042
    %v1101 = vmul.f32 %v1084, %v719
    %v1102 = vmul.f32 %v1069, %v1100
    %v1103 = vadd.f32 %v1101, %v1102
    %v1104 = vtanh.pop %v1103
    %v1105 = vmul.f32 %v1099, %v1104
    %1106 = vmatpush.msra.mxu0 %v502
    %1107 = vmatpush.msra.mxu0 %v498
    %1108 = vmatpush.msra.mxu0 %v494
    %1109 = vmatpush.msra.mxu0 %v490
    %1110 = vmatpush.msra.mxu0 %v486
    %1111 = vmatpush.msra.mxu0 %v482
    %1112 = vmatpush.msra.mxu0 %v478
    %1113 = vmatpush.msra.mxu0 %v474
    %1114 = vmatpush.msra.mxu0 %v470
    %1115 = vmatpush.msra.mxu0 %v466
    %1116 = vmatpush.msra.mxu0 %v462
    %1117 = vmatpush.msra.mxu0 %v458
    %1118 = vmatpush.msra.mxu0 %v454
    %1119 = vmatpush.msra.mxu0 %v450
    %1120 = vmatpush.msra.mxu0 %v446
    %1121 = vmatpush.msra.mxu0 %v442
    %1122 = vmatmul.f32.gmra.mxu0 %v1105
    %v1123 = vpop.f32.mrf.mxu0
    %v1124 = vadd.f32 %v723, %v1123
    %1125 = vdwg.mxu0
    %1126 = vmatpush.msra.mxu0 %v566
    %1127 = vmatpush.msra.mxu0 %v562
    %1128 = vmatpush.msra.mxu0 %v558
    %1129 = vmatpush.msra.mxu0 %v554
    %1130 = vmatpush.msra.mxu0 %v550
    %1131 = vmatpush.msra.mxu0 %v546
    %1132 = vmatpush.msra.mxu0 %v542
    %1133 = vmatpush.msra.mxu0 %v538
    %1134 = vmatpush.msra.mxu0 %v534
    %1135 = vmatpush.msra.mxu0 %v530
    %1136 = vmatpush.msra.mxu0 %v526
    %1137 = vmatpush.msra.mxu0 %v522
    %1138 = vmatpush.msra.mxu0 %v518
    %1139 = vmatpush.msra.mxu0 %v514
    %1140 = vmatpush.msra.mxu0 %v510
    %1141 = vmatpush.msra.mxu0 %v506
    %1142 = vmatmul.f32.gmra.mxu0 %v953
    %v1143 = vpop.f32.mrf.mxu0
    %v1144 = vadd.f32 %v1124, %v1143
    %1145 = vdwg.mxu0
    %1146 = vmatpush.msra.mxu0 %v503
    %1147 = vmatpush.msra.mxu0 %v499
    %1148 = vmatpush.msra.mxu0 %v495
    %1149 = vmatpush.msra.mxu0 %v491
    %1150 = vmatpush.msra.mxu0 %v487
    %1151 = vmatpush.msra.mxu0 %v483
    %1152 = vmatpush.msra.mxu0 %v479
    %1153 = vmatpush.msra.mxu0 %v475
    %1154 = vmatpush.msra.mxu0 %v471
    %1155 = vmatpush.msra.mxu0 %v467
    %1156 = vmatpush.msra.mxu0 %v463
    %1157 = vmatpush.msra.mxu0 %v459
    %1158 = vmatpush.msra.mxu0 %v455
    %1159 = vmatpush.msra.mxu0 %v451
    %1160 = vmatpush.msra.mxu0 %v447
    %1161 = vmatpush.msra.mxu0 %v443
    %1162 = vmatmul.f32.gmra.mxu0 %v1105
    %v1163 = vpop.f32.mrf.mxu0
    %v1164 = vadd.f32 %v724, %v1163
    %1165 = vdwg.mxu0
    %1166 = vmatpush.msra.mxu0 %v567
    %1167 = vmatpush.msra.mxu0 %v563
    %1168 = vmatpush.msra.mxu0 %v559
    %1169 = vmatpush.msra.mxu0 %v555
    %1170 = vmatpush.msra.mxu0 %v551
    %1171 = vmatpush.msra.mxu0 %v547
    %1172 = vmatpush.msra.mxu0 %v543
    %1173 = vmatpush.msra.mxu0 %v539
    %1174 = vmatpush.msra.mxu0 %v535
    %1175 = vmatpush.msra.mxu0 %v531
    %1176 = vmatpush.msra.mxu0 %v527
    %1177 = vmatpush.msra.mxu0 %v523
    %1178 = vmatpush.msra.mxu0 %v519
    %1179 = vmatpush.msra.mxu0 %v515
    %1180 = vmatpush.msra.mxu0 %v511
    %1181 = vmatpush.msra.mxu0 %v507
    %1182 = vmatmul.f32.gmra.mxu0 %v953
    %v1183 = vpop.f32.mrf.mxu0
    %v1184 = vadd.f32 %v1164, %v1183
    %1185 = vdwg.mxu0
    %1186 = vmatpush.msra.mxu0 %v504
    %1187 = vmatpush.msra.mxu0 %v500
    %1188 = vmatpush.msra.mxu0 %v496
    %1189 = vmatpush.msra.mxu0 %v492
    %1190 = vmatpush.msra.mxu0 %v488
    %1191 = vmatpush.msra.mxu0 %v484
    %1192 = vmatpush.msra.mxu0 %v480
    %1193 = vmatpush.msra.mxu0 %v476
    %1194 = vmatpush.msra.mxu0 %v472
    %1195 = vmatpush.msra.mxu0 %v468
    %1196 = vmatpush.msra.mxu0 %v464
    %1197 = vmatpush.msra.mxu0 %v460
    %1198 = vmatpush.msra.mxu0 %v456
    %1199 = vmatpush.msra.mxu0 %v452
    %1200 = vmatpush.msra.mxu0 %v448
    %1201 = vmatpush.msra.mxu0 %v444
    %1202 = vmatmul.f32.gmra.mxu0 %v1105
    %v1203 = vpop.f32.mrf.mxu0
    %v1204 = vadd.f32 %v725, %v1203
    %1205 = vdwg.mxu0
    %1206 = vmatpush.msra.mxu0 %v568
    %1207 = vmatpush.msra.mxu0 %v564
    %1208 = vmatpush.msra.mxu0 %v560
    %1209 = vmatpush.msra.mxu0 %v556
    %1210 = vmatpush.msra.mxu0 %v552
    %1211 = vmatpush.msra.mxu0 %v548
    %1212 = vmatpush.msra.mxu0 %v544
    %1213 = vmatpush.msra.mxu0 %v540
    %1214 = vmatpush.msra.mxu0 %v536
    %1215 = vmatpush.msra.mxu0 %v532
    %1216 = vmatpush.msra.mxu0 %v528
    %1217 = vmatpush.msra.mxu0 %v524
    %1218 = vmatpush.msra.mxu0 %v520
    %1219 = vmatpush.msra.mxu0 %v516
    %1220 = vmatpush.msra.mxu0 %v512
    %1221 = vmatpush.msra.mxu0 %v508
    %1222 = vmatmul.f32.gmra.mxu0 %v953
    %v1223 = vpop.f32.mrf.mxu0
    %v1224 = vadd.f32 %v1204, %v1223
    %1225 = vdwg.mxu0
    %1226 = vmatpush.msra.mxu0 %v505
    %1227 = vmatpush.msra.mxu0 %v501
    %1228 = vmatpush.msra.mxu0 %v497
    %1229 = vmatpush.msra.mxu0 %v493
    %1230 = vmatpush.msra.mxu0 %v489
    %1231 = vmatpush.msra.mxu0 %v485
    %1232 = vmatpush.msra.mxu0 %v481
    %1233 = vmatpush.msra.mxu0 %v477
    %1234 = vmatpush.msra.mxu0 %v473
    %1235 = vmatpush.msra.mxu0 %v469
    %1236 = vmatpush.msra.mxu0 %v465
    %1237 = vmatpush.msra.mxu0 %v461
    %1238 = vmatpush.msra.mxu0 %v457
    %1239 = vmatpush.msra.mxu0 %v453
    %1240 = vmatpush.msra.mxu0 %v449
    %1241 = vmatpush.msra.mxu0 %v445
    %1242 = vmatmul.f32.gmra.mxu0 %v1105
    %v1243 = vpop.f32.mrf.mxu0
    %v1244 = vadd.f32 %v726, %v1243
    %1245 = vdwg.mxu0
    %1246 = vmatpush.msra.mxu0 %v569
    %1247 = vmatpush.msra.mxu0 %v565
    %1248 = vmatpush.msra.mxu0 %v561
    %1249 = vmatpush.msra.mxu0 %v557
    %1250 = vmatpush.msra.mxu0 %v553
    %1251 = vmatpush.msra.mxu0 %v549
    %1252 = vmatpush.msra.mxu0 %v545
    %1253 = vmatpush.msra.mxu0 %v541
    %1254 = vmatpush.msra.mxu0 %v537
    %1255 = vmatpush.msra.mxu0 %v533
    %1256 = vmatpush.msra.mxu0 %v529
    %1257 = vmatpush.msra.mxu0 %v525
    %1258 = vmatpush.msra.mxu0 %v521
    %1259 = vmatpush.msra.mxu0 %v517
    %1260 = vmatpush.msra.mxu0 %v513
    %1261 = vmatpush.msra.mxu0 %v509
    %1262 = vmatmul.f32.gmra.mxu0 %v953
    %v1263 = vpop.f32.mrf.mxu0
    %v1264 = vadd.f32 %v1244, %v1263
    %1265 = vdwg.mxu0
    %v1266 = vxor.u32 %v1144, 2147483648
    %v1267 = vxor.u32 %v1184, 2147483648
    %v1268 = vxor.u32 %v1224, 2147483648
    %v1269 = vmul.f32 %v1266, 1.442695
    %v1270 = vpow.pop %v1269
    %v1271 = vmul.f32 %v1267, 1.442695
    %v1272 = vpow.pop %v1271
    %v1273 = vmul.f32 %v1268, 1.442695
    %v1274 = vpow.pop %v1273
    %v1275 = vadd.f32 %v1270, 1.0
    %v1276 = vadd.f32 %v1272, 1.0
    %v1277 = vadd.f32 %v1274, 1.0
    %v1278 = vrcp.pop %v1275
    %v1279 = vmul.f32 %v1275, %v1278
    %v1280 = vsub.f32 1.0, %v1279
    %v1281 = vmul.f32 %v1278, %v1280
    %v1282 = vadd.f32 %v1278, %v1281
    %vm1283 = vweird.f32 %v1275
    %vm1284 = vweird.f32 %v1278
    %vm1285 = vmor %vm1283, %vm1284
    %v1286 = vsel %vm1285, %v1278, %v1282
    %v1287 = vand.u32 2147483647, %v1275
    %vm1288 = vcmp.eq.f32.partialorder %v1287, 8.507059e+37
    %v1289 = vand.u32 %v1275, 2147483648
    %v1290 = vor.u32 1.1754944e-38, %v1289
    %v1291 = vsel %vm1288, %v1290, %v1286
    %v1292 = vmul.f32 1.0, %v1291
    %v1293 = vrcp.pop %v1276
    %v1294 = vmul.f32 %v1276, %v1293
    %v1295 = vsub.f32 1.0, %v1294
    %v1296 = vmul.f32 %v1293, %v1295
    %v1297 = vadd.f32 %v1293, %v1296
    %vm1298 = vweird.f32 %v1276
    %vm1299 = vweird.f32 %v1293
    %vm1300 = vmor %vm1298, %vm1299
    %v1301 = vsel %vm1300, %v1293, %v1297
    %v1302 = vand.u32 2147483647, %v1276
    %vm1303 = vcmp.eq.f32.partialorder %v1302, 8.507059e+37
    %v1304 = vand.u32 %v1276, 2147483648
    %v1305 = vor.u32 1.1754944e-38, %v1304
    %v1306 = vsel %vm1303, %v1305, %v1301
    %v1307 = vmul.f32 1.0, %v1306
    %v1308 = vrcp.pop %v1277
    %v1309 = vmul.f32 %v1277, %v1308
    %v1310 = vsub.f32 1.0, %v1309
    %v1311 = vmul.f32 %v1308, %v1310
    %v1312 = vadd.f32 %v1308, %v1311
    %vm1313 = vweird.f32 %v1277
    %vm1314 = vweird.f32 %v1308
    %vm1315 = vmor %vm1313, %vm1314
    %v1316 = vsel %vm1315, %v1308, %v1312
    %v1317 = vand.u32 2147483647, %v1277
    %vm1318 = vcmp.eq.f32.partialorder %v1317, 8.507059e+37
    %v1319 = vand.u32 %v1277, 2147483648
    %v1320 = vor.u32 1.1754944e-38, %v1319
    %v1321 = vsel %vm1318, %v1320, %v1316
    %v1322 = vmul.f32 1.0, %v1321
    %v1323 = vtanh.pop %v1264
    %v1324 = vmul.f32 %v1307, %v951
    %v1325 = vmul.f32 %v1292, %v1323
    %v1326 = vadd.f32 %v1324, %v1325
    %v1327 = vtanh.pop %v1326
    %v1328 = vmul.f32 %v1322, %v1327
    %s1329 = scalar_lea.vmem [#allocation2], 64
    %v1330 = vld [vmem:[%s1329] sm:$0xff]
    %v1331 = vld [vmem:[%s1329 + $0x8] sm:$0xff]
    %v1332 = vld [vmem:[%s1329 + $0x10] sm:$0xff]
    %v1333 = vld [vmem:[%s1329 + $0x18] sm:$0xff]
    %1334 = vmatpush.msra.mxu0 %v438
    %1335 = vmatpush.msra.mxu0 %v434
    %1336 = vmatpush.msra.mxu0 %v430
    %1337 = vmatpush.msra.mxu0 %v426
    %1338 = vmatpush.msra.mxu0 %v422
    %1339 = vmatpush.msra.mxu0 %v418
    %1340 = vmatpush.msra.mxu0 %v414
    %1341 = vmatpush.msra.mxu0 %v410
    %1342 = vmatpush.msra.mxu0 %v406
    %1343 = vmatpush.msra.mxu0 %v402
    %1344 = vmatpush.msra.mxu0 %v398
    %1345 = vmatpush.msra.mxu0 %v394
    %1346 = vmatpush.msra.mxu0 %v390
    %1347 = vmatpush.msra.mxu0 %v386
    %1348 = vmatpush.msra.mxu0 %v382
    %1349 = vmatpush.msra.mxu0 %v378
    %1350 = vmatmul.f32.gmra.mxu0 %v1105
    %v1351 = vpop.f32.mrf.mxu0
    %v1352 = vadd.f32 0.0, %v1351
    %1353 = vdwg.mxu0
    %1354 = vmatpush.msra.mxu0 %v439
    %1355 = vmatpush.msra.mxu0 %v435
    %1356 = vmatpush.msra.mxu0 %v431
    %1357 = vmatpush.msra.mxu0 %v427
    %1358 = vmatpush.msra.mxu0 %v423
    %1359 = vmatpush.msra.mxu0 %v419
    %1360 = vmatpush.msra.mxu0 %v415
    %1361 = vmatpush.msra.mxu0 %v411
    %1362 = vmatpush.msra.mxu0 %v407
    %1363 = vmatpush.msra.mxu0 %v403
    %1364 = vmatpush.msra.mxu0 %v399
    %1365 = vmatpush.msra.mxu0 %v395
    %1366 = vmatpush.msra.mxu0 %v391
    %1367 = vmatpush.msra.mxu0 %v387
    %1368 = vmatpush.msra.mxu0 %v383
    %1369 = vmatpush.msra.mxu0 %v379
    %1370 = vmatmul.f32.gmra.mxu0 %v1105
    %v1371 = vpop.f32.mrf.mxu0
    %v1372 = vadd.f32 0.0, %v1371
    %1373 = vdwg.mxu0
    %1374 = vmatpush.msra.mxu0 %v440
    %1375 = vmatpush.msra.mxu0 %v436
    %1376 = vmatpush.msra.mxu0 %v432
    %1377 = vmatpush.msra.mxu0 %v428
    %1378 = vmatpush.msra.mxu0 %v424
    %1379 = vmatpush.msra.mxu0 %v420
    %1380 = vmatpush.msra.mxu0 %v416
    %1381 = vmatpush.msra.mxu0 %v412
    %1382 = vmatpush.msra.mxu0 %v408
    %1383 = vmatpush.msra.mxu0 %v404
    %1384 = vmatpush.msra.mxu0 %v400
    %1385 = vmatpush.msra.mxu0 %v396
    %1386 = vmatpush.msra.mxu0 %v392
    %1387 = vmatpush.msra.mxu0 %v388
    %1388 = vmatpush.msra.mxu0 %v384
    %1389 = vmatpush.msra.mxu0 %v380
    %1390 = vmatmul.f32.gmra.mxu0 %v1105
    %v1391 = vpop.f32.mrf.mxu0
    %v1392 = vadd.f32 0.0, %v1391
    %1393 = vdwg.mxu0
    %1394 = vmatpush.msra.mxu0 %v441
    %1395 = vmatpush.msra.mxu0 %v437
    %1396 = vmatpush.msra.mxu0 %v433
    %1397 = vmatpush.msra.mxu0 %v429
    %1398 = vmatpush.msra.mxu0 %v425
    %1399 = vmatpush.msra.mxu0 %v421
    %1400 = vmatpush.msra.mxu0 %v417
    %1401 = vmatpush.msra.mxu0 %v413
    %1402 = vmatpush.msra.mxu0 %v409
    %1403 = vmatpush.msra.mxu0 %v405
    %1404 = vmatpush.msra.mxu0 %v401
    %1405 = vmatpush.msra.mxu0 %v397
    %1406 = vmatpush.msra.mxu0 %v393
    %1407 = vmatpush.msra.mxu0 %v389
    %1408 = vmatpush.msra.mxu0 %v385
    %1409 = vmatpush.msra.mxu0 %v381
    %1410 = vmatmul.f32.gmra.mxu0 %v1105
    %v1411 = vpop.f32.mrf.mxu0
    %v1412 = vadd.f32 0.0, %v1411
    %1413 = vdwg.mxu0
    %v1414 = vadd.f32 %v1330, %v1352
    %v1415 = vadd.f32 %v1331, %v1372
    %v1416 = vadd.f32 %v1332, %v1392
    %v1417 = vadd.f32 %v1333, %v1412
    %v1418 = vxor.u32 %v1414, 2147483648
    %v1419 = vxor.u32 %v1415, 2147483648
    %v1420 = vxor.u32 %v1416, 2147483648
    %v1421 = vmul.f32 %v1418, 1.442695
    %v1422 = vpow.pop %v1421
    %v1423 = vmul.f32 %v1419, 1.442695
    %v1424 = vpow.pop %v1423
    %v1425 = vmul.f32 %v1420, 1.442695
    %v1426 = vpow.pop %v1425
    %v1427 = vadd.f32 %v1422, 1.0
    %v1428 = vadd.f32 %v1424, 1.0
    %v1429 = vadd.f32 %v1426, 1.0
    %v1430 = vrcp.pop %v1427
    %v1431 = vmul.f32 %v1427, %v1430
    %v1432 = vsub.f32 1.0, %v1431
    %v1433 = vmul.f32 %v1430, %v1432
    %v1434 = vadd.f32 %v1430, %v1433
    %vm1435 = vweird.f32 %v1427
    %vm1436 = vweird.f32 %v1430
    %vm1437 = vmor %vm1435, %vm1436
    %v1438 = vsel %vm1437, %v1430, %v1434
    %v1439 = vand.u32 2147483647, %v1427
    %vm1440 = vcmp.eq.f32.partialorder %v1439, 8.507059e+37
    %v1441 = vand.u32 %v1427, 2147483648
    %v1442 = vor.u32 1.1754944e-38, %v1441
    %v1443 = vsel %vm1440, %v1442, %v1438
    %v1444 = vmul.f32 1.0, %v1443
    %v1445 = vrcp.pop %v1428
    %v1446 = vmul.f32 %v1428, %v1445
    %v1447 = vsub.f32 1.0, %v1446
    %v1448 = vmul.f32 %v1445, %v1447
    %v1449 = vadd.f32 %v1445, %v1448
    %vm1450 = vweird.f32 %v1428
    %vm1451 = vweird.f32 %v1445
    %vm1452 = vmor %vm1450, %vm1451
    %v1453 = vsel %vm1452, %v1445, %v1449
    %v1454 = vand.u32 2147483647, %v1428
    %vm1455 = vcmp.eq.f32.partialorder %v1454, 8.507059e+37
    %v1456 = vand.u32 %v1428, 2147483648
    %v1457 = vor.u32 1.1754944e-38, %v1456
    %v1458 = vsel %vm1455, %v1457, %v1453
    %v1459 = vmul.f32 1.0, %v1458
    %v1460 = vrcp.pop %v1429
    %v1461 = vmul.f32 %v1429, %v1460
    %v1462 = vsub.f32 1.0, %v1461
    %v1463 = vmul.f32 %v1460, %v1462
    %v1464 = vadd.f32 %v1460, %v1463
    %vm1465 = vweird.f32 %v1429
    %vm1466 = vweird.f32 %v1460
    %vm1467 = vmor %vm1465, %vm1466
    %v1468 = vsel %vm1467, %v1460, %v1464
    %v1469 = vand.u32 2147483647, %v1429
    %vm1470 = vcmp.eq.f32.partialorder %v1469, 8.507059e+37
    %v1471 = vand.u32 %v1429, 2147483648
    %v1472 = vor.u32 1.1754944e-38, %v1471
    %v1473 = vsel %vm1470, %v1472, %v1468
    %v1474 = vmul.f32 1.0, %v1473
    %v1475 = vtanh.pop %v1417
    %v1476 = vmul.f32 %v1459, %v1103
    %v1477 = vmul.f32 %v1444, %v1475
    %v1478 = vadd.f32 %v1476, %v1477
    %v1479 = vtanh.pop %v1478
    %v1480 = vmul.f32 %v1474, %v1479
    %1481 = vmatpush.msra.mxu0 %v502
    %1482 = vmatpush.msra.mxu0 %v498
    %1483 = vmatpush.msra.mxu0 %v494
    %1484 = vmatpush.msra.mxu0 %v490
    %1485 = vmatpush.msra.mxu0 %v486
    %1486 = vmatpush.msra.mxu0 %v482
    %1487 = vmatpush.msra.mxu0 %v478
    %1488 = vmatpush.msra.mxu0 %v474
    %1489 = vmatpush.msra.mxu0 %v470
    %1490 = vmatpush.msra.mxu0 %v466
    %1491 = vmatpush.msra.mxu0 %v462
    %1492 = vmatpush.msra.mxu0 %v458
    %1493 = vmatpush.msra.mxu0 %v454
    %1494 = vmatpush.msra.mxu0 %v450
    %1495 = vmatpush.msra.mxu0 %v446
    %1496 = vmatpush.msra.mxu0 %v442
    %1497 = vmatmul.f32.gmra.mxu0 %v1480
    %v1498 = vpop.f32.mrf.mxu0
    %v1499 = vadd.f32 %v723, %v1498
    %1500 = vdwg.mxu0
    %1501 = vmatpush.msra.mxu0 %v566
    %1502 = vmatpush.msra.mxu0 %v562
    %1503 = vmatpush.msra.mxu0 %v558
    %1504 = vmatpush.msra.mxu0 %v554
    %1505 = vmatpush.msra.mxu0 %v550
    %1506 = vmatpush.msra.mxu0 %v546
    %1507 = vmatpush.msra.mxu0 %v542
    %1508 = vmatpush.msra.mxu0 %v538
    %1509 = vmatpush.msra.mxu0 %v534
    %1510 = vmatpush.msra.mxu0 %v530
    %1511 = vmatpush.msra.mxu0 %v526
    %1512 = vmatpush.msra.mxu0 %v522
    %1513 = vmatpush.msra.mxu0 %v518
    %1514 = vmatpush.msra.mxu0 %v514
    %1515 = vmatpush.msra.mxu0 %v510
    %1516 = vmatpush.msra.mxu0 %v506
    %1517 = vmatmul.f32.gmra.mxu0 %v1328
    %v1518 = vpop.f32.mrf.mxu0
    %v1519 = vadd.f32 %v1499, %v1518
    %1520 = vdwg.mxu0
    %1521 = vmatpush.msra.mxu0 %v503
    %1522 = vmatpush.msra.mxu0 %v499
    %1523 = vmatpush.msra.mxu0 %v495
    %1524 = vmatpush.msra.mxu0 %v491
    %1525 = vmatpush.msra.mxu0 %v487
    %1526 = vmatpush.msra.mxu0 %v483
    %1527 = vmatpush.msra.mxu0 %v479
    %1528 = vmatpush.msra.mxu0 %v475
    %1529 = vmatpush.msra.mxu0 %v471
    %1530 = vmatpush.msra.mxu0 %v467
    %1531 = vmatpush.msra.mxu0 %v463
    %1532 = vmatpush.msra.mxu0 %v459
    %1533 = vmatpush.msra.mxu0 %v455
    %1534 = vmatpush.msra.mxu0 %v451
    %1535 = vmatpush.msra.mxu0 %v447
    %1536 = vmatpush.msra.mxu0 %v443
    %1537 = vmatmul.f32.gmra.mxu0 %v1480
    %v1538 = vpop.f32.mrf.mxu0
    %v1539 = vadd.f32 %v724, %v1538
    %1540 = vdwg.mxu0
    %1541 = vmatpush.msra.mxu0 %v567
    %1542 = vmatpush.msra.mxu0 %v563
    %1543 = vmatpush.msra.mxu0 %v559
    %1544 = vmatpush.msra.mxu0 %v555
    %1545 = vmatpush.msra.mxu0 %v551
    %1546 = vmatpush.msra.mxu0 %v547
    %1547 = vmatpush.msra.mxu0 %v543
    %1548 = vmatpush.msra.mxu0 %v539
    %1549 = vmatpush.msra.mxu0 %v535
    %1550 = vmatpush.msra.mxu0 %v531
    %1551 = vmatpush.msra.mxu0 %v527
    %1552 = vmatpush.msra.mxu0 %v523
    %1553 = vmatpush.msra.mxu0 %v519
    %1554 = vmatpush.msra.mxu0 %v515
    %1555 = vmatpush.msra.mxu0 %v511
    %1556 = vmatpush.msra.mxu0 %v507
    %1557 = vmatmul.f32.gmra.mxu0 %v1328
    %v1558 = vpop.f32.mrf.mxu0
    %v1559 = vadd.f32 %v1539, %v1558
    %1560 = vdwg.mxu0
    %1561 = vmatpush.msra.mxu0 %v504
    %1562 = vmatpush.msra.mxu0 %v500
    %1563 = vmatpush.msra.mxu0 %v496
    %1564 = vmatpush.msra.mxu0 %v492
    %1565 = vmatpush.msra.mxu0 %v488
    %1566 = vmatpush.msra.mxu0 %v484
    %1567 = vmatpush.msra.mxu0 %v480
    %1568 = vmatpush.msra.mxu0 %v476
    %1569 = vmatpush.msra.mxu0 %v472
    %1570 = vmatpush.msra.mxu0 %v468
    %1571 = vmatpush.msra.mxu0 %v464
    %1572 = vmatpush.msra.mxu0 %v460
    %1573 = vmatpush.msra.mxu0 %v456
    %1574 = vmatpush.msra.mxu0 %v452
    %1575 = vmatpush.msra.mxu0 %v448
    %1576 = vmatpush.msra.mxu0 %v444
    %1577 = vmatmul.f32.gmra.mxu0 %v1480
    %v1578 = vpop.f32.mrf.mxu0
    %v1579 = vadd.f32 %v725, %v1578
    %1580 = vdwg.mxu0
    %1581 = vmatpush.msra.mxu0 %v568
    %1582 = vmatpush.msra.mxu0 %v564
    %1583 = vmatpush.msra.mxu0 %v560
    %1584 = vmatpush.msra.mxu0 %v556
    %1585 = vmatpush.msra.mxu0 %v552
    %1586 = vmatpush.msra.mxu0 %v548
    %1587 = vmatpush.msra.mxu0 %v544
    %1588 = vmatpush.msra.mxu0 %v540
    %1589 = vmatpush.msra.mxu0 %v536
    %1590 = vmatpush.msra.mxu0 %v532
    %1591 = vmatpush.msra.mxu0 %v528
    %1592 = vmatpush.msra.mxu0 %v524
    %1593 = vmatpush.msra.mxu0 %v520
    %1594 = vmatpush.msra.mxu0 %v516
    %1595 = vmatpush.msra.mxu0 %v512
    %1596 = vmatpush.msra.mxu0 %v508
    %1597 = vmatmul.f32.gmra.mxu0 %v1328
    %v1598 = vpop.f32.mrf.mxu0
    %v1599 = vadd.f32 %v1579, %v1598
    %1600 = vdwg.mxu0
    %1601 = vmatpush.msra.mxu0 %v505
    %1602 = vmatpush.msra.mxu0 %v501
    %1603 = vmatpush.msra.mxu0 %v497
    %1604 = vmatpush.msra.mxu0 %v493
    %1605 = vmatpush.msra.mxu0 %v489
    %1606 = vmatpush.msra.mxu0 %v485
    %1607 = vmatpush.msra.mxu0 %v481
    %1608 = vmatpush.msra.mxu0 %v477
    %1609 = vmatpush.msra.mxu0 %v473
    %1610 = vmatpush.msra.mxu0 %v469
    %1611 = vmatpush.msra.mxu0 %v465
    %1612 = vmatpush.msra.mxu0 %v461
    %1613 = vmatpush.msra.mxu0 %v457
    %1614 = vmatpush.msra.mxu0 %v453
    %1615 = vmatpush.msra.mxu0 %v449
    %1616 = vmatpush.msra.mxu0 %v445
    %1617 = vmatmul.f32.gmra.mxu0 %v1480
    %v1618 = vpop.f32.mrf.mxu0
    %v1619 = vadd.f32 %v726, %v1618
    %1620 = vdwg.mxu0
    %1621 = vmatpush.msra.mxu0 %v569
    %1622 = vmatpush.msra.mxu0 %v565
    %1623 = vmatpush.msra.mxu0 %v561
    %1624 = vmatpush.msra.mxu0 %v557
    %1625 = vmatpush.msra.mxu0 %v553
    %1626 = vmatpush.msra.mxu0 %v549
    %1627 = vmatpush.msra.mxu0 %v545
    %1628 = vmatpush.msra.mxu0 %v541
    %1629 = vmatpush.msra.mxu0 %v537
    %1630 = vmatpush.msra.mxu0 %v533
    %1631 = vmatpush.msra.mxu0 %v529
    %1632 = vmatpush.msra.mxu0 %v525
    %1633 = vmatpush.msra.mxu0 %v521
    %1634 = vmatpush.msra.mxu0 %v517
    %1635 = vmatpush.msra.mxu0 %v513
    %1636 = vmatpush.msra.mxu0 %v509
    %1637 = vmatmul.f32.gmra.mxu0 %v1328
    %v1638 = vpop.f32.mrf.mxu0
    %v1639 = vadd.f32 %v1619, %v1638
    %1640 = vdwg.mxu0
    %v1641 = vxor.u32 %v1519, 2147483648
    %v1642 = vxor.u32 %v1559, 2147483648
    %v1643 = vxor.u32 %v1599, 2147483648
    %v1644 = vmul.f32 %v1641, 1.442695
    %v1645 = vpow.pop %v1644
    %v1646 = vmul.f32 %v1642, 1.442695
    %v1647 = vpow.pop %v1646
    %v1648 = vmul.f32 %v1643, 1.442695
    %v1649 = vpow.pop %v1648
    %v1650 = vadd.f32 %v1645, 1.0
    %v1651 = vadd.f32 %v1647, 1.0
    %v1652 = vadd.f32 %v1649, 1.0
    %v1653 = vrcp.pop %v1650
    %v1654 = vmul.f32 %v1650, %v1653
    %v1655 = vsub.f32 1.0, %v1654
    %v1656 = vmul.f32 %v1653, %v1655
    %v1657 = vadd.f32 %v1653, %v1656
    %vm1658 = vweird.f32 %v1650
    %vm1659 = vweird.f32 %v1653
    %vm1660 = vmor %vm1658, %vm1659
    %v1661 = vsel %vm1660, %v1653, %v1657
    %v1662 = vand.u32 2147483647, %v1650
    %vm1663 = vcmp.eq.f32.partialorder %v1662, 8.507059e+37
    %v1664 = vand.u32 %v1650, 2147483648
    %v1665 = vor.u32 1.1754944e-38, %v1664
    %v1666 = vsel %vm1663, %v1665, %v1661
    %v1667 = vmul.f32 1.0, %v1666
    %v1668 = vrcp.pop %v1651
    %v1669 = vmul.f32 %v1651, %v1668
    %v1670 = vsub.f32 1.0, %v1669
    %v1671 = vmul.f32 %v1668, %v1670
    %v1672 = vadd.f32 %v1668, %v1671
    %vm1673 = vweird.f32 %v1651
    %vm1674 = vweird.f32 %v1668
    %vm1675 = vmor %vm1673, %vm1674
    %v1676 = vsel %vm1675, %v1668, %v1672
    %v1677 = vand.u32 2147483647, %v1651
    %vm1678 = vcmp.eq.f32.partialorder %v1677, 8.507059e+37
    %v1679 = vand.u32 %v1651, 2147483648
    %v1680 = vor.u32 1.1754944e-38, %v1679
    %v1681 = vsel %vm1678, %v1680, %v1676
    %v1682 = vmul.f32 1.0, %v1681
    %v1683 = vrcp.pop %v1652
    %v1684 = vmul.f32 %v1652, %v1683
    %v1685 = vsub.f32 1.0, %v1684
    %v1686 = vmul.f32 %v1683, %v1685
    %v1687 = vadd.f32 %v1683, %v1686
    %vm1688 = vweird.f32 %v1652
    %vm1689 = vweird.f32 %v1683
    %vm1690 = vmor %vm1688, %vm1689
    %v1691 = vsel %vm1690, %v1683, %v1687
    %v1692 = vand.u32 2147483647, %v1652
    %vm1693 = vcmp.eq.f32.partialorder %v1692, 8.507059e+37
    %v1694 = vand.u32 %v1652, 2147483648
    %v1695 = vor.u32 1.1754944e-38, %v1694
    %v1696 = vsel %vm1693, %v1695, %v1691
    %v1697 = vmul.f32 1.0, %v1696
    %v1698 = vtanh.pop %v1639
    %v1699 = vmul.f32 %v1682, %v1326
    %v1700 = vmul.f32 %v1667, %v1698
    %v1701 = vadd.f32 %v1699, %v1700
    %v1702 = vtanh.pop %v1701
    %v1703 = vmul.f32 %v1697, %v1702
    %s1704 = scalar_lea.vmem [#allocation2], 96
    %v1705 = vld [vmem:[%s1704] sm:$0xff]
    %v1706 = vld [vmem:[%s1704 + $0x8] sm:$0xff]
    %v1707 = vld [vmem:[%s1704 + $0x10] sm:$0xff]
    %v1708 = vld [vmem:[%s1704 + $0x18] sm:$0xff]
    %1709 = vmatpush.msra.mxu0 %v438
    %1710 = vmatpush.msra.mxu0 %v434
    %1711 = vmatpush.msra.mxu0 %v430
    %1712 = vmatpush.msra.mxu0 %v426
    %1713 = vmatpush.msra.mxu0 %v422
    %1714 = vmatpush.msra.mxu0 %v418
    %1715 = vmatpush.msra.mxu0 %v414
    %1716 = vmatpush.msra.mxu0 %v410
    %1717 = vmatpush.msra.mxu0 %v406
    %1718 = vmatpush.msra.mxu0 %v402
    %1719 = vmatpush.msra.mxu0 %v398
    %1720 = vmatpush.msra.mxu0 %v394
    %1721 = vmatpush.msra.mxu0 %v390
    %1722 = vmatpush.msra.mxu0 %v386
    %1723 = vmatpush.msra.mxu0 %v382
    %1724 = vmatpush.msra.mxu0 %v378
    %1725 = vmatmul.f32.gmra.mxu0 %v1480
    %v1726 = vpop.f32.mrf.mxu0
    %v1727 = vadd.f32 0.0, %v1726
    %1728 = vdwg.mxu0
    %1729 = vmatpush.msra.mxu0 %v439
    %1730 = vmatpush.msra.mxu0 %v435
    %1731 = vmatpush.msra.mxu0 %v431
    %1732 = vmatpush.msra.mxu0 %v427
    %1733 = vmatpush.msra.mxu0 %v423
    %1734 = vmatpush.msra.mxu0 %v419
    %1735 = vmatpush.msra.mxu0 %v415
    %1736 = vmatpush.msra.mxu0 %v411
    %1737 = vmatpush.msra.mxu0 %v407
    %1738 = vmatpush.msra.mxu0 %v403
    %1739 = vmatpush.msra.mxu0 %v399
    %1740 = vmatpush.msra.mxu0 %v395
    %1741 = vmatpush.msra.mxu0 %v391
    %1742 = vmatpush.msra.mxu0 %v387
    %1743 = vmatpush.msra.mxu0 %v383
    %1744 = vmatpush.msra.mxu0 %v379
    %1745 = vmatmul.f32.gmra.mxu0 %v1480
    %v1746 = vpop.f32.mrf.mxu0
    %v1747 = vadd.f32 0.0, %v1746
    %1748 = vdwg.mxu0
    %1749 = vmatpush.msra.mxu0 %v440
    %1750 = vmatpush.msra.mxu0 %v436
    %1751 = vmatpush.msra.mxu0 %v432
    %1752 = vmatpush.msra.mxu0 %v428
    %1753 = vmatpush.msra.mxu0 %v424
    %1754 = vmatpush.msra.mxu0 %v420
    %1755 = vmatpush.msra.mxu0 %v416
    %1756 = vmatpush.msra.mxu0 %v412
    %1757 = vmatpush.msra.mxu0 %v408
    %1758 = vmatpush.msra.mxu0 %v404
    %1759 = vmatpush.msra.mxu0 %v400
    %1760 = vmatpush.msra.mxu0 %v396
    %1761 = vmatpush.msra.mxu0 %v392
    %1762 = vmatpush.msra.mxu0 %v388
    %1763 = vmatpush.msra.mxu0 %v384
    %1764 = vmatpush.msra.mxu0 %v380
    %1765 = vmatmul.f32.gmra.mxu0 %v1480
    %v1766 = vpop.f32.mrf.mxu0
    %v1767 = vadd.f32 0.0, %v1766
    %1768 = vdwg.mxu0
    %1769 = vmatpush.msra.mxu0 %v441
    %1770 = vmatpush.msra.mxu0 %v437
    %1771 = vmatpush.msra.mxu0 %v433
    %1772 = vmatpush.msra.mxu0 %v429
    %1773 = vmatpush.msra.mxu0 %v425
    %1774 = vmatpush.msra.mxu0 %v421
    %1775 = vmatpush.msra.mxu0 %v417
    %1776 = vmatpush.msra.mxu0 %v413
    %1777 = vmatpush.msra.mxu0 %v409
    %1778 = vmatpush.msra.mxu0 %v405
    %1779 = vmatpush.msra.mxu0 %v401
    %1780 = vmatpush.msra.mxu0 %v397
    %1781 = vmatpush.msra.mxu0 %v393
    %1782 = vmatpush.msra.mxu0 %v389
    %1783 = vmatpush.msra.mxu0 %v385
    %1784 = vmatpush.msra.mxu0 %v381
    %1785 = vmatmul.f32.gmra.mxu0 %v1480
    %v1786 = vpop.f32.mrf.mxu0
    %v1787 = vadd.f32 0.0, %v1786
    %1788 = vdwg.mxu0
    %v1789 = vadd.f32 %v1705, %v1727
    %v1790 = vadd.f32 %v1706, %v1747
    %v1791 = vadd.f32 %v1707, %v1767
    %v1792 = vadd.f32 %v1708, %v1787
    %v1793 = vxor.u32 %v1789, 2147483648
    %v1794 = vxor.u32 %v1790, 2147483648
    %v1795 = vxor.u32 %v1791, 2147483648
    %v1796 = vmul.f32 %v1793, 1.442695
    %v1797 = vpow.pop %v1796
    %v1798 = vmul.f32 %v1794, 1.442695
    %v1799 = vpow.pop %v1798
    %v1800 = vmul.f32 %v1795, 1.442695
    %v1801 = vpow.pop %v1800
    %v1802 = vadd.f32 %v1797, 1.0
    %v1803 = vadd.f32 %v1799, 1.0
    %v1804 = vadd.f32 %v1801, 1.0
    %v1805 = vrcp.pop %v1802
    %v1806 = vmul.f32 %v1802, %v1805
    %v1807 = vsub.f32 1.0, %v1806
    %v1808 = vmul.f32 %v1805, %v1807
    %v1809 = vadd.f32 %v1805, %v1808
    %vm1810 = vweird.f32 %v1802
    %vm1811 = vweird.f32 %v1805
    %vm1812 = vmor %vm1810, %vm1811
    %v1813 = vsel %vm1812, %v1805, %v1809
    %v1814 = vand.u32 2147483647, %v1802
    %vm1815 = vcmp.eq.f32.partialorder %v1814, 8.507059e+37
    %v1816 = vand.u32 %v1802, 2147483648
    %v1817 = vor.u32 1.1754944e-38, %v1816
    %v1818 = vsel %vm1815, %v1817, %v1813
    %v1819 = vmul.f32 1.0, %v1818
    %v1820 = vrcp.pop %v1803
    %v1821 = vmul.f32 %v1803, %v1820
    %v1822 = vsub.f32 1.0, %v1821
    %v1823 = vmul.f32 %v1820, %v1822
    %v1824 = vadd.f32 %v1820, %v1823
    %vm1825 = vweird.f32 %v1803
    %vm1826 = vweird.f32 %v1820
    %vm1827 = vmor %vm1825, %vm1826
    %v1828 = vsel %vm1827, %v1820, %v1824
    %v1829 = vand.u32 2147483647, %v1803
    %vm1830 = vcmp.eq.f32.partialorder %v1829, 8.507059e+37
    %v1831 = vand.u32 %v1803, 2147483648
    %v1832 = vor.u32 1.1754944e-38, %v1831
    %v1833 = vsel %vm1830, %v1832, %v1828
    %v1834 = vmul.f32 1.0, %v1833
    %v1835 = vrcp.pop %v1804
    %v1836 = vmul.f32 %v1804, %v1835
    %v1837 = vsub.f32 1.0, %v1836
    %v1838 = vmul.f32 %v1835, %v1837
    %v1839 = vadd.f32 %v1835, %v1838
    %vm1840 = vweird.f32 %v1804
    %vm1841 = vweird.f32 %v1835
    %vm1842 = vmor %vm1840, %vm1841
    %v1843 = vsel %vm1842, %v1835, %v1839
    %v1844 = vand.u32 2147483647, %v1804
    %vm1845 = vcmp.eq.f32.partialorder %v1844, 8.507059e+37
    %v1846 = vand.u32 %v1804, 2147483648
    %v1847 = vor.u32 1.1754944e-38, %v1846
    %v1848 = vsel %vm1845, %v1847, %v1843
    %v1849 = vmul.f32 1.0, %v1848
    %v1850 = vtanh.pop %v1792
    %v1851 = vmul.f32 %v1834, %v1478
    %v1852 = vmul.f32 %v1819, %v1850
    %v1853 = vadd.f32 %v1851, %v1852
    %v1854 = vtanh.pop %v1853
    %v1855 = vmul.f32 %v1849, %v1854
    %1856 = vmatpush.msra.mxu0 %v502
    %1857 = vmatpush.msra.mxu0 %v498
    %1858 = vmatpush.msra.mxu0 %v494
    %1859 = vmatpush.msra.mxu0 %v490
    %1860 = vmatpush.msra.mxu0 %v486
    %1861 = vmatpush.msra.mxu0 %v482
    %1862 = vmatpush.msra.mxu0 %v478
    %1863 = vmatpush.msra.mxu0 %v474
    %1864 = vmatpush.msra.mxu0 %v470
    %1865 = vmatpush.msra.mxu0 %v466
    %1866 = vmatpush.msra.mxu0 %v462
    %1867 = vmatpush.msra.mxu0 %v458
    %1868 = vmatpush.msra.mxu0 %v454
    %1869 = vmatpush.msra.mxu0 %v450
    %1870 = vmatpush.msra.mxu0 %v446
    %1871 = vmatpush.msra.mxu0 %v442
    %1872 = vmatmul.f32.gmra.mxu0 %v1855
    %v1873 = vpop.f32.mrf.mxu0
    %v1874 = vadd.f32 %v723, %v1873
    %1875 = vdwg.mxu0
    %1876 = vmatpush.msra.mxu0 %v566
    %1877 = vmatpush.msra.mxu0 %v562
    %1878 = vmatpush.msra.mxu0 %v558
    %1879 = vmatpush.msra.mxu0 %v554
    %1880 = vmatpush.msra.mxu0 %v550
    %1881 = vmatpush.msra.mxu0 %v546
    %1882 = vmatpush.msra.mxu0 %v542
    %1883 = vmatpush.msra.mxu0 %v538
    %1884 = vmatpush.msra.mxu0 %v534
    %1885 = vmatpush.msra.mxu0 %v530
    %1886 = vmatpush.msra.mxu0 %v526
    %1887 = vmatpush.msra.mxu0 %v522
    %1888 = vmatpush.msra.mxu0 %v518
    %1889 = vmatpush.msra.mxu0 %v514
    %1890 = vmatpush.msra.mxu0 %v510
    %1891 = vmatpush.msra.mxu0 %v506
    %1892 = vmatmul.f32.gmra.mxu0 %v1703
    %v1893 = vpop.f32.mrf.mxu0
    %v1894 = vadd.f32 %v1874, %v1893
    %1895 = vdwg.mxu0
    %1896 = vmatpush.msra.mxu0 %v503
    %1897 = vmatpush.msra.mxu0 %v499
    %1898 = vmatpush.msra.mxu0 %v495
    %1899 = vmatpush.msra.mxu0 %v491
    %1900 = vmatpush.msra.mxu0 %v487
    %1901 = vmatpush.msra.mxu0 %v483
    %1902 = vmatpush.msra.mxu0 %v479
    %1903 = vmatpush.msra.mxu0 %v475
    %1904 = vmatpush.msra.mxu0 %v471
    %1905 = vmatpush.msra.mxu0 %v467
    %1906 = vmatpush.msra.mxu0 %v463
    %1907 = vmatpush.msra.mxu0 %v459
    %1908 = vmatpush.msra.mxu0 %v455
    %1909 = vmatpush.msra.mxu0 %v451
    %1910 = vmatpush.msra.mxu0 %v447
    %1911 = vmatpush.msra.mxu0 %v443
    %1912 = vmatmul.f32.gmra.mxu0 %v1855
    %v1913 = vpop.f32.mrf.mxu0
    %v1914 = vadd.f32 %v724, %v1913
    %1915 = vdwg.mxu0
    %1916 = vmatpush.msra.mxu0 %v567
    %1917 = vmatpush.msra.mxu0 %v563
    %1918 = vmatpush.msra.mxu0 %v559
    %1919 = vmatpush.msra.mxu0 %v555
    %1920 = vmatpush.msra.mxu0 %v551
    %1921 = vmatpush.msra.mxu0 %v547
    %1922 = vmatpush.msra.mxu0 %v543
    %1923 = vmatpush.msra.mxu0 %v539
    %1924 = vmatpush.msra.mxu0 %v535
    %1925 = vmatpush.msra.mxu0 %v531
    %1926 = vmatpush.msra.mxu0 %v527
    %1927 = vmatpush.msra.mxu0 %v523
    %1928 = vmatpush.msra.mxu0 %v519
    %1929 = vmatpush.msra.mxu0 %v515
    %1930 = vmatpush.msra.mxu0 %v511
    %1931 = vmatpush.msra.mxu0 %v507
    %1932 = vmatmul.f32.gmra.mxu0 %v1703
    %v1933 = vpop.f32.mrf.mxu0
    %v1934 = vadd.f32 %v1914, %v1933
    %1935 = vdwg.mxu0
    %1936 = vmatpush.msra.mxu0 %v504
    %1937 = vmatpush.msra.mxu0 %v500
    %1938 = vmatpush.msra.mxu0 %v496
    %1939 = vmatpush.msra.mxu0 %v492
    %1940 = vmatpush.msra.mxu0 %v488
    %1941 = vmatpush.msra.mxu0 %v484
    %1942 = vmatpush.msra.mxu0 %v480
    %1943 = vmatpush.msra.mxu0 %v476
    %1944 = vmatpush.msra.mxu0 %v472
    %1945 = vmatpush.msra.mxu0 %v468
    %1946 = vmatpush.msra.mxu0 %v464
    %1947 = vmatpush.msra.mxu0 %v460
    %1948 = vmatpush.msra.mxu0 %v456
    %1949 = vmatpush.msra.mxu0 %v452
    %1950 = vmatpush.msra.mxu0 %v448
    %1951 = vmatpush.msra.mxu0 %v444
    %1952 = vmatmul.f32.gmra.mxu0 %v1855
    %v1953 = vpop.f32.mrf.mxu0
    %v1954 = vadd.f32 %v725, %v1953
    %1955 = vdwg.mxu0
    %1956 = vmatpush.msra.mxu0 %v568
    %1957 = vmatpush.msra.mxu0 %v564
    %1958 = vmatpush.msra.mxu0 %v560
    %1959 = vmatpush.msra.mxu0 %v556
    %1960 = vmatpush.msra.mxu0 %v552
    %1961 = vmatpush.msra.mxu0 %v548
    %1962 = vmatpush.msra.mxu0 %v544
    %1963 = vmatpush.msra.mxu0 %v540
    %1964 = vmatpush.msra.mxu0 %v536
    %1965 = vmatpush.msra.mxu0 %v532
    %1966 = vmatpush.msra.mxu0 %v528
    %1967 = vmatpush.msra.mxu0 %v524
    %1968 = vmatpush.msra.mxu0 %v520
    %1969 = vmatpush.msra.mxu0 %v516
    %1970 = vmatpush.msra.mxu0 %v512
    %1971 = vmatpush.msra.mxu0 %v508
    %1972 = vmatmul.f32.gmra.mxu0 %v1703
    %v1973 = vpop.f32.mrf.mxu0
    %v1974 = vadd.f32 %v1954, %v1973
    %1975 = vdwg.mxu0
    %1976 = vmatpush.msra.mxu0 %v505
    %1977 = vmatpush.msra.mxu0 %v501
    %1978 = vmatpush.msra.mxu0 %v497
    %1979 = vmatpush.msra.mxu0 %v493
    %1980 = vmatpush.msra.mxu0 %v489
    %1981 = vmatpush.msra.mxu0 %v485
    %1982 = vmatpush.msra.mxu0 %v481
    %1983 = vmatpush.msra.mxu0 %v477
    %1984 = vmatpush.msra.mxu0 %v473
    %1985 = vmatpush.msra.mxu0 %v469
    %1986 = vmatpush.msra.mxu0 %v465
    %1987 = vmatpush.msra.mxu0 %v461
    %1988 = vmatpush.msra.mxu0 %v457
    %1989 = vmatpush.msra.mxu0 %v453
    %1990 = vmatpush.msra.mxu0 %v449
    %1991 = vmatpush.msra.mxu0 %v445
    %1992 = vmatmul.f32.gmra.mxu0 %v1855
    %v1993 = vpop.f32.mrf.mxu0
    %v1994 = vadd.f32 %v726, %v1993
    %1995 = vdwg.mxu0
    %1996 = vmatpush.msra.mxu0 %v569
    %1997 = vmatpush.msra.mxu0 %v565
    %1998 = vmatpush.msra.mxu0 %v561
    %1999 = vmatpush.msra.mxu0 %v557
    %2000 = vmatpush.msra.mxu0 %v553
    %2001 = vmatpush.msra.mxu0 %v549
    %2002 = vmatpush.msra.mxu0 %v545
    %2003 = vmatpush.msra.mxu0 %v541
    %2004 = vmatpush.msra.mxu0 %v537
    %2005 = vmatpush.msra.mxu0 %v533
    %2006 = vmatpush.msra.mxu0 %v529
    %2007 = vmatpush.msra.mxu0 %v525
    %2008 = vmatpush.msra.mxu0 %v521
    %2009 = vmatpush.msra.mxu0 %v517
    %2010 = vmatpush.msra.mxu0 %v513
    %2011 = vmatpush.msra.mxu0 %v509
    %2012 = vmatmul.f32.gmra.mxu0 %v1703
    %v2013 = vpop.f32.mrf.mxu0
    %v2014 = vadd.f32 %v1994, %v2013
    %2015 = vdwg.mxu0
    %v2016 = vxor.u32 %v1894, 2147483648
    %v2017 = vxor.u32 %v1934, 2147483648
    %v2018 = vxor.u32 %v1974, 2147483648
    %v2019 = vmul.f32 %v2016, 1.442695
    %v2020 = vpow.pop %v2019
    %v2021 = vmul.f32 %v2017, 1.442695
    %v2022 = vpow.pop %v2021
    %v2023 = vmul.f32 %v2018, 1.442695
    %v2024 = vpow.pop %v2023
    %v2025 = vadd.f32 %v2020, 1.0
    %v2026 = vadd.f32 %v2022, 1.0
    %v2027 = vadd.f32 %v2024, 1.0
    %v2028 = vrcp.pop %v2025
    %v2029 = vmul.f32 %v2025, %v2028
    %v2030 = vsub.f32 1.0, %v2029
    %v2031 = vmul.f32 %v2028, %v2030
    %v2032 = vadd.f32 %v2028, %v2031
    %vm2033 = vweird.f32 %v2025
    %vm2034 = vweird.f32 %v2028
    %vm2035 = vmor %vm2033, %vm2034
    %v2036 = vsel %vm2035, %v2028, %v2032
    %v2037 = vand.u32 2147483647, %v2025
    %vm2038 = vcmp.eq.f32.partialorder %v2037, 8.507059e+37
    %v2039 = vand.u32 %v2025, 2147483648
    %v2040 = vor.u32 1.1754944e-38, %v2039
    %v2041 = vsel %vm2038, %v2040, %v2036
    %v2042 = vmul.f32 1.0, %v2041
    %v2043 = vrcp.pop %v2026
    %v2044 = vmul.f32 %v2026, %v2043
    %v2045 = vsub.f32 1.0, %v2044
    %v2046 = vmul.f32 %v2043, %v2045
    %v2047 = vadd.f32 %v2043, %v2046
    %vm2048 = vweird.f32 %v2026
    %vm2049 = vweird.f32 %v2043
    %vm2050 = vmor %vm2048, %vm2049
    %v2051 = vsel %vm2050, %v2043, %v2047
    %v2052 = vand.u32 2147483647, %v2026
    %vm2053 = vcmp.eq.f32.partialorder %v2052, 8.507059e+37
    %v2054 = vand.u32 %v2026, 2147483648
    %v2055 = vor.u32 1.1754944e-38, %v2054
    %v2056 = vsel %vm2053, %v2055, %v2051
    %v2057 = vmul.f32 1.0, %v2056
    %v2058 = vrcp.pop %v2027
    %v2059 = vmul.f32 %v2027, %v2058
    %v2060 = vsub.f32 1.0, %v2059
    %v2061 = vmul.f32 %v2058, %v2060
    %v2062 = vadd.f32 %v2058, %v2061
    %vm2063 = vweird.f32 %v2027
    %vm2064 = vweird.f32 %v2058
    %vm2065 = vmor %vm2063, %vm2064
    %v2066 = vsel %vm2065, %v2058, %v2062
    %v2067 = vand.u32 2147483647, %v2027
    %vm2068 = vcmp.eq.f32.partialorder %v2067, 8.507059e+37
    %v2069 = vand.u32 %v2027, 2147483648
    %v2070 = vor.u32 1.1754944e-38, %v2069
    %v2071 = vsel %vm2068, %v2070, %v2066
    %v2072 = vmul.f32 1.0, %v2071
    %v2073 = vtanh.pop %v2014
    %v2074 = vmul.f32 %v2057, %v1701
    %v2075 = vmul.f32 %v2042, %v2073
    %v2076 = vadd.f32 %v2074, %v2075
    %v2077 = vtanh.pop %v2076
    %v2078 = vmul.f32 %v2072, %v2077
    %s2079 = scalar_lea.vmem [#allocation2], 128
    %v2080 = vld [vmem:[%s2079] sm:$0xff]
    %v2081 = vld [vmem:[%s2079 + $0x8] sm:$0xff]
    %v2082 = vld [vmem:[%s2079 + $0x10] sm:$0xff]
    %v2083 = vld [vmem:[%s2079 + $0x18] sm:$0xff]
    %2084 = vmatpush.msra.mxu0 %v438
    %2085 = vmatpush.msra.mxu0 %v434
    %2086 = vmatpush.msra.mxu0 %v430
    %2087 = vmatpush.msra.mxu0 %v426
    %2088 = vmatpush.msra.mxu0 %v422
    %2089 = vmatpush.msra.mxu0 %v418
    %2090 = vmatpush.msra.mxu0 %v414
    %2091 = vmatpush.msra.mxu0 %v410
    %2092 = vmatpush.msra.mxu0 %v406
    %2093 = vmatpush.msra.mxu0 %v402
    %2094 = vmatpush.msra.mxu0 %v398
    %2095 = vmatpush.msra.mxu0 %v394
    %2096 = vmatpush.msra.mxu0 %v390
    %2097 = vmatpush.msra.mxu0 %v386
    %2098 = vmatpush.msra.mxu0 %v382
    %2099 = vmatpush.msra.mxu0 %v378
    %2100 = vmatmul.f32.gmra.mxu0 %v1855
    %v2101 = vpop.f32.mrf.mxu0
    %v2102 = vadd.f32 0.0, %v2101
    %2103 = vdwg.mxu0
    %2104 = vmatpush.msra.mxu0 %v439
    %2105 = vmatpush.msra.mxu0 %v435
    %2106 = vmatpush.msra.mxu0 %v431
    %2107 = vmatpush.msra.mxu0 %v427
    %2108 = vmatpush.msra.mxu0 %v423
    %2109 = vmatpush.msra.mxu0 %v419
    %2110 = vmatpush.msra.mxu0 %v415
    %2111 = vmatpush.msra.mxu0 %v411
    %2112 = vmatpush.msra.mxu0 %v407
    %2113 = vmatpush.msra.mxu0 %v403
    %2114 = vmatpush.msra.mxu0 %v399
    %2115 = vmatpush.msra.mxu0 %v395
    %2116 = vmatpush.msra.mxu0 %v391
    %2117 = vmatpush.msra.mxu0 %v387
    %2118 = vmatpush.msra.mxu0 %v383
    %2119 = vmatpush.msra.mxu0 %v379
    %2120 = vmatmul.f32.gmra.mxu0 %v1855
    %v2121 = vpop.f32.mrf.mxu0
    %v2122 = vadd.f32 0.0, %v2121
    %2123 = vdwg.mxu0
    %2124 = vmatpush.msra.mxu0 %v440
    %2125 = vmatpush.msra.mxu0 %v436
    %2126 = vmatpush.msra.mxu0 %v432
    %2127 = vmatpush.msra.mxu0 %v428
    %2128 = vmatpush.msra.mxu0 %v424
    %2129 = vmatpush.msra.mxu0 %v420
    %2130 = vmatpush.msra.mxu0 %v416
    %2131 = vmatpush.msra.mxu0 %v412
    %2132 = vmatpush.msra.mxu0 %v408
    %2133 = vmatpush.msra.mxu0 %v404
    %2134 = vmatpush.msra.mxu0 %v400
    %2135 = vmatpush.msra.mxu0 %v396
    %2136 = vmatpush.msra.mxu0 %v392
    %2137 = vmatpush.msra.mxu0 %v388
    %2138 = vmatpush.msra.mxu0 %v384
    %2139 = vmatpush.msra.mxu0 %v380
    %2140 = vmatmul.f32.gmra.mxu0 %v1855
    %v2141 = vpop.f32.mrf.mxu0
    %v2142 = vadd.f32 0.0, %v2141
    %2143 = vdwg.mxu0
    %2144 = vmatpush.msra.mxu0 %v441
    %2145 = vmatpush.msra.mxu0 %v437
    %2146 = vmatpush.msra.mxu0 %v433
    %2147 = vmatpush.msra.mxu0 %v429
    %2148 = vmatpush.msra.mxu0 %v425
    %2149 = vmatpush.msra.mxu0 %v421
    %2150 = vmatpush.msra.mxu0 %v417
    %2151 = vmatpush.msra.mxu0 %v413
    %2152 = vmatpush.msra.mxu0 %v409
    %2153 = vmatpush.msra.mxu0 %v405
    %2154 = vmatpush.msra.mxu0 %v401
    %2155 = vmatpush.msra.mxu0 %v397
    %2156 = vmatpush.msra.mxu0 %v393
    %2157 = vmatpush.msra.mxu0 %v389
    %2158 = vmatpush.msra.mxu0 %v385
    %2159 = vmatpush.msra.mxu0 %v381
    %2160 = vmatmul.f32.gmra.mxu0 %v1855
    %v2161 = vpop.f32.mrf.mxu0
    %v2162 = vadd.f32 0.0, %v2161
    %2163 = vdwg.mxu0
    %v2164 = vadd.f32 %v2080, %v2102
    %v2165 = vadd.f32 %v2081, %v2122
    %v2166 = vadd.f32 %v2082, %v2142
    %v2167 = vadd.f32 %v2083, %v2162
    %v2168 = vxor.u32 %v2164, 2147483648
    %v2169 = vxor.u32 %v2165, 2147483648
    %v2170 = vxor.u32 %v2166, 2147483648
    %v2171 = vmul.f32 %v2168, 1.442695
    %v2172 = vpow.pop %v2171
    %v2173 = vmul.f32 %v2169, 1.442695
    %v2174 = vpow.pop %v2173
    %v2175 = vmul.f32 %v2170, 1.442695
    %v2176 = vpow.pop %v2175
    %v2177 = vadd.f32 %v2172, 1.0
    %v2178 = vadd.f32 %v2174, 1.0
    %v2179 = vadd.f32 %v2176, 1.0
    %v2180 = vrcp.pop %v2177
    %v2181 = vmul.f32 %v2177, %v2180
    %v2182 = vsub.f32 1.0, %v2181
    %v2183 = vmul.f32 %v2180, %v2182
    %v2184 = vadd.f32 %v2180, %v2183
    %vm2185 = vweird.f32 %v2177
    %vm2186 = vweird.f32 %v2180
    %vm2187 = vmor %vm2185, %vm2186
    %v2188 = vsel %vm2187, %v2180, %v2184
    %v2189 = vand.u32 2147483647, %v2177
    %vm2190 = vcmp.eq.f32.partialorder %v2189, 8.507059e+37
    %v2191 = vand.u32 %v2177, 2147483648
    %v2192 = vor.u32 1.1754944e-38, %v2191
    %v2193 = vsel %vm2190, %v2192, %v2188
    %v2194 = vmul.f32 1.0, %v2193
    %v2195 = vrcp.pop %v2178
    %v2196 = vmul.f32 %v2178, %v2195
    %v2197 = vsub.f32 1.0, %v2196
    %v2198 = vmul.f32 %v2195, %v2197
    %v2199 = vadd.f32 %v2195, %v2198
    %vm2200 = vweird.f32 %v2178
    %vm2201 = vweird.f32 %v2195
    %vm2202 = vmor %vm2200, %vm2201
    %v2203 = vsel %vm2202, %v2195, %v2199
    %v2204 = vand.u32 2147483647, %v2178
    %vm2205 = vcmp.eq.f32.partialorder %v2204, 8.507059e+37
    %v2206 = vand.u32 %v2178, 2147483648
    %v2207 = vor.u32 1.1754944e-38, %v2206
    %v2208 = vsel %vm2205, %v2207, %v2203
    %v2209 = vmul.f32 1.0, %v2208
    %v2210 = vrcp.pop %v2179
    %v2211 = vmul.f32 %v2179, %v2210
    %v2212 = vsub.f32 1.0, %v2211
    %v2213 = vmul.f32 %v2210, %v2212
    %v2214 = vadd.f32 %v2210, %v2213
    %vm2215 = vweird.f32 %v2179
    %vm2216 = vweird.f32 %v2210
    %vm2217 = vmor %vm2215, %vm2216
    %v2218 = vsel %vm2217, %v2210, %v2214
    %v2219 = vand.u32 2147483647, %v2179
    %vm2220 = vcmp.eq.f32.partialorder %v2219, 8.507059e+37
    %v2221 = vand.u32 %v2179, 2147483648
    %v2222 = vor.u32 1.1754944e-38, %v2221
    %v2223 = vsel %vm2220, %v2222, %v2218
    %v2224 = vmul.f32 1.0, %v2223
    %v2225 = vtanh.pop %v2167
    %v2226 = vmul.f32 %v2209, %v1853
    %v2227 = vmul.f32 %v2194, %v2225
    %v2228 = vadd.f32 %v2226, %v2227
    %v2229 = vtanh.pop %v2228
    %v2230 = vmul.f32 %v2224, %v2229
    %2231 = vmatpush.msra.mxu0 %v502
    %2232 = vmatpush.msra.mxu0 %v498
    %2233 = vmatpush.msra.mxu0 %v494
    %2234 = vmatpush.msra.mxu0 %v490
    %2235 = vmatpush.msra.mxu0 %v486
    %2236 = vmatpush.msra.mxu0 %v482
    %2237 = vmatpush.msra.mxu0 %v478
    %2238 = vmatpush.msra.mxu0 %v474
    %2239 = vmatpush.msra.mxu0 %v470
    %2240 = vmatpush.msra.mxu0 %v466
    %2241 = vmatpush.msra.mxu0 %v462
    %2242 = vmatpush.msra.mxu0 %v458
    %2243 = vmatpush.msra.mxu0 %v454
    %2244 = vmatpush.msra.mxu0 %v450
    %2245 = vmatpush.msra.mxu0 %v446
    %2246 = vmatpush.msra.mxu0 %v442
    %2247 = vmatmul.f32.gmra.mxu0 %v2230
    %v2248 = vpop.f32.mrf.mxu0
    %v2249 = vadd.f32 %v723, %v2248
    %2250 = vdwg.mxu0
    %2251 = vmatpush.msra.mxu0 %v566
    %2252 = vmatpush.msra.mxu0 %v562
    %2253 = vmatpush.msra.mxu0 %v558
    %2254 = vmatpush.msra.mxu0 %v554
    %2255 = vmatpush.msra.mxu0 %v550
    %2256 = vmatpush.msra.mxu0 %v546
    %2257 = vmatpush.msra.mxu0 %v542
    %2258 = vmatpush.msra.mxu0 %v538
    %2259 = vmatpush.msra.mxu0 %v534
    %2260 = vmatpush.msra.mxu0 %v530
    %2261 = vmatpush.msra.mxu0 %v526
    %2262 = vmatpush.msra.mxu0 %v522
    %2263 = vmatpush.msra.mxu0 %v518
    %2264 = vmatpush.msra.mxu0 %v514
    %2265 = vmatpush.msra.mxu0 %v510
    %2266 = vmatpush.msra.mxu0 %v506
    %2267 = vmatmul.f32.gmra.mxu0 %v2078
    %v2268 = vpop.f32.mrf.mxu0
    %v2269 = vadd.f32 %v2249, %v2268
    %2270 = vdwg.mxu0
    %2271 = vmatpush.msra.mxu0 %v503
    %2272 = vmatpush.msra.mxu0 %v499
    %2273 = vmatpush.msra.mxu0 %v495
    %2274 = vmatpush.msra.mxu0 %v491
    %2275 = vmatpush.msra.mxu0 %v487
    %2276 = vmatpush.msra.mxu0 %v483
    %2277 = vmatpush.msra.mxu0 %v479
    %2278 = vmatpush.msra.mxu0 %v475
    %2279 = vmatpush.msra.mxu0 %v471
    %2280 = vmatpush.msra.mxu0 %v467
    %2281 = vmatpush.msra.mxu0 %v463
    %2282 = vmatpush.msra.mxu0 %v459
    %2283 = vmatpush.msra.mxu0 %v455
    %2284 = vmatpush.msra.mxu0 %v451
    %2285 = vmatpush.msra.mxu0 %v447
    %2286 = vmatpush.msra.mxu0 %v443
    %2287 = vmatmul.f32.gmra.mxu0 %v2230
    %v2288 = vpop.f32.mrf.mxu0
    %v2289 = vadd.f32 %v724, %v2288
    %2290 = vdwg.mxu0
    %2291 = vmatpush.msra.mxu0 %v567
    %2292 = vmatpush.msra.mxu0 %v563
    %2293 = vmatpush.msra.mxu0 %v559
    %2294 = vmatpush.msra.mxu0 %v555
    %2295 = vmatpush.msra.mxu0 %v551
    %2296 = vmatpush.msra.mxu0 %v547
    %2297 = vmatpush.msra.mxu0 %v543
    %2298 = vmatpush.msra.mxu0 %v539
    %2299 = vmatpush.msra.mxu0 %v535
    %2300 = vmatpush.msra.mxu0 %v531
    %2301 = vmatpush.msra.mxu0 %v527
    %2302 = vmatpush.msra.mxu0 %v523
    %2303 = vmatpush.msra.mxu0 %v519
    %2304 = vmatpush.msra.mxu0 %v515
    %2305 = vmatpush.msra.mxu0 %v511
    %2306 = vmatpush.msra.mxu0 %v507
    %2307 = vmatmul.f32.gmra.mxu0 %v2078
    %v2308 = vpop.f32.mrf.mxu0
    %v2309 = vadd.f32 %v2289, %v2308
    %2310 = vdwg.mxu0
    %2311 = vmatpush.msra.mxu0 %v504
    %2312 = vmatpush.msra.mxu0 %v500
    %2313 = vmatpush.msra.mxu0 %v496
    %2314 = vmatpush.msra.mxu0 %v492
    %2315 = vmatpush.msra.mxu0 %v488
    %2316 = vmatpush.msra.mxu0 %v484
    %2317 = vmatpush.msra.mxu0 %v480
    %2318 = vmatpush.msra.mxu0 %v476
    %2319 = vmatpush.msra.mxu0 %v472
    %2320 = vmatpush.msra.mxu0 %v468
    %2321 = vmatpush.msra.mxu0 %v464
    %2322 = vmatpush.msra.mxu0 %v460
    %2323 = vmatpush.msra.mxu0 %v456
    %2324 = vmatpush.msra.mxu0 %v452
    %2325 = vmatpush.msra.mxu0 %v448
    %2326 = vmatpush.msra.mxu0 %v444
    %2327 = vmatmul.f32.gmra.mxu0 %v2230
    %v2328 = vpop.f32.mrf.mxu0
    %v2329 = vadd.f32 %v725, %v2328
    %2330 = vdwg.mxu0
    %2331 = vmatpush.msra.mxu0 %v568
    %2332 = vmatpush.msra.mxu0 %v564
    %2333 = vmatpush.msra.mxu0 %v560
    %2334 = vmatpush.msra.mxu0 %v556
    %2335 = vmatpush.msra.mxu0 %v552
    %2336 = vmatpush.msra.mxu0 %v548
    %2337 = vmatpush.msra.mxu0 %v544
    %2338 = vmatpush.msra.mxu0 %v540
    %2339 = vmatpush.msra.mxu0 %v536
    %2340 = vmatpush.msra.mxu0 %v532
    %2341 = vmatpush.msra.mxu0 %v528
    %2342 = vmatpush.msra.mxu0 %v524
    %2343 = vmatpush.msra.mxu0 %v520
    %2344 = vmatpush.msra.mxu0 %v516
    %2345 = vmatpush.msra.mxu0 %v512
    %2346 = vmatpush.msra.mxu0 %v508
    %2347 = vmatmul.f32.gmra.mxu0 %v2078
    %v2348 = vpop.f32.mrf.mxu0
    %v2349 = vadd.f32 %v2329, %v2348
    %2350 = vdwg.mxu0
    %2351 = vmatpush.msra.mxu0 %v505
    %2352 = vmatpush.msra.mxu0 %v501
    %2353 = vmatpush.msra.mxu0 %v497
    %2354 = vmatpush.msra.mxu0 %v493
    %2355 = vmatpush.msra.mxu0 %v489
    %2356 = vmatpush.msra.mxu0 %v485
    %2357 = vmatpush.msra.mxu0 %v481
    %2358 = vmatpush.msra.mxu0 %v477
    %2359 = vmatpush.msra.mxu0 %v473
    %2360 = vmatpush.msra.mxu0 %v469
    %2361 = vmatpush.msra.mxu0 %v465
    %2362 = vmatpush.msra.mxu0 %v461
    %2363 = vmatpush.msra.mxu0 %v457
    %2364 = vmatpush.msra.mxu0 %v453
    %2365 = vmatpush.msra.mxu0 %v449
    %2366 = vmatpush.msra.mxu0 %v445
    %2367 = vmatmul.f32.gmra.mxu0 %v2230
    %v2368 = vpop.f32.mrf.mxu0
    %v2369 = vadd.f32 %v726, %v2368
    %2370 = vdwg.mxu0
    %2371 = vmatpush.msra.mxu0 %v569
    %2372 = vmatpush.msra.mxu0 %v565
    %2373 = vmatpush.msra.mxu0 %v561
    %2374 = vmatpush.msra.mxu0 %v557
    %2375 = vmatpush.msra.mxu0 %v553
    %2376 = vmatpush.msra.mxu0 %v549
    %2377 = vmatpush.msra.mxu0 %v545
    %2378 = vmatpush.msra.mxu0 %v541
    %2379 = vmatpush.msra.mxu0 %v537
    %2380 = vmatpush.msra.mxu0 %v533
    %2381 = vmatpush.msra.mxu0 %v529
    %2382 = vmatpush.msra.mxu0 %v525
    %2383 = vmatpush.msra.mxu0 %v521
    %2384 = vmatpush.msra.mxu0 %v517
    %2385 = vmatpush.msra.mxu0 %v513
    %2386 = vmatpush.msra.mxu0 %v509
    %2387 = vmatmul.f32.gmra.mxu0 %v2078
    %v2388 = vpop.f32.mrf.mxu0
    %v2389 = vadd.f32 %v2369, %v2388
    %2390 = vdwg.mxu0
    %v2391 = vxor.u32 %v2269, 2147483648
    %v2392 = vxor.u32 %v2309, 2147483648
    %v2393 = vxor.u32 %v2349, 2147483648
    %v2394 = vmul.f32 %v2391, 1.442695
    %v2395 = vpow.pop %v2394
    %v2396 = vmul.f32 %v2392, 1.442695
    %v2397 = vpow.pop %v2396
    %v2398 = vmul.f32 %v2393, 1.442695
    %v2399 = vpow.pop %v2398
    %v2400 = vadd.f32 %v2395, 1.0
    %v2401 = vadd.f32 %v2397, 1.0
    %v2402 = vadd.f32 %v2399, 1.0
    %v2403 = vrcp.pop %v2400
    %v2404 = vmul.f32 %v2400, %v2403
    %v2405 = vsub.f32 1.0, %v2404
    %v2406 = vmul.f32 %v2403, %v2405
    %v2407 = vadd.f32 %v2403, %v2406
    %vm2408 = vweird.f32 %v2400
    %vm2409 = vweird.f32 %v2403
    %vm2410 = vmor %vm2408, %vm2409
    %v2411 = vsel %vm2410, %v2403, %v2407
    %v2412 = vand.u32 2147483647, %v2400
    %vm2413 = vcmp.eq.f32.partialorder %v2412, 8.507059e+37
    %v2414 = vand.u32 %v2400, 2147483648
    %v2415 = vor.u32 1.1754944e-38, %v2414
    %v2416 = vsel %vm2413, %v2415, %v2411
    %v2417 = vmul.f32 1.0, %v2416
    %v2418 = vrcp.pop %v2401
    %v2419 = vmul.f32 %v2401, %v2418
    %v2420 = vsub.f32 1.0, %v2419
    %v2421 = vmul.f32 %v2418, %v2420
    %v2422 = vadd.f32 %v2418, %v2421
    %vm2423 = vweird.f32 %v2401
    %vm2424 = vweird.f32 %v2418
    %vm2425 = vmor %vm2423, %vm2424
    %v2426 = vsel %vm2425, %v2418, %v2422
    %v2427 = vand.u32 2147483647, %v2401
    %vm2428 = vcmp.eq.f32.partialorder %v2427, 8.507059e+37
    %v2429 = vand.u32 %v2401, 2147483648
    %v2430 = vor.u32 1.1754944e-38, %v2429
    %v2431 = vsel %vm2428, %v2430, %v2426
    %v2432 = vmul.f32 1.0, %v2431
    %v2433 = vrcp.pop %v2402
    %v2434 = vmul.f32 %v2402, %v2433
    %v2435 = vsub.f32 1.0, %v2434
    %v2436 = vmul.f32 %v2433, %v2435
    %v2437 = vadd.f32 %v2433, %v2436
    %vm2438 = vweird.f32 %v2402
    %vm2439 = vweird.f32 %v2433
    %vm2440 = vmor %vm2438, %vm2439
    %v2441 = vsel %vm2440, %v2433, %v2437
    %v2442 = vand.u32 2147483647, %v2402
    %vm2443 = vcmp.eq.f32.partialorder %v2442, 8.507059e+37
    %v2444 = vand.u32 %v2402, 2147483648
    %v2445 = vor.u32 1.1754944e-38, %v2444
    %v2446 = vsel %vm2443, %v2445, %v2441
    %v2447 = vmul.f32 1.0, %v2446
    %v2448 = vtanh.pop %v2389
    %v2449 = vmul.f32 %v2432, %v2076
    %v2450 = vmul.f32 %v2417, %v2448
    %v2451 = vadd.f32 %v2449, %v2450
    %v2452 = vtanh.pop %v2451
    %v2453 = vmul.f32 %v2447, %v2452
    %s2454 = scalar_lea.vmem [#allocation2], 160
    %v2455 = vld [vmem:[%s2454] sm:$0xff]
    %v2456 = vld [vmem:[%s2454 + $0x8] sm:$0xff]
    %v2457 = vld [vmem:[%s2454 + $0x10] sm:$0xff]
    %v2458 = vld [vmem:[%s2454 + $0x18] sm:$0xff]
    %2459 = vmatpush.msra.mxu0 %v438
    %2460 = vmatpush.msra.mxu0 %v434
    %2461 = vmatpush.msra.mxu0 %v430
    %2462 = vmatpush.msra.mxu0 %v426
    %2463 = vmatpush.msra.mxu0 %v422
    %2464 = vmatpush.msra.mxu0 %v418
    %2465 = vmatpush.msra.mxu0 %v414
    %2466 = vmatpush.msra.mxu0 %v410
    %2467 = vmatpush.msra.mxu0 %v406
    %2468 = vmatpush.msra.mxu0 %v402
    %2469 = vmatpush.msra.mxu0 %v398
    %2470 = vmatpush.msra.mxu0 %v394
    %2471 = vmatpush.msra.mxu0 %v390
    %2472 = vmatpush.msra.mxu0 %v386
    %2473 = vmatpush.msra.mxu0 %v382
    %2474 = vmatpush.msra.mxu0 %v378
    %2475 = vmatmul.f32.gmra.mxu0 %v2230
    %v2476 = vpop.f32.mrf.mxu0
    %v2477 = vadd.f32 0.0, %v2476
    %2478 = vdwg.mxu0
    %2479 = vmatpush.msra.mxu0 %v439
    %2480 = vmatpush.msra.mxu0 %v435
    %2481 = vmatpush.msra.mxu0 %v431
    %2482 = vmatpush.msra.mxu0 %v427
    %2483 = vmatpush.msra.mxu0 %v423
    %2484 = vmatpush.msra.mxu0 %v419
    %2485 = vmatpush.msra.mxu0 %v415
    %2486 = vmatpush.msra.mxu0 %v411
    %2487 = vmatpush.msra.mxu0 %v407
    %2488 = vmatpush.msra.mxu0 %v403
    %2489 = vmatpush.msra.mxu0 %v399
    %2490 = vmatpush.msra.mxu0 %v395
    %2491 = vmatpush.msra.mxu0 %v391
    %2492 = vmatpush.msra.mxu0 %v387
    %2493 = vmatpush.msra.mxu0 %v383
    %2494 = vmatpush.msra.mxu0 %v379
    %2495 = vmatmul.f32.gmra.mxu0 %v2230
    %v2496 = vpop.f32.mrf.mxu0
    %v2497 = vadd.f32 0.0, %v2496
    %2498 = vdwg.mxu0
    %2499 = vmatpush.msra.mxu0 %v440
    %2500 = vmatpush.msra.mxu0 %v436
    %2501 = vmatpush.msra.mxu0 %v432
    %2502 = vmatpush.msra.mxu0 %v428
    %2503 = vmatpush.msra.mxu0 %v424
    %2504 = vmatpush.msra.mxu0 %v420
    %2505 = vmatpush.msra.mxu0 %v416
    %2506 = vmatpush.msra.mxu0 %v412
    %2507 = vmatpush.msra.mxu0 %v408
    %2508 = vmatpush.msra.mxu0 %v404
    %2509 = vmatpush.msra.mxu0 %v400
    %2510 = vmatpush.msra.mxu0 %v396
    %2511 = vmatpush.msra.mxu0 %v392
    %2512 = vmatpush.msra.mxu0 %v388
    %2513 = vmatpush.msra.mxu0 %v384
    %2514 = vmatpush.msra.mxu0 %v380
    %2515 = vmatmul.f32.gmra.mxu0 %v2230
    %v2516 = vpop.f32.mrf.mxu0
    %v2517 = vadd.f32 0.0, %v2516
    %2518 = vdwg.mxu0
    %2519 = vmatpush.msra.mxu0 %v441
    %2520 = vmatpush.msra.mxu0 %v437
    %2521 = vmatpush.msra.mxu0 %v433
    %2522 = vmatpush.msra.mxu0 %v429
    %2523 = vmatpush.msra.mxu0 %v425
    %2524 = vmatpush.msra.mxu0 %v421
    %2525 = vmatpush.msra.mxu0 %v417
    %2526 = vmatpush.msra.mxu0 %v413
    %2527 = vmatpush.msra.mxu0 %v409
    %2528 = vmatpush.msra.mxu0 %v405
    %2529 = vmatpush.msra.mxu0 %v401
    %2530 = vmatpush.msra.mxu0 %v397
    %2531 = vmatpush.msra.mxu0 %v393
    %2532 = vmatpush.msra.mxu0 %v389
    %2533 = vmatpush.msra.mxu0 %v385
    %2534 = vmatpush.msra.mxu0 %v381
    %2535 = vmatmul.f32.gmra.mxu0 %v2230
    %v2536 = vpop.f32.mrf.mxu0
    %v2537 = vadd.f32 0.0, %v2536
    %2538 = vdwg.mxu0
    %v2539 = vadd.f32 %v2455, %v2477
    %v2540 = vadd.f32 %v2456, %v2497
    %v2541 = vadd.f32 %v2457, %v2517
    %v2542 = vadd.f32 %v2458, %v2537
    %v2543 = vxor.u32 %v2539, 2147483648
    %v2544 = vxor.u32 %v2540, 2147483648
    %v2545 = vxor.u32 %v2541, 2147483648
    %v2546 = vmul.f32 %v2543, 1.442695
    %v2547 = vpow.pop %v2546
    %v2548 = vmul.f32 %v2544, 1.442695
    %v2549 = vpow.pop %v2548
    %v2550 = vmul.f32 %v2545, 1.442695
    %v2551 = vpow.pop %v2550
    %v2552 = vadd.f32 %v2547, 1.0
    %v2553 = vadd.f32 %v2549, 1.0
    %v2554 = vadd.f32 %v2551, 1.0
    %v2555 = vrcp.pop %v2552
    %v2556 = vmul.f32 %v2552, %v2555
    %v2557 = vsub.f32 1.0, %v2556
    %v2558 = vmul.f32 %v2555, %v2557
    %v2559 = vadd.f32 %v2555, %v2558
    %vm2560 = vweird.f32 %v2552
    %vm2561 = vweird.f32 %v2555
    %vm2562 = vmor %vm2560, %vm2561
    %v2563 = vsel %vm2562, %v2555, %v2559
    %v2564 = vand.u32 2147483647, %v2552
    %vm2565 = vcmp.eq.f32.partialorder %v2564, 8.507059e+37
    %v2566 = vand.u32 %v2552, 2147483648
    %v2567 = vor.u32 1.1754944e-38, %v2566
    %v2568 = vsel %vm2565, %v2567, %v2563
    %v2569 = vmul.f32 1.0, %v2568
    %v2570 = vrcp.pop %v2553
    %v2571 = vmul.f32 %v2553, %v2570
    %v2572 = vsub.f32 1.0, %v2571
    %v2573 = vmul.f32 %v2570, %v2572
    %v2574 = vadd.f32 %v2570, %v2573
    %vm2575 = vweird.f32 %v2553
    %vm2576 = vweird.f32 %v2570
    %vm2577 = vmor %vm2575, %vm2576
    %v2578 = vsel %vm2577, %v2570, %v2574
    %v2579 = vand.u32 2147483647, %v2553
    %vm2580 = vcmp.eq.f32.partialorder %v2579, 8.507059e+37
    %v2581 = vand.u32 %v2553, 2147483648
    %v2582 = vor.u32 1.1754944e-38, %v2581
    %v2583 = vsel %vm2580, %v2582, %v2578
    %v2584 = vmul.f32 1.0, %v2583
    %v2585 = vrcp.pop %v2554
    %v2586 = vmul.f32 %v2554, %v2585
    %v2587 = vsub.f32 1.0, %v2586
    %v2588 = vmul.f32 %v2585, %v2587
    %v2589 = vadd.f32 %v2585, %v2588
    %vm2590 = vweird.f32 %v2554
    %vm2591 = vweird.f32 %v2585
    %vm2592 = vmor %vm2590, %vm2591
    %v2593 = vsel %vm2592, %v2585, %v2589
    %v2594 = vand.u32 2147483647, %v2554
    %vm2595 = vcmp.eq.f32.partialorder %v2594, 8.507059e+37
    %v2596 = vand.u32 %v2554, 2147483648
    %v2597 = vor.u32 1.1754944e-38, %v2596
    %v2598 = vsel %vm2595, %v2597, %v2593
    %v2599 = vmul.f32 1.0, %v2598
    %v2600 = vtanh.pop %v2542
    %v2601 = vmul.f32 %v2584, %v2228
    %v2602 = vmul.f32 %v2569, %v2600
    %v2603 = vadd.f32 %v2601, %v2602
    %v2604 = vtanh.pop %v2603
    %v2605 = vmul.f32 %v2599, %v2604
    %2606 = vmatpush.msra.mxu0 %v502
    %2607 = vmatpush.msra.mxu0 %v498
    %2608 = vmatpush.msra.mxu0 %v494
    %2609 = vmatpush.msra.mxu0 %v490
    %2610 = vmatpush.msra.mxu0 %v486
    %2611 = vmatpush.msra.mxu0 %v482
    %2612 = vmatpush.msra.mxu0 %v478
    %2613 = vmatpush.msra.mxu0 %v474
    %2614 = vmatpush.msra.mxu0 %v470
    %2615 = vmatpush.msra.mxu0 %v466
    %2616 = vmatpush.msra.mxu0 %v462
    %2617 = vmatpush.msra.mxu0 %v458
    %2618 = vmatpush.msra.mxu0 %v454
    %2619 = vmatpush.msra.mxu0 %v450
    %2620 = vmatpush.msra.mxu0 %v446
    %2621 = vmatpush.msra.mxu0 %v442
    %2622 = vmatmul.f32.gmra.mxu0 %v2605
    %v2623 = vpop.f32.mrf.mxu0
    %v2624 = vadd.f32 %v723, %v2623
    %2625 = vdwg.mxu0
    %2626 = vmatpush.msra.mxu0 %v566
    %2627 = vmatpush.msra.mxu0 %v562
    %2628 = vmatpush.msra.mxu0 %v558
    %2629 = vmatpush.msra.mxu0 %v554
    %2630 = vmatpush.msra.mxu0 %v550
    %2631 = vmatpush.msra.mxu0 %v546
    %2632 = vmatpush.msra.mxu0 %v542
    %2633 = vmatpush.msra.mxu0 %v538
    %2634 = vmatpush.msra.mxu0 %v534
    %2635 = vmatpush.msra.mxu0 %v530
    %2636 = vmatpush.msra.mxu0 %v526
    %2637 = vmatpush.msra.mxu0 %v522
    %2638 = vmatpush.msra.mxu0 %v518
    %2639 = vmatpush.msra.mxu0 %v514
    %2640 = vmatpush.msra.mxu0 %v510
    %2641 = vmatpush.msra.mxu0 %v506
    %2642 = vmatmul.f32.gmra.mxu0 %v2453
    %v2643 = vpop.f32.mrf.mxu0
    %v2644 = vadd.f32 %v2624, %v2643
    %2645 = vdwg.mxu0
    %2646 = vmatpush.msra.mxu0 %v503
    %2647 = vmatpush.msra.mxu0 %v499
    %2648 = vmatpush.msra.mxu0 %v495
    %2649 = vmatpush.msra.mxu0 %v491
    %2650 = vmatpush.msra.mxu0 %v487
    %2651 = vmatpush.msra.mxu0 %v483
    %2652 = vmatpush.msra.mxu0 %v479
    %2653 = vmatpush.msra.mxu0 %v475
    %2654 = vmatpush.msra.mxu0 %v471
    %2655 = vmatpush.msra.mxu0 %v467
    %2656 = vmatpush.msra.mxu0 %v463
    %2657 = vmatpush.msra.mxu0 %v459
    %2658 = vmatpush.msra.mxu0 %v455
    %2659 = vmatpush.msra.mxu0 %v451
    %2660 = vmatpush.msra.mxu0 %v447
    %2661 = vmatpush.msra.mxu0 %v443
    %2662 = vmatmul.f32.gmra.mxu0 %v2605
    %v2663 = vpop.f32.mrf.mxu0
    %v2664 = vadd.f32 %v724, %v2663
    %2665 = vdwg.mxu0
    %2666 = vmatpush.msra.mxu0 %v567
    %2667 = vmatpush.msra.mxu0 %v563
    %2668 = vmatpush.msra.mxu0 %v559
    %2669 = vmatpush.msra.mxu0 %v555
    %2670 = vmatpush.msra.mxu0 %v551
    %2671 = vmatpush.msra.mxu0 %v547
    %2672 = vmatpush.msra.mxu0 %v543
    %2673 = vmatpush.msra.mxu0 %v539
    %2674 = vmatpush.msra.mxu0 %v535
    %2675 = vmatpush.msra.mxu0 %v531
    %2676 = vmatpush.msra.mxu0 %v527
    %2677 = vmatpush.msra.mxu0 %v523
    %2678 = vmatpush.msra.mxu0 %v519
    %2679 = vmatpush.msra.mxu0 %v515
    %2680 = vmatpush.msra.mxu0 %v511
    %2681 = vmatpush.msra.mxu0 %v507
    %2682 = vmatmul.f32.gmra.mxu0 %v2453
    %v2683 = vpop.f32.mrf.mxu0
    %v2684 = vadd.f32 %v2664, %v2683
    %2685 = vdwg.mxu0
    %2686 = vmatpush.msra.mxu0 %v504
    %2687 = vmatpush.msra.mxu0 %v500
    %2688 = vmatpush.msra.mxu0 %v496
    %2689 = vmatpush.msra.mxu0 %v492
    %2690 = vmatpush.msra.mxu0 %v488
    %2691 = vmatpush.msra.mxu0 %v484
    %2692 = vmatpush.msra.mxu0 %v480
    %2693 = vmatpush.msra.mxu0 %v476
    %2694 = vmatpush.msra.mxu0 %v472
    %2695 = vmatpush.msra.mxu0 %v468
    %2696 = vmatpush.msra.mxu0 %v464
    %2697 = vmatpush.msra.mxu0 %v460
    %2698 = vmatpush.msra.mxu0 %v456
    %2699 = vmatpush.msra.mxu0 %v452
    %2700 = vmatpush.msra.mxu0 %v448
    %2701 = vmatpush.msra.mxu0 %v444
    %2702 = vmatmul.f32.gmra.mxu0 %v2605
    %v2703 = vpop.f32.mrf.mxu0
    %v2704 = vadd.f32 %v725, %v2703
    %2705 = vdwg.mxu0
    %2706 = vmatpush.msra.mxu0 %v568
    %2707 = vmatpush.msra.mxu0 %v564
    %2708 = vmatpush.msra.mxu0 %v560
    %2709 = vmatpush.msra.mxu0 %v556
    %2710 = vmatpush.msra.mxu0 %v552
    %2711 = vmatpush.msra.mxu0 %v548
    %2712 = vmatpush.msra.mxu0 %v544
    %2713 = vmatpush.msra.mxu0 %v540
    %2714 = vmatpush.msra.mxu0 %v536
    %2715 = vmatpush.msra.mxu0 %v532
    %2716 = vmatpush.msra.mxu0 %v528
    %2717 = vmatpush.msra.mxu0 %v524
    %2718 = vmatpush.msra.mxu0 %v520
    %2719 = vmatpush.msra.mxu0 %v516
    %2720 = vmatpush.msra.mxu0 %v512
    %2721 = vmatpush.msra.mxu0 %v508
    %2722 = vmatmul.f32.gmra.mxu0 %v2453
    %v2723 = vpop.f32.mrf.mxu0
    %v2724 = vadd.f32 %v2704, %v2723
    %2725 = vdwg.mxu0
    %2726 = vmatpush.msra.mxu0 %v505
    %2727 = vmatpush.msra.mxu0 %v501
    %2728 = vmatpush.msra.mxu0 %v497
    %2729 = vmatpush.msra.mxu0 %v493
    %2730 = vmatpush.msra.mxu0 %v489
    %2731 = vmatpush.msra.mxu0 %v485
    %2732 = vmatpush.msra.mxu0 %v481
    %2733 = vmatpush.msra.mxu0 %v477
    %2734 = vmatpush.msra.mxu0 %v473
    %2735 = vmatpush.msra.mxu0 %v469
    %2736 = vmatpush.msra.mxu0 %v465
    %2737 = vmatpush.msra.mxu0 %v461
    %2738 = vmatpush.msra.mxu0 %v457
    %2739 = vmatpush.msra.mxu0 %v453
    %2740 = vmatpush.msra.mxu0 %v449
    %2741 = vmatpush.msra.mxu0 %v445
    %2742 = vmatmul.f32.gmra.mxu0 %v2605
    %v2743 = vpop.f32.mrf.mxu0
    %v2744 = vadd.f32 %v726, %v2743
    %2745 = vdwg.mxu0
    %2746 = vmatpush.msra.mxu0 %v569
    %2747 = vmatpush.msra.mxu0 %v565
    %2748 = vmatpush.msra.mxu0 %v561
    %2749 = vmatpush.msra.mxu0 %v557
    %2750 = vmatpush.msra.mxu0 %v553
    %2751 = vmatpush.msra.mxu0 %v549
    %2752 = vmatpush.msra.mxu0 %v545
    %2753 = vmatpush.msra.mxu0 %v541
    %2754 = vmatpush.msra.mxu0 %v537
    %2755 = vmatpush.msra.mxu0 %v533
    %2756 = vmatpush.msra.mxu0 %v529
    %2757 = vmatpush.msra.mxu0 %v525
    %2758 = vmatpush.msra.mxu0 %v521
    %2759 = vmatpush.msra.mxu0 %v517
    %2760 = vmatpush.msra.mxu0 %v513
    %2761 = vmatpush.msra.mxu0 %v509
    %2762 = vmatmul.f32.gmra.mxu0 %v2453
    %v2763 = vpop.f32.mrf.mxu0
    %v2764 = vadd.f32 %v2744, %v2763
    %2765 = vdwg.mxu0
    %v2766 = vxor.u32 %v2644, 2147483648
    %v2767 = vxor.u32 %v2684, 2147483648
    %v2768 = vxor.u32 %v2724, 2147483648
    %v2769 = vmul.f32 %v2766, 1.442695
    %v2770 = vpow.pop %v2769
    %v2771 = vmul.f32 %v2767, 1.442695
    %v2772 = vpow.pop %v2771
    %v2773 = vmul.f32 %v2768, 1.442695
    %v2774 = vpow.pop %v2773
    %v2775 = vadd.f32 %v2770, 1.0
    %v2776 = vadd.f32 %v2772, 1.0
    %v2777 = vadd.f32 %v2774, 1.0
    %v2778 = vrcp.pop %v2775
    %v2779 = vmul.f32 %v2775, %v2778
    %v2780 = vsub.f32 1.0, %v2779
    %v2781 = vmul.f32 %v2778, %v2780
    %v2782 = vadd.f32 %v2778, %v2781
    %vm2783 = vweird.f32 %v2775
    %vm2784 = vweird.f32 %v2778
    %vm2785 = vmor %vm2783, %vm2784
    %v2786 = vsel %vm2785, %v2778, %v2782
    %v2787 = vand.u32 2147483647, %v2775
    %vm2788 = vcmp.eq.f32.partialorder %v2787, 8.507059e+37
    %v2789 = vand.u32 %v2775, 2147483648
    %v2790 = vor.u32 1.1754944e-38, %v2789
    %v2791 = vsel %vm2788, %v2790, %v2786
    %v2792 = vmul.f32 1.0, %v2791
    %v2793 = vrcp.pop %v2776
    %v2794 = vmul.f32 %v2776, %v2793
    %v2795 = vsub.f32 1.0, %v2794
    %v2796 = vmul.f32 %v2793, %v2795
    %v2797 = vadd.f32 %v2793, %v2796
    %vm2798 = vweird.f32 %v2776
    %vm2799 = vweird.f32 %v2793
    %vm2800 = vmor %vm2798, %vm2799
    %v2801 = vsel %vm2800, %v2793, %v2797
    %v2802 = vand.u32 2147483647, %v2776
    %vm2803 = vcmp.eq.f32.partialorder %v2802, 8.507059e+37
    %v2804 = vand.u32 %v2776, 2147483648
    %v2805 = vor.u32 1.1754944e-38, %v2804
    %v2806 = vsel %vm2803, %v2805, %v2801
    %v2807 = vmul.f32 1.0, %v2806
    %v2808 = vrcp.pop %v2777
    %v2809 = vmul.f32 %v2777, %v2808
    %v2810 = vsub.f32 1.0, %v2809
    %v2811 = vmul.f32 %v2808, %v2810
    %v2812 = vadd.f32 %v2808, %v2811
    %vm2813 = vweird.f32 %v2777
    %vm2814 = vweird.f32 %v2808
    %vm2815 = vmor %vm2813, %vm2814
    %v2816 = vsel %vm2815, %v2808, %v2812
    %v2817 = vand.u32 2147483647, %v2777
    %vm2818 = vcmp.eq.f32.partialorder %v2817, 8.507059e+37
    %v2819 = vand.u32 %v2777, 2147483648
    %v2820 = vor.u32 1.1754944e-38, %v2819
    %v2821 = vsel %vm2818, %v2820, %v2816
    %v2822 = vmul.f32 1.0, %v2821
    %v2823 = vtanh.pop %v2764
    %v2824 = vmul.f32 %v2807, %v2451
    %v2825 = vmul.f32 %v2792, %v2823
    %v2826 = vadd.f32 %v2824, %v2825
    %v2827 = vtanh.pop %v2826
    %v2828 = vmul.f32 %v2822, %v2827
    %s2829 = scalar_lea.vmem [#allocation2], 192
    %v2830 = vld [vmem:[%s2829] sm:$0xff]
    %v2831 = vld [vmem:[%s2829 + $0x8] sm:$0xff]
    %v2832 = vld [vmem:[%s2829 + $0x10] sm:$0xff]
    %v2833 = vld [vmem:[%s2829 + $0x18] sm:$0xff]
    %2834 = vmatpush.msra.mxu0 %v438
    %2835 = vmatpush.msra.mxu0 %v434
    %2836 = vmatpush.msra.mxu0 %v430
    %2837 = vmatpush.msra.mxu0 %v426
    %2838 = vmatpush.msra.mxu0 %v422
    %2839 = vmatpush.msra.mxu0 %v418
    %2840 = vmatpush.msra.mxu0 %v414
    %2841 = vmatpush.msra.mxu0 %v410
    %2842 = vmatpush.msra.mxu0 %v406
    %2843 = vmatpush.msra.mxu0 %v402
    %2844 = vmatpush.msra.mxu0 %v398
    %2845 = vmatpush.msra.mxu0 %v394
    %2846 = vmatpush.msra.mxu0 %v390
    %2847 = vmatpush.msra.mxu0 %v386
    %2848 = vmatpush.msra.mxu0 %v382
    %2849 = vmatpush.msra.mxu0 %v378
    %2850 = vmatmul.f32.gmra.mxu0 %v2605
    %v2851 = vpop.f32.mrf.mxu0
    %v2852 = vadd.f32 0.0, %v2851
    %2853 = vdwg.mxu0
    %2854 = vmatpush.msra.mxu0 %v439
    %2855 = vmatpush.msra.mxu0 %v435
    %2856 = vmatpush.msra.mxu0 %v431
    %2857 = vmatpush.msra.mxu0 %v427
    %2858 = vmatpush.msra.mxu0 %v423
    %2859 = vmatpush.msra.mxu0 %v419
    %2860 = vmatpush.msra.mxu0 %v415
    %2861 = vmatpush.msra.mxu0 %v411
    %2862 = vmatpush.msra.mxu0 %v407
    %2863 = vmatpush.msra.mxu0 %v403
    %2864 = vmatpush.msra.mxu0 %v399
    %2865 = vmatpush.msra.mxu0 %v395
    %2866 = vmatpush.msra.mxu0 %v391
    %2867 = vmatpush.msra.mxu0 %v387
    %2868 = vmatpush.msra.mxu0 %v383
    %2869 = vmatpush.msra.mxu0 %v379
    %2870 = vmatmul.f32.gmra.mxu0 %v2605
    %v2871 = vpop.f32.mrf.mxu0
    %v2872 = vadd.f32 0.0, %v2871
    %2873 = vdwg.mxu0
    %2874 = vmatpush.msra.mxu0 %v440
    %2875 = vmatpush.msra.mxu0 %v436
    %2876 = vmatpush.msra.mxu0 %v432
    %2877 = vmatpush.msra.mxu0 %v428
    %2878 = vmatpush.msra.mxu0 %v424
    %2879 = vmatpush.msra.mxu0 %v420
    %2880 = vmatpush.msra.mxu0 %v416
    %2881 = vmatpush.msra.mxu0 %v412
    %2882 = vmatpush.msra.mxu0 %v408
    %2883 = vmatpush.msra.mxu0 %v404
    %2884 = vmatpush.msra.mxu0 %v400
    %2885 = vmatpush.msra.mxu0 %v396
    %2886 = vmatpush.msra.mxu0 %v392
    %2887 = vmatpush.msra.mxu0 %v388
    %2888 = vmatpush.msra.mxu0 %v384
    %2889 = vmatpush.msra.mxu0 %v380
    %2890 = vmatmul.f32.gmra.mxu0 %v2605
    %v2891 = vpop.f32.mrf.mxu0
    %v2892 = vadd.f32 0.0, %v2891
    %2893 = vdwg.mxu0
    %2894 = vmatpush.msra.mxu0 %v441
    %2895 = vmatpush.msra.mxu0 %v437
    %2896 = vmatpush.msra.mxu0 %v433
    %2897 = vmatpush.msra.mxu0 %v429
    %2898 = vmatpush.msra.mxu0 %v425
    %2899 = vmatpush.msra.mxu0 %v421
    %2900 = vmatpush.msra.mxu0 %v417
    %2901 = vmatpush.msra.mxu0 %v413
    %2902 = vmatpush.msra.mxu0 %v409
    %2903 = vmatpush.msra.mxu0 %v405
    %2904 = vmatpush.msra.mxu0 %v401
    %2905 = vmatpush.msra.mxu0 %v397
    %2906 = vmatpush.msra.mxu0 %v393
    %2907 = vmatpush.msra.mxu0 %v389
    %2908 = vmatpush.msra.mxu0 %v385
    %2909 = vmatpush.msra.mxu0 %v381
    %2910 = vmatmul.f32.gmra.mxu0 %v2605
    %v2911 = vpop.f32.mrf.mxu0
    %v2912 = vadd.f32 0.0, %v2911
    %2913 = vdwg.mxu0
    %v2914 = vadd.f32 %v2830, %v2852
    %v2915 = vadd.f32 %v2831, %v2872
    %v2916 = vadd.f32 %v2832, %v2892
    %v2917 = vadd.f32 %v2833, %v2912
    %v2918 = vxor.u32 %v2914, 2147483648
    %v2919 = vxor.u32 %v2915, 2147483648
    %v2920 = vxor.u32 %v2916, 2147483648
    %v2921 = vmul.f32 %v2918, 1.442695
    %v2922 = vpow.pop %v2921
    %v2923 = vmul.f32 %v2919, 1.442695
    %v2924 = vpow.pop %v2923
    %v2925 = vmul.f32 %v2920, 1.442695
    %v2926 = vpow.pop %v2925
    %v2927 = vadd.f32 %v2922, 1.0
    %v2928 = vadd.f32 %v2924, 1.0
    %v2929 = vadd.f32 %v2926, 1.0
    %v2930 = vrcp.pop %v2927
    %v2931 = vmul.f32 %v2927, %v2930
    %v2932 = vsub.f32 1.0, %v2931
    %v2933 = vmul.f32 %v2930, %v2932
    %v2934 = vadd.f32 %v2930, %v2933
    %vm2935 = vweird.f32 %v2927
    %vm2936 = vweird.f32 %v2930
    %vm2937 = vmor %vm2935, %vm2936
    %v2938 = vsel %vm2937, %v2930, %v2934
    %v2939 = vand.u32 2147483647, %v2927
    %vm2940 = vcmp.eq.f32.partialorder %v2939, 8.507059e+37
    %v2941 = vand.u32 %v2927, 2147483648
    %v2942 = vor.u32 1.1754944e-38, %v2941
    %v2943 = vsel %vm2940, %v2942, %v2938
    %v2944 = vmul.f32 1.0, %v2943
    %v2945 = vrcp.pop %v2928
    %v2946 = vmul.f32 %v2928, %v2945
    %v2947 = vsub.f32 1.0, %v2946
    %v2948 = vmul.f32 %v2945, %v2947
    %v2949 = vadd.f32 %v2945, %v2948
    %vm2950 = vweird.f32 %v2928
    %vm2951 = vweird.f32 %v2945
    %vm2952 = vmor %vm2950, %vm2951
    %v2953 = vsel %vm2952, %v2945, %v2949
    %v2954 = vand.u32 2147483647, %v2928
    %vm2955 = vcmp.eq.f32.partialorder %v2954, 8.507059e+37
    %v2956 = vand.u32 %v2928, 2147483648
    %v2957 = vor.u32 1.1754944e-38, %v2956
    %v2958 = vsel %vm2955, %v2957, %v2953
    %v2959 = vmul.f32 1.0, %v2958
    %v2960 = vrcp.pop %v2929
    %v2961 = vmul.f32 %v2929, %v2960
    %v2962 = vsub.f32 1.0, %v2961
    %v2963 = vmul.f32 %v2960, %v2962
    %v2964 = vadd.f32 %v2960, %v2963
    %vm2965 = vweird.f32 %v2929
    %vm2966 = vweird.f32 %v2960
    %vm2967 = vmor %vm2965, %vm2966
    %v2968 = vsel %vm2967, %v2960, %v2964
    %v2969 = vand.u32 2147483647, %v2929
    %vm2970 = vcmp.eq.f32.partialorder %v2969, 8.507059e+37
    %v2971 = vand.u32 %v2929, 2147483648
    %v2972 = vor.u32 1.1754944e-38, %v2971
    %v2973 = vsel %vm2970, %v2972, %v2968
    %v2974 = vmul.f32 1.0, %v2973
    %v2975 = vtanh.pop %v2917
    %v2976 = vmul.f32 %v2959, %v2603
    %v2977 = vmul.f32 %v2944, %v2975
    %v2978 = vadd.f32 %v2976, %v2977
    %v2979 = vtanh.pop %v2978
    %v2980 = vmul.f32 %v2974, %v2979
    %2981 = vmatpush.msra.mxu0 %v502
    %2982 = vmatpush.msra.mxu0 %v498
    %2983 = vmatpush.msra.mxu0 %v494
    %2984 = vmatpush.msra.mxu0 %v490
    %2985 = vmatpush.msra.mxu0 %v486
    %2986 = vmatpush.msra.mxu0 %v482
    %2987 = vmatpush.msra.mxu0 %v478
    %2988 = vmatpush.msra.mxu0 %v474
    %2989 = vmatpush.msra.mxu0 %v470
    %2990 = vmatpush.msra.mxu0 %v466
    %2991 = vmatpush.msra.mxu0 %v462
    %2992 = vmatpush.msra.mxu0 %v458
    %2993 = vmatpush.msra.mxu0 %v454
    %2994 = vmatpush.msra.mxu0 %v450
    %2995 = vmatpush.msra.mxu0 %v446
    %2996 = vmatpush.msra.mxu0 %v442
    %2997 = vmatmul.f32.gmra.mxu0 %v2980
    %v2998 = vpop.f32.mrf.mxu0
    %v2999 = vadd.f32 %v723, %v2998
    %3000 = vdwg.mxu0
    %3001 = vmatpush.msra.mxu0 %v566
    %3002 = vmatpush.msra.mxu0 %v562
    %3003 = vmatpush.msra.mxu0 %v558
    %3004 = vmatpush.msra.mxu0 %v554
    %3005 = vmatpush.msra.mxu0 %v550
    %3006 = vmatpush.msra.mxu0 %v546
    %3007 = vmatpush.msra.mxu0 %v542
    %3008 = vmatpush.msra.mxu0 %v538
    %3009 = vmatpush.msra.mxu0 %v534
    %3010 = vmatpush.msra.mxu0 %v530
    %3011 = vmatpush.msra.mxu0 %v526
    %3012 = vmatpush.msra.mxu0 %v522
    %3013 = vmatpush.msra.mxu0 %v518
    %3014 = vmatpush.msra.mxu0 %v514
    %3015 = vmatpush.msra.mxu0 %v510
    %3016 = vmatpush.msra.mxu0 %v506
    %3017 = vmatmul.f32.gmra.mxu0 %v2828
    %v3018 = vpop.f32.mrf.mxu0
    %v3019 = vadd.f32 %v2999, %v3018
    %3020 = vdwg.mxu0
    %3021 = vmatpush.msra.mxu0 %v503
    %3022 = vmatpush.msra.mxu0 %v499
    %3023 = vmatpush.msra.mxu0 %v495
    %3024 = vmatpush.msra.mxu0 %v491
    %3025 = vmatpush.msra.mxu0 %v487
    %3026 = vmatpush.msra.mxu0 %v483
    %3027 = vmatpush.msra.mxu0 %v479
    %3028 = vmatpush.msra.mxu0 %v475
    %3029 = vmatpush.msra.mxu0 %v471
    %3030 = vmatpush.msra.mxu0 %v467
    %3031 = vmatpush.msra.mxu0 %v463
    %3032 = vmatpush.msra.mxu0 %v459
    %3033 = vmatpush.msra.mxu0 %v455
    %3034 = vmatpush.msra.mxu0 %v451
    %3035 = vmatpush.msra.mxu0 %v447
    %3036 = vmatpush.msra.mxu0 %v443
    %3037 = vmatmul.f32.gmra.mxu0 %v2980
    %v3038 = vpop.f32.mrf.mxu0
    %v3039 = vadd.f32 %v724, %v3038
    %3040 = vdwg.mxu0
    %3041 = vmatpush.msra.mxu0 %v567
    %3042 = vmatpush.msra.mxu0 %v563
    %3043 = vmatpush.msra.mxu0 %v559
    %3044 = vmatpush.msra.mxu0 %v555
    %3045 = vmatpush.msra.mxu0 %v551
    %3046 = vmatpush.msra.mxu0 %v547
    %3047 = vmatpush.msra.mxu0 %v543
    %3048 = vmatpush.msra.mxu0 %v539
    %3049 = vmatpush.msra.mxu0 %v535
    %3050 = vmatpush.msra.mxu0 %v531
    %3051 = vmatpush.msra.mxu0 %v527
    %3052 = vmatpush.msra.mxu0 %v523
    %3053 = vmatpush.msra.mxu0 %v519
    %3054 = vmatpush.msra.mxu0 %v515
    %3055 = vmatpush.msra.mxu0 %v511
    %3056 = vmatpush.msra.mxu0 %v507
    %3057 = vmatmul.f32.gmra.mxu0 %v2828
    %v3058 = vpop.f32.mrf.mxu0
    %v3059 = vadd.f32 %v3039, %v3058
    %3060 = vdwg.mxu0
    %3061 = vmatpush.msra.mxu0 %v504
    %3062 = vmatpush.msra.mxu0 %v500
    %3063 = vmatpush.msra.mxu0 %v496
    %3064 = vmatpush.msra.mxu0 %v492
    %3065 = vmatpush.msra.mxu0 %v488
    %3066 = vmatpush.msra.mxu0 %v484
    %3067 = vmatpush.msra.mxu0 %v480
    %3068 = vmatpush.msra.mxu0 %v476
    %3069 = vmatpush.msra.mxu0 %v472
    %3070 = vmatpush.msra.mxu0 %v468
    %3071 = vmatpush.msra.mxu0 %v464
    %3072 = vmatpush.msra.mxu0 %v460
    %3073 = vmatpush.msra.mxu0 %v456
    %3074 = vmatpush.msra.mxu0 %v452
    %3075 = vmatpush.msra.mxu0 %v448
    %3076 = vmatpush.msra.mxu0 %v444
    %3077 = vmatmul.f32.gmra.mxu0 %v2980
    %v3078 = vpop.f32.mrf.mxu0
    %v3079 = vadd.f32 %v725, %v3078
    %3080 = vdwg.mxu0
    %3081 = vmatpush.msra.mxu0 %v568
    %3082 = vmatpush.msra.mxu0 %v564
    %3083 = vmatpush.msra.mxu0 %v560
    %3084 = vmatpush.msra.mxu0 %v556
    %3085 = vmatpush.msra.mxu0 %v552
    %3086 = vmatpush.msra.mxu0 %v548
    %3087 = vmatpush.msra.mxu0 %v544
    %3088 = vmatpush.msra.mxu0 %v540
    %3089 = vmatpush.msra.mxu0 %v536
    %3090 = vmatpush.msra.mxu0 %v532
    %3091 = vmatpush.msra.mxu0 %v528
    %3092 = vmatpush.msra.mxu0 %v524
    %3093 = vmatpush.msra.mxu0 %v520
    %3094 = vmatpush.msra.mxu0 %v516
    %3095 = vmatpush.msra.mxu0 %v512
    %3096 = vmatpush.msra.mxu0 %v508
    %3097 = vmatmul.f32.gmra.mxu0 %v2828
    %v3098 = vpop.f32.mrf.mxu0
    %v3099 = vadd.f32 %v3079, %v3098
    %3100 = vdwg.mxu0
    %3101 = vmatpush.msra.mxu0 %v505
    %3102 = vmatpush.msra.mxu0 %v501
    %3103 = vmatpush.msra.mxu0 %v497
    %3104 = vmatpush.msra.mxu0 %v493
    %3105 = vmatpush.msra.mxu0 %v489
    %3106 = vmatpush.msra.mxu0 %v485
    %3107 = vmatpush.msra.mxu0 %v481
    %3108 = vmatpush.msra.mxu0 %v477
    %3109 = vmatpush.msra.mxu0 %v473
    %3110 = vmatpush.msra.mxu0 %v469
    %3111 = vmatpush.msra.mxu0 %v465
    %3112 = vmatpush.msra.mxu0 %v461
    %3113 = vmatpush.msra.mxu0 %v457
    %3114 = vmatpush.msra.mxu0 %v453
    %3115 = vmatpush.msra.mxu0 %v449
    %3116 = vmatpush.msra.mxu0 %v445
    %3117 = vmatmul.f32.gmra.mxu0 %v2980
    %v3118 = vpop.f32.mrf.mxu0
    %v3119 = vadd.f32 %v726, %v3118
    %3120 = vdwg.mxu0
    %3121 = vmatpush.msra.mxu0 %v569
    %3122 = vmatpush.msra.mxu0 %v565
    %3123 = vmatpush.msra.mxu0 %v561
    %3124 = vmatpush.msra.mxu0 %v557
    %3125 = vmatpush.msra.mxu0 %v553
    %3126 = vmatpush.msra.mxu0 %v549
    %3127 = vmatpush.msra.mxu0 %v545
    %3128 = vmatpush.msra.mxu0 %v541
    %3129 = vmatpush.msra.mxu0 %v537
    %3130 = vmatpush.msra.mxu0 %v533
    %3131 = vmatpush.msra.mxu0 %v529
    %3132 = vmatpush.msra.mxu0 %v525
    %3133 = vmatpush.msra.mxu0 %v521
    %3134 = vmatpush.msra.mxu0 %v517
    %3135 = vmatpush.msra.mxu0 %v513
    %3136 = vmatpush.msra.mxu0 %v509
    %3137 = vmatmul.f32.gmra.mxu0 %v2828
    %v3138 = vpop.f32.mrf.mxu0
    %v3139 = vadd.f32 %v3119, %v3138
    %3140 = vdwg.mxu0
    %v3141 = vxor.u32 %v3019, 2147483648
    %v3142 = vxor.u32 %v3059, 2147483648
    %v3143 = vxor.u32 %v3099, 2147483648
    %v3144 = vmul.f32 %v3141, 1.442695
    %v3145 = vpow.pop %v3144
    %v3146 = vmul.f32 %v3142, 1.442695
    %v3147 = vpow.pop %v3146
    %v3148 = vmul.f32 %v3143, 1.442695
    %v3149 = vpow.pop %v3148
    %v3150 = vadd.f32 %v3145, 1.0
    %v3151 = vadd.f32 %v3147, 1.0
    %v3152 = vadd.f32 %v3149, 1.0
    %v3153 = vrcp.pop %v3150
    %v3154 = vmul.f32 %v3150, %v3153
    %v3155 = vsub.f32 1.0, %v3154
    %v3156 = vmul.f32 %v3153, %v3155
    %v3157 = vadd.f32 %v3153, %v3156
    %vm3158 = vweird.f32 %v3150
    %vm3159 = vweird.f32 %v3153
    %vm3160 = vmor %vm3158, %vm3159
    %v3161 = vsel %vm3160, %v3153, %v3157
    %v3162 = vand.u32 2147483647, %v3150
    %vm3163 = vcmp.eq.f32.partialorder %v3162, 8.507059e+37
    %v3164 = vand.u32 %v3150, 2147483648
    %v3165 = vor.u32 1.1754944e-38, %v3164
    %v3166 = vsel %vm3163, %v3165, %v3161
    %v3167 = vmul.f32 1.0, %v3166
    %v3168 = vrcp.pop %v3151
    %v3169 = vmul.f32 %v3151, %v3168
    %v3170 = vsub.f32 1.0, %v3169
    %v3171 = vmul.f32 %v3168, %v3170
    %v3172 = vadd.f32 %v3168, %v3171
    %vm3173 = vweird.f32 %v3151
    %vm3174 = vweird.f32 %v3168
    %vm3175 = vmor %vm3173, %vm3174
    %v3176 = vsel %vm3175, %v3168, %v3172
    %v3177 = vand.u32 2147483647, %v3151
    %vm3178 = vcmp.eq.f32.partialorder %v3177, 8.507059e+37
    %v3179 = vand.u32 %v3151, 2147483648
    %v3180 = vor.u32 1.1754944e-38, %v3179
    %v3181 = vsel %vm3178, %v3180, %v3176
    %v3182 = vmul.f32 1.0, %v3181
    %v3183 = vrcp.pop %v3152
    %v3184 = vmul.f32 %v3152, %v3183
    %v3185 = vsub.f32 1.0, %v3184
    %v3186 = vmul.f32 %v3183, %v3185
    %v3187 = vadd.f32 %v3183, %v3186
    %vm3188 = vweird.f32 %v3152
    %vm3189 = vweird.f32 %v3183
    %vm3190 = vmor %vm3188, %vm3189
    %v3191 = vsel %vm3190, %v3183, %v3187
    %v3192 = vand.u32 2147483647, %v3152
    %vm3193 = vcmp.eq.f32.partialorder %v3192, 8.507059e+37
    %v3194 = vand.u32 %v3152, 2147483648
    %v3195 = vor.u32 1.1754944e-38, %v3194
    %v3196 = vsel %vm3193, %v3195, %v3191
    %v3197 = vmul.f32 1.0, %v3196
    %v3198 = vtanh.pop %v3139
    %v3199 = vmul.f32 %v3182, %v2826
    %v3200 = vmul.f32 %v3167, %v3198
    %v3201 = vadd.f32 %v3199, %v3200
    %v3202 = vtanh.pop %v3201
    %v3203 = vmul.f32 %v3197, %v3202
    %s3204 = scalar_lea.vmem [#allocation2], 224
    %v3205 = vld [vmem:[%s3204] sm:$0xff]
    %v3206 = vld [vmem:[%s3204 + $0x8] sm:$0xff]
    %v3207 = vld [vmem:[%s3204 + $0x10] sm:$0xff]
    %v3208 = vld [vmem:[%s3204 + $0x18] sm:$0xff]
    %3209 = vmatpush.msra.mxu0 %v438
    %3210 = vmatpush.msra.mxu0 %v434
    %3211 = vmatpush.msra.mxu0 %v430
    %3212 = vmatpush.msra.mxu0 %v426
    %3213 = vmatpush.msra.mxu0 %v422
    %3214 = vmatpush.msra.mxu0 %v418
    %3215 = vmatpush.msra.mxu0 %v414
    %3216 = vmatpush.msra.mxu0 %v410
    %3217 = vmatpush.msra.mxu0 %v406
    %3218 = vmatpush.msra.mxu0 %v402
    %3219 = vmatpush.msra.mxu0 %v398
    %3220 = vmatpush.msra.mxu0 %v394
    %3221 = vmatpush.msra.mxu0 %v390
    %3222 = vmatpush.msra.mxu0 %v386
    %3223 = vmatpush.msra.mxu0 %v382
    %3224 = vmatpush.msra.mxu0 %v378
    %3225 = vmatmul.f32.gmra.mxu0 %v2980
    %v3226 = vpop.f32.mrf.mxu0
    %v3227 = vadd.f32 0.0, %v3226
    %3228 = vdwg.mxu0
    %3229 = vmatpush.msra.mxu0 %v439
    %3230 = vmatpush.msra.mxu0 %v435
    %3231 = vmatpush.msra.mxu0 %v431
    %3232 = vmatpush.msra.mxu0 %v427
    %3233 = vmatpush.msra.mxu0 %v423
    %3234 = vmatpush.msra.mxu0 %v419
    %3235 = vmatpush.msra.mxu0 %v415
    %3236 = vmatpush.msra.mxu0 %v411
    %3237 = vmatpush.msra.mxu0 %v407
    %3238 = vmatpush.msra.mxu0 %v403
    %3239 = vmatpush.msra.mxu0 %v399
    %3240 = vmatpush.msra.mxu0 %v395
    %3241 = vmatpush.msra.mxu0 %v391
    %3242 = vmatpush.msra.mxu0 %v387
    %3243 = vmatpush.msra.mxu0 %v383
    %3244 = vmatpush.msra.mxu0 %v379
    %3245 = vmatmul.f32.gmra.mxu0 %v2980
    %v3246 = vpop.f32.mrf.mxu0
    %v3247 = vadd.f32 0.0, %v3246
    %3248 = vdwg.mxu0
    %3249 = vmatpush.msra.mxu0 %v440
    %3250 = vmatpush.msra.mxu0 %v436
    %3251 = vmatpush.msra.mxu0 %v432
    %3252 = vmatpush.msra.mxu0 %v428
    %3253 = vmatpush.msra.mxu0 %v424
    %3254 = vmatpush.msra.mxu0 %v420
    %3255 = vmatpush.msra.mxu0 %v416
    %3256 = vmatpush.msra.mxu0 %v412
    %3257 = vmatpush.msra.mxu0 %v408
    %3258 = vmatpush.msra.mxu0 %v404
    %3259 = vmatpush.msra.mxu0 %v400
    %3260 = vmatpush.msra.mxu0 %v396
    %3261 = vmatpush.msra.mxu0 %v392
    %3262 = vmatpush.msra.mxu0 %v388
    %3263 = vmatpush.msra.mxu0 %v384
    %3264 = vmatpush.msra.mxu0 %v380
    %3265 = vmatmul.f32.gmra.mxu0 %v2980
    %v3266 = vpop.f32.mrf.mxu0
    %v3267 = vadd.f32 0.0, %v3266
    %3268 = vdwg.mxu0
    %3269 = vmatpush.msra.mxu0 %v441
    %3270 = vmatpush.msra.mxu0 %v437
    %3271 = vmatpush.msra.mxu0 %v433
    %3272 = vmatpush.msra.mxu0 %v429
    %3273 = vmatpush.msra.mxu0 %v425
    %3274 = vmatpush.msra.mxu0 %v421
    %3275 = vmatpush.msra.mxu0 %v417
    %3276 = vmatpush.msra.mxu0 %v413
    %3277 = vmatpush.msra.mxu0 %v409
    %3278 = vmatpush.msra.mxu0 %v405
    %3279 = vmatpush.msra.mxu0 %v401
    %3280 = vmatpush.msra.mxu0 %v397
    %3281 = vmatpush.msra.mxu0 %v393
    %3282 = vmatpush.msra.mxu0 %v389
    %3283 = vmatpush.msra.mxu0 %v385
    %3284 = vmatpush.msra.mxu0 %v381
    %3285 = vmatmul.f32.gmra.mxu0 %v2980
    %v3286 = vpop.f32.mrf.mxu0
    %v3287 = vadd.f32 0.0, %v3286
    %3288 = vdwg.mxu0
    %v3289 = vadd.f32 %v3205, %v3227
    %v3290 = vadd.f32 %v3206, %v3247
    %v3291 = vadd.f32 %v3207, %v3267
    %v3292 = vadd.f32 %v3208, %v3287
    %v3293 = vxor.u32 %v3289, 2147483648
    %v3294 = vxor.u32 %v3290, 2147483648
    %v3295 = vxor.u32 %v3291, 2147483648
    %v3296 = vmul.f32 %v3293, 1.442695
    %v3297 = vpow.pop %v3296
    %v3298 = vmul.f32 %v3294, 1.442695
    %v3299 = vpow.pop %v3298
    %v3300 = vmul.f32 %v3295, 1.442695
    %v3301 = vpow.pop %v3300
    %v3302 = vadd.f32 %v3297, 1.0
    %v3303 = vadd.f32 %v3299, 1.0
    %v3304 = vadd.f32 %v3301, 1.0
    %v3305 = vrcp.pop %v3302
    %v3306 = vmul.f32 %v3302, %v3305
    %v3307 = vsub.f32 1.0, %v3306
    %v3308 = vmul.f32 %v3305, %v3307
    %v3309 = vadd.f32 %v3305, %v3308
    %vm3310 = vweird.f32 %v3302
    %vm3311 = vweird.f32 %v3305
    %vm3312 = vmor %vm3310, %vm3311
    %v3313 = vsel %vm3312, %v3305, %v3309
    %v3314 = vand.u32 2147483647, %v3302
    %vm3315 = vcmp.eq.f32.partialorder %v3314, 8.507059e+37
    %v3316 = vand.u32 %v3302, 2147483648
    %v3317 = vor.u32 1.1754944e-38, %v3316
    %v3318 = vsel %vm3315, %v3317, %v3313
    %v3319 = vmul.f32 1.0, %v3318
    %v3320 = vrcp.pop %v3303
    %v3321 = vmul.f32 %v3303, %v3320
    %v3322 = vsub.f32 1.0, %v3321
    %v3323 = vmul.f32 %v3320, %v3322
    %v3324 = vadd.f32 %v3320, %v3323
    %vm3325 = vweird.f32 %v3303
    %vm3326 = vweird.f32 %v3320
    %vm3327 = vmor %vm3325, %vm3326
    %v3328 = vsel %vm3327, %v3320, %v3324
    %v3329 = vand.u32 2147483647, %v3303
    %vm3330 = vcmp.eq.f32.partialorder %v3329, 8.507059e+37
    %v3331 = vand.u32 %v3303, 2147483648
    %v3332 = vor.u32 1.1754944e-38, %v3331
    %v3333 = vsel %vm3330, %v3332, %v3328
    %v3334 = vmul.f32 1.0, %v3333
    %v3335 = vrcp.pop %v3304
    %v3336 = vmul.f32 %v3304, %v3335
    %v3337 = vsub.f32 1.0, %v3336
    %v3338 = vmul.f32 %v3335, %v3337
    %v3339 = vadd.f32 %v3335, %v3338
    %vm3340 = vweird.f32 %v3304
    %vm3341 = vweird.f32 %v3335
    %vm3342 = vmor %vm3340, %vm3341
    %v3343 = vsel %vm3342, %v3335, %v3339
    %v3344 = vand.u32 2147483647, %v3304
    %vm3345 = vcmp.eq.f32.partialorder %v3344, 8.507059e+37
    %v3346 = vand.u32 %v3304, 2147483648
    %v3347 = vor.u32 1.1754944e-38, %v3346
    %v3348 = vsel %vm3345, %v3347, %v3343
    %v3349 = vmul.f32 1.0, %v3348
    %v3350 = vtanh.pop %v3292
    %v3351 = vmul.f32 %v3334, %v2978
    %v3352 = vmul.f32 %v3319, %v3350
    %v3353 = vadd.f32 %v3351, %v3352
    %v3354 = vtanh.pop %v3353
    %v3355 = vmul.f32 %v3349, %v3354
    %3356 = vmatpush.msra.mxu0 %v502
    %3357 = vmatpush.msra.mxu0 %v498
    %3358 = vmatpush.msra.mxu0 %v494
    %3359 = vmatpush.msra.mxu0 %v490
    %3360 = vmatpush.msra.mxu0 %v486
    %3361 = vmatpush.msra.mxu0 %v482
    %3362 = vmatpush.msra.mxu0 %v478
    %3363 = vmatpush.msra.mxu0 %v474
    %3364 = vmatpush.msra.mxu0 %v470
    %3365 = vmatpush.msra.mxu0 %v466
    %3366 = vmatpush.msra.mxu0 %v462
    %3367 = vmatpush.msra.mxu0 %v458
    %3368 = vmatpush.msra.mxu0 %v454
    %3369 = vmatpush.msra.mxu0 %v450
    %3370 = vmatpush.msra.mxu0 %v446
    %3371 = vmatpush.msra.mxu0 %v442
    %3372 = vmatmul.f32.gmra.mxu0 %v3355
    %v3373 = vpop.f32.mrf.mxu0
    %v3374 = vadd.f32 %v723, %v3373
    %3375 = vdwg.mxu0
    %3376 = vmatpush.msra.mxu0 %v566
    %3377 = vmatpush.msra.mxu0 %v562
    %3378 = vmatpush.msra.mxu0 %v558
    %3379 = vmatpush.msra.mxu0 %v554
    %3380 = vmatpush.msra.mxu0 %v550
    %3381 = vmatpush.msra.mxu0 %v546
    %3382 = vmatpush.msra.mxu0 %v542
    %3383 = vmatpush.msra.mxu0 %v538
    %3384 = vmatpush.msra.mxu0 %v534
    %3385 = vmatpush.msra.mxu0 %v530
    %3386 = vmatpush.msra.mxu0 %v526
    %3387 = vmatpush.msra.mxu0 %v522
    %3388 = vmatpush.msra.mxu0 %v518
    %3389 = vmatpush.msra.mxu0 %v514
    %3390 = vmatpush.msra.mxu0 %v510
    %3391 = vmatpush.msra.mxu0 %v506
    %3392 = vmatmul.f32.gmra.mxu0 %v3203
    %v3393 = vpop.f32.mrf.mxu0
    %v3394 = vadd.f32 %v3374, %v3393
    %3395 = vdwg.mxu0
    %3396 = vmatpush.msra.mxu0 %v503
    %3397 = vmatpush.msra.mxu0 %v499
    %3398 = vmatpush.msra.mxu0 %v495
    %3399 = vmatpush.msra.mxu0 %v491
    %3400 = vmatpush.msra.mxu0 %v487
    %3401 = vmatpush.msra.mxu0 %v483
    %3402 = vmatpush.msra.mxu0 %v479
    %3403 = vmatpush.msra.mxu0 %v475
    %3404 = vmatpush.msra.mxu0 %v471
    %3405 = vmatpush.msra.mxu0 %v467
    %3406 = vmatpush.msra.mxu0 %v463
    %3407 = vmatpush.msra.mxu0 %v459
    %3408 = vmatpush.msra.mxu0 %v455
    %3409 = vmatpush.msra.mxu0 %v451
    %3410 = vmatpush.msra.mxu0 %v447
    %3411 = vmatpush.msra.mxu0 %v443
    %3412 = vmatmul.f32.gmra.mxu0 %v3355
    %v3413 = vpop.f32.mrf.mxu0
    %v3414 = vadd.f32 %v724, %v3413
    %3415 = vdwg.mxu0
    %3416 = vmatpush.msra.mxu0 %v567
    %3417 = vmatpush.msra.mxu0 %v563
    %3418 = vmatpush.msra.mxu0 %v559
    %3419 = vmatpush.msra.mxu0 %v555
    %3420 = vmatpush.msra.mxu0 %v551
    %3421 = vmatpush.msra.mxu0 %v547
    %3422 = vmatpush.msra.mxu0 %v543
    %3423 = vmatpush.msra.mxu0 %v539
    %3424 = vmatpush.msra.mxu0 %v535
    %3425 = vmatpush.msra.mxu0 %v531
    %3426 = vmatpush.msra.mxu0 %v527
    %3427 = vmatpush.msra.mxu0 %v523
    %3428 = vmatpush.msra.mxu0 %v519
    %3429 = vmatpush.msra.mxu0 %v515
    %3430 = vmatpush.msra.mxu0 %v511
    %3431 = vmatpush.msra.mxu0 %v507
    %3432 = vmatmul.f32.gmra.mxu0 %v3203
    %v3433 = vpop.f32.mrf.mxu0
    %v3434 = vadd.f32 %v3414, %v3433
    %3435 = vdwg.mxu0
    %3436 = vmatpush.msra.mxu0 %v504
    %3437 = vmatpush.msra.mxu0 %v500
    %3438 = vmatpush.msra.mxu0 %v496
    %3439 = vmatpush.msra.mxu0 %v492
    %3440 = vmatpush.msra.mxu0 %v488
    %3441 = vmatpush.msra.mxu0 %v484
    %3442 = vmatpush.msra.mxu0 %v480
    %3443 = vmatpush.msra.mxu0 %v476
    %3444 = vmatpush.msra.mxu0 %v472
    %3445 = vmatpush.msra.mxu0 %v468
    %3446 = vmatpush.msra.mxu0 %v464
    %3447 = vmatpush.msra.mxu0 %v460
    %3448 = vmatpush.msra.mxu0 %v456
    %3449 = vmatpush.msra.mxu0 %v452
    %3450 = vmatpush.msra.mxu0 %v448
    %3451 = vmatpush.msra.mxu0 %v444
    %3452 = vmatmul.f32.gmra.mxu0 %v3355
    %v3453 = vpop.f32.mrf.mxu0
    %v3454 = vadd.f32 %v725, %v3453
    %3455 = vdwg.mxu0
    %3456 = vmatpush.msra.mxu0 %v568
    %3457 = vmatpush.msra.mxu0 %v564
    %3458 = vmatpush.msra.mxu0 %v560
    %3459 = vmatpush.msra.mxu0 %v556
    %3460 = vmatpush.msra.mxu0 %v552
    %3461 = vmatpush.msra.mxu0 %v548
    %3462 = vmatpush.msra.mxu0 %v544
    %3463 = vmatpush.msra.mxu0 %v540
    %3464 = vmatpush.msra.mxu0 %v536
    %3465 = vmatpush.msra.mxu0 %v532
    %3466 = vmatpush.msra.mxu0 %v528
    %3467 = vmatpush.msra.mxu0 %v524
    %3468 = vmatpush.msra.mxu0 %v520
    %3469 = vmatpush.msra.mxu0 %v516
    %3470 = vmatpush.msra.mxu0 %v512
    %3471 = vmatpush.msra.mxu0 %v508
    %3472 = vmatmul.f32.gmra.mxu0 %v3203
    %v3473 = vpop.f32.mrf.mxu0
    %v3474 = vadd.f32 %v3454, %v3473
    %3475 = vdwg.mxu0
    %3476 = vmatpush.msra.mxu0 %v505
    %3477 = vmatpush.msra.mxu0 %v501
    %3478 = vmatpush.msra.mxu0 %v497
    %3479 = vmatpush.msra.mxu0 %v493
    %3480 = vmatpush.msra.mxu0 %v489
    %3481 = vmatpush.msra.mxu0 %v485
    %3482 = vmatpush.msra.mxu0 %v481
    %3483 = vmatpush.msra.mxu0 %v477
    %3484 = vmatpush.msra.mxu0 %v473
    %3485 = vmatpush.msra.mxu0 %v469
    %3486 = vmatpush.msra.mxu0 %v465
    %3487 = vmatpush.msra.mxu0 %v461
    %3488 = vmatpush.msra.mxu0 %v457
    %3489 = vmatpush.msra.mxu0 %v453
    %3490 = vmatpush.msra.mxu0 %v449
    %3491 = vmatpush.msra.mxu0 %v445
    %3492 = vmatmul.f32.gmra.mxu0 %v3355
    %v3493 = vpop.f32.mrf.mxu0
    %v3494 = vadd.f32 %v726, %v3493
    %3495 = vdwg.mxu0
    %3496 = vmatpush.msra.mxu0 %v569
    %3497 = vmatpush.msra.mxu0 %v565
    %3498 = vmatpush.msra.mxu0 %v561
    %3499 = vmatpush.msra.mxu0 %v557
    %3500 = vmatpush.msra.mxu0 %v553
    %3501 = vmatpush.msra.mxu0 %v549
    %3502 = vmatpush.msra.mxu0 %v545
    %3503 = vmatpush.msra.mxu0 %v541
    %3504 = vmatpush.msra.mxu0 %v537
    %3505 = vmatpush.msra.mxu0 %v533
    %3506 = vmatpush.msra.mxu0 %v529
    %3507 = vmatpush.msra.mxu0 %v525
    %3508 = vmatpush.msra.mxu0 %v521
    %3509 = vmatpush.msra.mxu0 %v517
    %3510 = vmatpush.msra.mxu0 %v513
    %3511 = vmatpush.msra.mxu0 %v509
    %3512 = vmatmul.f32.gmra.mxu0 %v3203
    %v3513 = vpop.f32.mrf.mxu0
    %v3514 = vadd.f32 %v3494, %v3513
    %3515 = vdwg.mxu0
    %v3516 = vxor.u32 %v3394, 2147483648
    %v3517 = vxor.u32 %v3434, 2147483648
    %v3518 = vxor.u32 %v3474, 2147483648
    %v3519 = vmul.f32 %v3516, 1.442695
    %v3520 = vpow.pop %v3519
    %v3521 = vmul.f32 %v3517, 1.442695
    %v3522 = vpow.pop %v3521
    %v3523 = vmul.f32 %v3518, 1.442695
    %v3524 = vpow.pop %v3523
    %v3525 = vadd.f32 %v3520, 1.0
    %v3526 = vadd.f32 %v3522, 1.0
    %v3527 = vadd.f32 %v3524, 1.0
    %v3528 = vrcp.pop %v3525
    %v3529 = vmul.f32 %v3525, %v3528
    %v3530 = vsub.f32 1.0, %v3529
    %v3531 = vmul.f32 %v3528, %v3530
    %v3532 = vadd.f32 %v3528, %v3531
    %vm3533 = vweird.f32 %v3525
    %vm3534 = vweird.f32 %v3528
    %vm3535 = vmor %vm3533, %vm3534
    %v3536 = vsel %vm3535, %v3528, %v3532
    %v3537 = vand.u32 2147483647, %v3525
    %vm3538 = vcmp.eq.f32.partialorder %v3537, 8.507059e+37
    %v3539 = vand.u32 %v3525, 2147483648
    %v3540 = vor.u32 1.1754944e-38, %v3539
    %v3541 = vsel %vm3538, %v3540, %v3536
    %v3542 = vmul.f32 1.0, %v3541
    %v3543 = vrcp.pop %v3526
    %v3544 = vmul.f32 %v3526, %v3543
    %v3545 = vsub.f32 1.0, %v3544
    %v3546 = vmul.f32 %v3543, %v3545
    %v3547 = vadd.f32 %v3543, %v3546
    %vm3548 = vweird.f32 %v3526
    %vm3549 = vweird.f32 %v3543
    %vm3550 = vmor %vm3548, %vm3549
    %v3551 = vsel %vm3550, %v3543, %v3547
    %v3552 = vand.u32 2147483647, %v3526
    %vm3553 = vcmp.eq.f32.partialorder %v3552, 8.507059e+37
    %v3554 = vand.u32 %v3526, 2147483648
    %v3555 = vor.u32 1.1754944e-38, %v3554
    %v3556 = vsel %vm3553, %v3555, %v3551
    %v3557 = vmul.f32 1.0, %v3556
    %v3558 = vrcp.pop %v3527
    %v3559 = vmul.f32 %v3527, %v3558
    %v3560 = vsub.f32 1.0, %v3559
    %v3561 = vmul.f32 %v3558, %v3560
    %v3562 = vadd.f32 %v3558, %v3561
    %vm3563 = vweird.f32 %v3527
    %vm3564 = vweird.f32 %v3558
    %vm3565 = vmor %vm3563, %vm3564
    %v3566 = vsel %vm3565, %v3558, %v3562
    %v3567 = vand.u32 2147483647, %v3527
    %vm3568 = vcmp.eq.f32.partialorder %v3567, 8.507059e+37
    %v3569 = vand.u32 %v3527, 2147483648
    %v3570 = vor.u32 1.1754944e-38, %v3569
    %v3571 = vsel %vm3568, %v3570, %v3566
    %v3572 = vmul.f32 1.0, %v3571
    %v3573 = vtanh.pop %v3514
    %v3574 = vmul.f32 %v3557, %v3201
    %v3575 = vmul.f32 %v3542, %v3573
    %v3576 = vadd.f32 %v3574, %v3575
    %v3577 = vtanh.pop %v3576
    %v3578 = vmul.f32 %v3572, %v3577
    %3579 = vst [vmem:[#allocation12] sm:$0xff] %v3578
    // Predicated region
    $region46: #{tpu_custom_call.1} parent=1 // pred_check
      _
    $region47: #{tpu_custom_call.1} parent=1 // pred_check_branch
      %3581 = sbr.rel (0) target = $region49
    $region48: #{tpu_custom_call.1} parent=1 // pred_region
      %3583 = vsyncadd [#allocation5], 0
      %s3585 = sshll.u32 [#allocation12], 4
      %s3586 = int_to_ptr.vmem [resolvable:$true] %s3585
      %s3587 = sshll.u32 %s6, 4
      %s3588 = int_to_ptr.hbm [resolvable:$true] %s3587
      %3590 = dma.vmem_to_hbm [thread:$0]  %s3586, 128, %s3588, [#allocation5]
    $region49: #{tpu_custom_call.1} parent=1 // pred_fallthru
      _
    // Predicated region
    $region50: #{tpu_custom_call.1} parent=1 // pred_check
      _
    $region51: #{tpu_custom_call.1} parent=1 // pred_check_branch
      %3592 = sbr.rel (0) target = $region53
    $region52: #{tpu_custom_call.1} parent=1 // pred_region
      %3594 = dma.done [#allocation5], 128
    $region53: #{tpu_custom_call.1} parent=1 // pred_fallthru
      _
    %3595 = vsyncpa [#allocation4], 1
    %3596 = vsyncpa [#allocation7], 1
    %3597 = vsyncpa [#allocation10], 1
    %3598 = vsyncpa [#allocation5], 1

</llo_original>
